<compile_context>
chip_gen: v6e
topology: v6e:2x2x1
jax: 0.10.0
libtpu: 0.0.40
codegen_flags: <defaults>
</compile_context>

<pallas_src>
import functools

import jax
import jax.numpy as jnp
import numpy as np
from jax import lax
from jax.experimental import pallas as pl
from jax.experimental.pallas import tpu as pltpu


def _resident_spec(block_shape, index_map):
    """BlockSpec for a grid-invariant operand; single-buffered when supported."""
    buffered = getattr(pl, "Buffered", None)
    if buffered is not None:
        try:
            return pl.BlockSpec(block_shape, index_map, pipeline_mode=buffered(1))
        except TypeError:
            pass
    return pl.BlockSpec(block_shape, index_map)


def _vmem_limit(estimate_bytes):
    # 2x headroom, clamped to [32 MiB, 64 MiB] (<= physical VMEM on v5e/v6e/v7x).
    return int(min(64 * 2**20, max(32 * 2**20, 2 * estimate_bytes)))


def _pick_row_tile(H, W, target_rows=512):
    th = max(1, min(H, max(1, target_rows // max(W, 1))))
    while H % th:
        th -= 1
    return th


# ------------------------------------------------------------------
# Kernel 1 (per image): channel-attention scale + spatial-attention map.
# ------------------------------------------------------------------
def _cbam_prep_kernel(x_ref, w1_ref, w2_ref, wc_ref, scale_ref, smap_ref,
                      pad_scr, *, K, pad):
    x = x_ref[0]                                             # (H, W, C) f32
    H, W, C = x.shape
    Wpad = pad_scr.shape[2]

    # ---- channel attention: global max/avg pool -> shared MLP -> sigmoid ----
    mx = jnp.max(x, axis=(0, 1), keepdims=True).reshape(1, C)
    av = (jnp.sum(x, axis=(0, 1), keepdims=True).reshape(1, C) * (1.0 / (H * W)))
    pooled = jnp.concatenate([mx, av], axis=0).astype(jnp.bfloat16)      # (2, C)
    h = jnp.maximum(
        jnp.dot(pooled, w1_ref[...], preferred_element_type=jnp.float32), 0.0)
    logits = jnp.dot(h.astype(jnp.bfloat16), w2_ref[...],
                     preferred_element_type=jnp.float32)                 # (2, C)
    scale = jax.nn.sigmoid(logits[0:1] + logits[1:2])                    # (1, C)
    scale_ref[0] = scale

    # ---- spatial attention: channel max / mean of xs = scale * x ----
    xs = x * scale                                           # (H, W, C)
    cmax = jnp.max(xs, axis=2)                               # (H, W), lane reduce
    cavg = jnp.mean(xs, axis=2)                              # (H, W)

    # Zero only the halo border (interior is fully overwritten below) --
    # cheap, no whole-scratch WAR, and correct under megacore sharding.
    zrow = jnp.zeros((pad, Wpad), jnp.float32)
    zl = jnp.zeros((H, pad), jnp.float32)
    right = Wpad - pad - W
    zr = jnp.zeros((H, right), jnp.float32) if right > 0 else None
    for c in range(2):
        pad_scr[c, 0:pad, :] = zrow
        pad_scr[c, pad + H:, :] = zrow
        pad_scr[c, pad:pad + H, 0:pad] = zl
        if right > 0:
            pad_scr[c, pad:pad + H, pad + W:] = zr
    pad_scr[0, pad:pad + H, pad:pad + W] = cmax
    pad_scr[1, pad:pad + H, pad:pad + W] = cavg

    # 7x7 conv (cross-correlation, zero pad): kw outermost -> 14 lane shifts
    # total; the inner kh loop only changes sublane offsets.
    acc = jnp.zeros((H, W), jnp.float32)
    for kw in range(K):
        sh_mx = pad_scr[0, :, kw:kw + W]                     # (Hp, W)
        sh_av = pad_scr[1, :, kw:kw + W]
        for kh in range(K):
            base = (kh * K + kw) * 2                         # flat SMEM index
            acc = acc + sh_mx[kh:kh + H, :] * wc_ref[base] \
                      + sh_av[kh:kh + H, :] * wc_ref[base + 1]
    smap_ref[0] = jax.nn.sigmoid(acc)                        # (H, W)


# ------------------------------------------------------------------
# Kernel 2 (per row tile): apply channel+spatial attention, then the
# per-position 3-layer channel MLP (torch's transpose(1,3) pair only permutes
# H/W, so the Linear stack is just an MLP over the channel axis).
# ------------------------------------------------------------------
def _cbam_apply_mlp_kernel(x_ref, scale_ref, smap_ref,
                           lw1_ref, lb1_ref, lw2_ref, lb2_ref, lw3_ref, lb3_ref,
                           o_ref):
    x = x_ref[0]                                             # (TH, W, C) f32
    TH, W, C = x.shape
    T = TH * W
    y = x * scale_ref[0]                                     # (1, C) lane broadcast
    y = y * smap_ref[0]                                      # (TH, W, 1) broadcast
    y2 = y.reshape(T, C).astype(jnp.bfloat16)                # leading-dim merge

    h1 = jnp.dot(y2, lw1_ref[...], preferred_element_type=jnp.float32) + lb1_ref[...]
    h1 = jnp.maximum(h1, 0.0).astype(jnp.bfloat16)
    h2 = jnp.dot(h1, lw2_ref[...], preferred_element_type=jnp.float32) + lb2_ref[...]
    h2 = jnp.maximum(h2, 0.0).astype(jnp.bfloat16)
    out = jnp.dot(h2, lw3_ref[...], preferred_element_type=jnp.float32) + lb3_ref[...]
    o_ref[0] = out.reshape(TH, W, C).astype(o_ref.dtype)


# ------------------------------------------------------------------
# Wrapper: NHWC in, NHWC out (no activation transposes in the kernel path).
# ------------------------------------------------------------------
def cbam_forward_nhwc(x_nhwc, params, *, spatial_kernel=7, row_tile=None,
                      out_dtype=jnp.bfloat16):
    N, H, W, C = x_nhwc.shape
    K = spatial_kernel
    pad = K // 2
    Cr = params["w1"].shape[1]
    Hp = H + 2 * pad
    Wpad = ((W + 2 * pad + 127) // 128) * 128
    TH = row_tile if row_tile is not None else _pick_row_tile(H, W)
    assert H % TH == 0, "row_tile must divide H"
    R = H // TH
    T = TH * W

    wc_flat = params["wconv"].reshape(-1)                 # (K*K*2,), SMEM scalars
    w1 = params["w1"].astype(jnp.bfloat16)                # (C, Cr)
    w2 = params["w2"].astype(jnp.bfloat16)                # (Cr, C)
    lw1 = params["lw1"].T.astype(jnp.bfloat16)            # (in, out) for MXU
    lw2 = params["lw2"].T.astype(jnp.bfloat16)
    lw3 = params["lw3"].T.astype(jnp.bfloat16)
    b1 = params["lb1"][None, :]
    b2 = params["lb2"][None, :]
    b3 = params["lb3"][None, :]

    # ---- K1: per-image scale + spatial map (tiny outputs) ----
    k1_est = (2 * H * W * C * 4 + (C * Cr + Cr * C) * 2
              + 2 * Hp * Wpad * 4 + 2 * (C + H * W) * 4)
    prep = functools.partial(_cbam_prep_kernel, K=K, pad=pad)
    scale, smap = pl.pallas_call(
        prep,
        grid=(N,),
        in_specs=[
            pl.BlockSpec((1, H, W, C), lambda n: (n, 0, 0, 0)),       # x
            _resident_spec((C, Cr), lambda n: (0, 0)),                # mlp w1 (bf16)
            _resident_spec((Cr, C), lambda n: (0, 0)),                # mlp w2 (bf16)
            pl.BlockSpec(memory_space=pltpu.MemorySpace.SMEM),        # conv weights
        ],
        out_specs=(
            pl.BlockSpec((1, 1, C), lambda n: (n, 0, 0)),             # scale
            pl.BlockSpec((1, H, W), lambda n: (n, 0, 0)),             # spatial map
        ),
        out_shape=(jax.ShapeDtypeStruct((N, 1, C), jnp.float32),
                   jax.ShapeDtypeStruct((N, H, W), jnp.float32)),
        scratch_shapes=[pltpu.VMEM((2, Hp, Wpad), jnp.float32)],
        compiler_params=pltpu.CompilerParams(
            dimension_semantics=("parallel",),
            vmem_limit_bytes=_vmem_limit(k1_est)),
    )(x_nhwc, w1, w2, wc_flat)

    # Tiny per-row multiplier: the relayout happens once in XLA on an array of
    # N*H*W floats, so K2 never pays a lane->sublane transpose per tile.
    smap4 = smap.reshape(N, H, W, 1)

    # ---- K2: apply attention + 3-layer MLP, row-tiled ----
    k2_est = (3 * C * C * 2 + 3 * C * 4                  # resident bf16 weights
              + 2 * T * C * 4                            # x tiles (double buffered)
              + 2 * T * C * jnp.dtype(out_dtype).itemsize
              + 2 * TH * W * 128 * 4                     # lane-padded smap tiles
              + 3 * T * C * 4)                           # h1/h2/out intermediates
    out = pl.pallas_call(
        _cbam_apply_mlp_kernel,
        grid=(N, R),
        in_specs=[
            pl.BlockSpec((1, TH, W, C), lambda n, r: (n, r, 0, 0)),   # x row tile
            pl.BlockSpec((1, 1, C), lambda n, r: (n, 0, 0)),          # scale
            pl.BlockSpec((1, TH, W, 1), lambda n, r: (n, r, 0, 0)),   # spatial map
            _resident_spec((C, C), lambda n, r: (0, 0)),              # Linear1
            _resident_spec((1, C), lambda n, r: (0, 0)),              # bias1
            _resident_spec((C, C), lambda n, r: (0, 0)),              # Linear2
            _resident_spec((1, C), lambda n, r: (0, 0)),              # bias2
            _resident_spec((C, C), lambda n, r: (0, 0)),              # Linear3
            _resident_spec((1, C), lambda n, r: (0, 0)),              # bias3
        ],
        out_specs=pl.BlockSpec((1, TH, W, C), lambda n, r: (n, r, 0, 0)),
        out_shape=jax.ShapeDtypeStruct((N, H, W, C), out_dtype),
        compiler_params=pltpu.CompilerParams(
            dimension_semantics=("parallel", "parallel"),
            vmem_limit_bytes=_vmem_limit(k2_est)),
    )(x_nhwc, scale, smap4, lw1, b1, lw2, b2, lw3, b3)
    return out


# ------------------------------------------------------------------
# Pure-JAX reference (NCHW, mirrors the PyTorch forward exactly, all f32)
# ------------------------------------------------------------------
def cbam_reference_nchw(x, p, *, K=7):
    mx = jnp.max(x, axis=(2, 3))
    av = jnp.mean(x, axis=(2, 3))

    def mlp(v):
        return jnp.maximum(v @ p["w1"], 0.0) @ p["w2"]

    scale = jax.nn.sigmoid(mlp(mx) + mlp(av))[:, :, None, None]
    xs = scale * x
    cmax = jnp.max(xs, axis=1, keepdims=True)
    cavg = jnp.mean(xs, axis=1, keepdims=True)
    pooled = jnp.concatenate([cmax, cavg], axis=1)
    w_oihw = jnp.transpose(p["wconv"], (2, 0, 1))[None]     # (1, 2, K, K)
    conv = lax.conv_general_dilated(
        pooled, w_oihw, window_strides=(1, 1),
        padding=((K // 2, K // 2), (K // 2, K // 2)),
        dimension_numbers=("NCHW", "OIHW", "NCHW"))
    sp = jax.nn.sigmoid(conv)
    y = sp * xs
    yt = jnp.transpose(y, (0, 3, 2, 1))                      # x.transpose(1, 3)
    h = jnp.maximum(yt @ p["lw1"].T + p["lb1"], 0.0)
    h = jnp.maximum(h @ p["lw2"].T + p["lb2"], 0.0)
    h = h @ p["lw3"].T + p["lb3"]
    return jnp.transpose(h, (0, 3, 2, 1))


if __name__ == "__main__":
    # Small but lane-realistic shapes (module implies C=2048; Linears
    # generalized to (C, C)).  C=128 exercises real lane layout on TPU.
    N, C, H, W = 2, 128, 16, 16
    reduction, K = 8, 7
    Cr = C // reduction

    key = jax.random.PRNGKey(0)
    keys = jax.random.split(key, 10)
    s = 0.1
    params = {
        "w1": s * jax.random.normal(keys[0], (C, Cr), jnp.float32),
        "w2": s * jax.random.normal(keys[1], (Cr, C), jnp.float32),
        "wconv": s * jax.random.normal(keys[2], (K, K, 2), jnp.float32),
        "lw1": s * jax.random.normal(keys[3], (C, C), jnp.float32),
        "lb1": s * jax.random.normal(keys[4], (C,), jnp.float32),
        "lw2": s * jax.random.normal(keys[5], (C, C), jnp.float32),
        "lb2": s * jax.random.normal(keys[6], (C,), jnp.float32),
        "lw3": s * jax.random.normal(keys[7], (C, C), jnp.float32),
        "lb3": s * jax.random.normal(keys[8], (C,), jnp.float32),
    }
    x_nhwc = jax.random.normal(keys[9], (N, H, W, C), jnp.float32)

    fwd = jax.jit(lambda xx, pp: cbam_forward_nhwc(
        xx, pp, spatial_kernel=K, row_tile=8))
    out = jax.block_until_ready(fwd(x_nhwc, params))

    # Reference path (NCHW transposes here are test-only glue, not kernel path).
    x_nchw = jnp.transpose(x_nhwc, (0, 3, 1, 2))
    ref = jnp.transpose(cbam_reference_nchw(x_nchw, params, K=K), (0, 2, 3, 1))

    assert out.shape == (N, H, W, C) and out.dtype == jnp.bfloat16
    # Tolerance covers the bf16 matmuls (f32 accumulation) + bf16 output cast.
    np.testing.assert_allclose(np.asarray(out, dtype=np.float32),
                               np.asarray(ref), rtol=5e-2, atol=5e-2)
    print("KERNEL_OK")
</pallas_src>

<mosaic_0001>
module attributes {stable_mosaic.version = 11 : i64} {
  func.func @_cbam_apply_mlp_kernel(%arg0: i32, %arg1: i32, %arg2: memref<1x8x16x128xf32, #tpu.memory_space<vmem>>, %arg3: memref<1x1x128xf32, #tpu.memory_space<vmem>>, %arg4: memref<1x8x16x1xf32, #tpu.memory_space<vmem>>, %arg5: memref<128x128xbf16, #tpu.memory_space<vmem>>, %arg6: memref<1x128xf32, #tpu.memory_space<vmem>>, %arg7: memref<128x128xbf16, #tpu.memory_space<vmem>>, %arg8: memref<1x128xf32, #tpu.memory_space<vmem>>, %arg9: memref<128x128xbf16, #tpu.memory_space<vmem>>, %arg10: memref<1x128xf32, #tpu.memory_space<vmem>>, %arg11: memref<1x8x16x128xbf16, #tpu.memory_space<vmem>>) attributes {dimension_semantics = [#tpu.dimension_semantics<parallel>, #tpu.dimension_semantics<parallel>], iteration_bounds = array<i64: 2, 2>, scalar_prefetch = 0 : i64, scratch_operands = 0 : i64, tpu.core_type = #tpu.core_type<tc>, window_params = [{transform_indices = @transform_0, window_bounds = array<i64: 1, 8, 16, 128>}, {transform_indices = @transform_1, window_bounds = array<i64: 1, 1, 128>}, {transform_indices = @transform_2, window_bounds = array<i64: 1, 8, 16, 1>}, {pipeline_mode = #tpu.pipeline_mode<synchronous>, transform_indices = @transform_3, window_bounds = array<i64: 128, 128>}, {pipeline_mode = #tpu.pipeline_mode<synchronous>, transform_indices = @transform_4, window_bounds = array<i64: 1, 128>}, {pipeline_mode = #tpu.pipeline_mode<synchronous>, transform_indices = @transform_5, window_bounds = array<i64: 128, 128>}, {pipeline_mode = #tpu.pipeline_mode<synchronous>, transform_indices = @transform_6, window_bounds = array<i64: 1, 128>}, {pipeline_mode = #tpu.pipeline_mode<synchronous>, transform_indices = @transform_7, window_bounds = array<i64: 128, 128>}, {pipeline_mode = #tpu.pipeline_mode<synchronous>, transform_indices = @transform_8, window_bounds = array<i64: 1, 128>}, {transform_indices = @transform_9, window_bounds = array<i64: 1, 8, 16, 128>}]} {
    %c0 = arith.constant 0 : index
    %c0_0 = arith.constant 0 : index
    %c0_1 = arith.constant 0 : index
    %c0_2 = arith.constant 0 : index
    %0 = vector.load %arg2[%c0, %c0_0, %c0_1, %c0_2] : memref<1x8x16x128xf32, #tpu.memory_space<vmem>>, vector<1x8x16x128xf32>
    %1 = vector.shape_cast %0 : vector<1x8x16x128xf32> to vector<8x16x128xf32>
    %c0_3 = arith.constant 0 : index
    %c0_4 = arith.constant 0 : index
    %c0_5 = arith.constant 0 : index
    %2 = vector.load %arg3[%c0_3, %c0_4, %c0_5] : memref<1x1x128xf32, #tpu.memory_space<vmem>>, vector<1x1x128xf32>
    %3 = vector.shape_cast %2 : vector<1x1x128xf32> to vector<1x128xf32>
    %4 = vector.shape_cast %3 : vector<1x128xf32> to vector<1x1x128xf32>
    %5 = vector.broadcast %4 : vector<1x1x128xf32> to vector<8x16x128xf32>
    %6 = arith.mulf %1, %5 : vector<8x16x128xf32>
    %c0_6 = arith.constant 0 : index
    %c0_7 = arith.constant 0 : index
    %c0_8 = arith.constant 0 : index
    %c0_9 = arith.constant 0 : index
    %7 = vector.load %arg4[%c0_6, %c0_7, %c0_8, %c0_9] : memref<1x8x16x1xf32, #tpu.memory_space<vmem>>, vector<1x8x16x1xf32>
    %8 = vector.shape_cast %7 : vector<1x8x16x1xf32> to vector<8x16x1xf32>
    %9 = vector.broadcast %8 : vector<8x16x1xf32> to vector<8x16x128xf32>
    %10 = arith.mulf %6, %9 : vector<8x16x128xf32>
    %11 = vector.shape_cast %10 : vector<8x16x128xf32> to vector<128x128xf32>
    %12 = arith.truncf %11 : vector<128x128xf32> to vector<128x128xbf16>
    %c0_10 = arith.constant 0 : index
    %c0_11 = arith.constant 0 : index
    %13 = vector.load %arg5[%c0_10, %c0_11] : memref<128x128xbf16, #tpu.memory_space<vmem>>, vector<128x128xbf16>
    %cst = arith.constant dense<0.000000e+00> : vector<128x128xf32>
    %14 = tpu.matmul %12, %13, %cst {dimension_numbers = #tpu.dot_dimension_numbers<[1], [0], [0], [1], [0, 0, 1, 1], [], []>} : vector<128x128xbf16>, vector<128x128xbf16>, vector<128x128xf32> -> vector<128x128xf32>
    %c0_12 = arith.constant 0 : index
    %c0_13 = arith.constant 0 : index
    %15 = vector.load %arg6[%c0_12, %c0_13] : memref<1x128xf32, #tpu.memory_space<vmem>>, vector<1x128xf32>
    %16 = vector.broadcast %15 : vector<1x128xf32> to vector<128x128xf32>
    %17 = arith.addf %14, %16 : vector<128x128xf32>
    %cst_14 = arith.constant 0.000000e+00 : f32
    %18 = vector.broadcast %cst_14 : f32 to vector<128x128xf32>
    %19 = arith.maximumf %17, %18 : vector<128x128xf32>
    %20 = arith.truncf %19 : vector<128x128xf32> to vector<128x128xbf16>
    %c0_15 = arith.constant 0 : index
    %c0_16 = arith.constant 0 : index
    %21 = vector.load %arg7[%c0_15, %c0_16] : memref<128x128xbf16, #tpu.memory_space<vmem>>, vector<128x128xbf16>
    %cst_17 = arith.constant dense<0.000000e+00> : vector<128x128xf32>
    %22 = tpu.matmul %20, %21, %cst_17 {dimension_numbers = #tpu.dot_dimension_numbers<[1], [0], [0], [1], [0, 0, 1, 1], [], []>} : vector<128x128xbf16>, vector<128x128xbf16>, vector<128x128xf32> -> vector<128x128xf32>
    %c0_18 = arith.constant 0 : index
    %c0_19 = arith.constant 0 : index
    %23 = vector.load %arg8[%c0_18, %c0_19] : memref<1x128xf32, #tpu.memory_space<vmem>>, vector<1x128xf32>
    %24 = vector.broadcast %23 : vector<1x128xf32> to vector<128x128xf32>
    %25 = arith.addf %22, %24 : vector<128x128xf32>
    %cst_20 = arith.constant 0.000000e+00 : f32
    %26 = vector.broadcast %cst_20 : f32 to vector<128x128xf32>
    %27 = arith.maximumf %25, %26 : vector<128x128xf32>
    %28 = arith.truncf %27 : vector<128x128xf32> to vector<128x128xbf16>
    %c0_21 = arith.constant 0 : index
    %c0_22 = arith.constant 0 : index
    %29 = vector.load %arg9[%c0_21, %c0_22] : memref<128x128xbf16, #tpu.memory_space<vmem>>, vector<128x128xbf16>
    %cst_23 = arith.constant dense<0.000000e+00> : vector<128x128xf32>
    %30 = tpu.matmul %28, %29, %cst_23 {dimension_numbers = #tpu.dot_dimension_numbers<[1], [0], [0], [1], [0, 0, 1, 1], [], []>} : vector<128x128xbf16>, vector<128x128xbf16>, vector<128x128xf32> -> vector<128x128xf32>
    %c0_24 = arith.constant 0 : index
    %c0_25 = arith.constant 0 : index
    %31 = vector.load %arg10[%c0_24, %c0_25] : memref<1x128xf32, #tpu.memory_space<vmem>>, vector<1x128xf32>
    %32 = vector.broadcast %31 : vector<1x128xf32> to vector<128x128xf32>
    %33 = arith.addf %30, %32 : vector<128x128xf32>
    %34 = vector.shape_cast %33 : vector<128x128xf32> to vector<8x16x128xf32>
    %35 = arith.truncf %34 : vector<8x16x128xf32> to vector<8x16x128xbf16>
    %c0_26 = arith.constant 0 : index
    %c0_27 = arith.constant 0 : index
    %c0_28 = arith.constant 0 : index
    %c0_29 = arith.constant 0 : index
    %36 = vector.load %arg11[%c0_26, %c0_27, %c0_28, %c0_29] : memref<1x8x16x128xbf16, #tpu.memory_space<vmem>>, vector<1x8x16x128xbf16>
    %37 = vector.shape_cast %36 : vector<1x8x16x128xbf16> to vector<8x16x128xbf16>
    %38 = vector.shape_cast %35 : vector<8x16x128xbf16> to vector<1x8x16x128xbf16>
    tpu.vector_store %arg11[%c0_26, %c0_27, %c0_28, %c0_29], %38 {strides = array<i32>} : memref<1x8x16x128xbf16, #tpu.memory_space<vmem>>, vector<1x8x16x128xbf16>,
    return
  }
  func.func @transform_0(%arg0: i32, %arg1: i32) -> (i32, i32, i32, i32) {
    %c0_i32 = arith.constant 0 : i32
    %c0_i32_0 = arith.constant 0 : i32
    %c0_i32_1 = arith.constant 0 : i32
    return %arg0, %arg1, %c0_i32, %c0_i32_0 : i32, i32, i32, i32
  }
  func.func @transform_1(%arg0: i32, %arg1: i32) -> (i32, i32, i32) {
    %c0_i32 = arith.constant 0 : i32
    %c0_i32_0 = arith.constant 0 : i32
    %c0_i32_1 = arith.constant 0 : i32
    return %arg0, %c0_i32, %c0_i32_0 : i32, i32, i32
  }
  func.func @transform_2(%arg0: i32, %arg1: i32) -> (i32, i32, i32, i32) {
    %c0_i32 = arith.constant 0 : i32
    %c0_i32_0 = arith.constant 0 : i32
    %c0_i32_1 = arith.constant 0 : i32
    return %arg0, %arg1, %c0_i32, %c0_i32_0 : i32, i32, i32, i32
  }
  func.func @transform_3(%arg0: i32, %arg1: i32) -> (i32, i32) {
    %c0_i32 = arith.constant 0 : i32
    %c0_i32_0 = arith.constant 0 : i32
    %c0_i32_1 = arith.constant 0 : i32
    return %c0_i32, %c0_i32_0 : i32, i32
  }
  func.func @transform_4(%arg0: i32, %arg1: i32) -> (i32, i32) {
    %c0_i32 = arith.constant 0 : i32
    %c0_i32_0 = arith.constant 0 : i32
    %c0_i32_1 = arith.constant 0 : i32
    return %c0_i32, %c0_i32_0 : i32, i32
  }
  func.func @transform_5(%arg0: i32, %arg1: i32) -> (i32, i32) {
    %c0_i32 = arith.constant 0 : i32
    %c0_i32_0 = arith.constant 0 : i32
    %c0_i32_1 = arith.constant 0 : i32
    return %c0_i32, %c0_i32_0 : i32, i32
  }
  func.func @transform_6(%arg0: i32, %arg1: i32) -> (i32, i32) {
    %c0_i32 = arith.constant 0 : i32
    %c0_i32_0 = arith.constant 0 : i32
    %c0_i32_1 = arith.constant 0 : i32
    return %c0_i32, %c0_i32_0 : i32, i32
  }
  func.func @transform_7(%arg0: i32, %arg1: i32) -> (i32, i32) {
    %c0_i32 = arith.constant 0 : i32
    %c0_i32_0 = arith.constant 0 : i32
    %c0_i32_1 = arith.constant 0 : i32
    return %c0_i32, %c0_i32_0 : i32, i32
  }
  func.func @transform_8(%arg0: i32, %arg1: i32) -> (i32, i32) {
    %c0_i32 = arith.constant 0 : i32
    %c0_i32_0 = arith.constant 0 : i32
    %c0_i32_1 = arith.constant 0 : i32
    return %c0_i32, %c0_i32_0 : i32, i32
  }
  func.func @transform_9(%arg0: i32, %arg1: i32) -> (i32, i32, i32, i32) {
    %c0_i32 = arith.constant 0 : i32
    %c0_i32_0 = arith.constant 0 : i32
    %c0_i32_1 = arith.constant 0 : i32
    return %arg0, %arg1, %c0_i32, %c0_i32_0 : i32, i32, i32, i32
  }
}

module attributes {stable_mosaic.version = 11 : i64} {
  func.func @_cbam_prep_kernel(%arg0: i32, %arg1: memref<1x16x16x128xf32, #tpu.memory_space<vmem>>, %arg2: memref<128x16xbf16, #tpu.memory_space<vmem>>, %arg3: memref<16x128xbf16, #tpu.memory_space<vmem>>, %arg4: memref<98xf32, #tpu.memory_space<smem>>, %arg5: memref<1x1x128xf32, #tpu.memory_space<vmem>>, %arg6: memref<1x16x16xf32, #tpu.memory_space<vmem>>, %arg7: memref<2x22x128xf32, #tpu.memory_space<vmem>>) attributes {dimension_semantics = [#tpu.dimension_semantics<parallel>], iteration_bounds = array<i64: 2>, scalar_prefetch = 0 : i64, scratch_operands = 1 : i64, tpu.core_type = #tpu.core_type<tc>, window_params = [{transform_indices = @transform_0, window_bounds = array<i64: 1, 16, 16, 128>}, {pipeline_mode = #tpu.pipeline_mode<synchronous>, transform_indices = @transform_1, window_bounds = array<i64: 128, 16>}, {pipeline_mode = #tpu.pipeline_mode<synchronous>, transform_indices = @transform_2, window_bounds = array<i64: 16, 128>}, {transform_indices = @transform_3, window_bounds = array<i64: 98>}, {transform_indices = @transform_4, window_bounds = array<i64: 1, 1, 128>}, {transform_indices = @transform_5, window_bounds = array<i64: 1, 16, 16>}]} {
    %c0 = arith.constant 0 : index
    %c0_0 = arith.constant 0 : index
    %c0_1 = arith.constant 0 : index
    %c0_2 = arith.constant 0 : index
    %0 = vector.load %arg1[%c0, %c0_0, %c0_1, %c0_2] : memref<1x16x16x128xf32, #tpu.memory_space<vmem>>, vector<1x16x16x128xf32>
    %1 = vector.shape_cast %0 : vector<1x16x16x128xf32> to vector<16x16x128xf32>
    %cst = arith.constant dense<0xFF800000> : vector<128xf32>
    %2 = vector.multi_reduction <maximumf>, %1, %cst [0, 1] : vector<16x16x128xf32> to vector<128xf32>
    %3 = vector.shape_cast %2 : vector<128xf32> to vector<1x1x128xf32>
    %4 = vector.shape_cast %3 : vector<1x1x128xf32> to vector<1x128xf32>
    %cst_3 = arith.constant dense<0.000000e+00> : vector<128xf32>
    %5 = vector.multi_reduction <add>, %1, %cst_3 [0, 1] : vector<16x16x128xf32> to vector<128xf32>
    %6 = vector.shape_cast %5 : vector<128xf32> to vector<1x1x128xf32>
    %7 = vector.shape_cast %6 : vector<1x1x128xf32> to vector<1x128xf32>
    %cst_4 = arith.constant 3.906250e-03 : f32
    %8 = vector.broadcast %cst_4 : f32 to vector<1x128xf32>
    %9 = arith.mulf %7, %8 : vector<1x128xf32>
    %10 = tpu.concatenate %4, %9 in 0 : vector<1x128xf32>, vector<1x128xf32> -> vector<2x128xf32>
    %11 = arith.truncf %10 : vector<2x128xf32> to vector<2x128xbf16>
    %c0_5 = arith.constant 0 : index
    %c0_6 = arith.constant 0 : index
    %12 = vector.load %arg2[%c0_5, %c0_6] : memref<128x16xbf16, #tpu.memory_space<vmem>>, vector<128x16xbf16>
    %cst_7 = arith.constant dense<0.000000e+00> : vector<2x16xf32>
    %13 = tpu.matmul %11, %12, %cst_7 {dimension_numbers = #tpu.dot_dimension_numbers<[1], [0], [0], [1], [0, 0, 1, 1], [], []>} : vector<2x128xbf16>, vector<128x16xbf16>, vector<2x16xf32> -> vector<2x16xf32>
    %cst_8 = arith.constant 0.000000e+00 : f32
    %14 = vector.broadcast %cst_8 : f32 to vector<2x16xf32>
    %15 = arith.maximumf %13, %14 : vector<2x16xf32>
    %16 = arith.truncf %15 : vector<2x16xf32> to vector<2x16xbf16>
    %c0_9 = arith.constant 0 : index
    %c0_10 = arith.constant 0 : index
    %17 = vector.load %arg3[%c0_9, %c0_10] : memref<16x128xbf16, #tpu.memory_space<vmem>>, vector<16x128xbf16>
    %cst_11 = arith.constant dense<0.000000e+00> : vector<2x128xf32>
    %18 = tpu.matmul %16, %17, %cst_11 {dimension_numbers = #tpu.dot_dimension_numbers<[1], [0], [0], [1], [0, 0, 1, 1], [], []>} : vector<2x16xbf16>, vector<16x128xbf16>, vector<2x128xf32> -> vector<2x128xf32>
    %19 = vector.extract_strided_slice %18 {offsets = [0, 0], sizes = [1, 128], strides = [1, 1]} : vector<2x128xf32> to vector<1x128xf32>
    %20 = vector.extract_strided_slice %18 {offsets = [1, 0], sizes = [1, 128], strides = [1, 1]} : vector<2x128xf32> to vector<1x128xf32>
    %21 = arith.addf %19, %20 : vector<1x128xf32>
    %22 = arith.negf %21 : vector<1x128xf32>
    %23 = math.exp %22 : vector<1x128xf32>
    %cst_12 = arith.constant 1.000000e+00 : f32
    %24 = vector.broadcast %cst_12 : f32 to vector<1x128xf32>
    %25 = arith.addf %24, %23 : vector<1x128xf32>
    %26 = arith.divf %24, %25 : vector<1x128xf32>
    %c0_13 = arith.constant 0 : index
    %c0_14 = arith.constant 0 : index
    %c0_15 = arith.constant 0 : index
    %27 = vector.load %arg5[%c0_13, %c0_14, %c0_15] : memref<1x1x128xf32, #tpu.memory_space<vmem>>, vector<1x1x128xf32>
    %28 = vector.shape_cast %27 : vector<1x1x128xf32> to vector<1x128xf32>
    %29 = vector.shape_cast %26 : vector<1x128xf32> to vector<1x1x128xf32>
    tpu.vector_store %arg5[%c0_13, %c0_14, %c0_15], %29 {strides = array<i32>} : memref<1x1x128xf32, #tpu.memory_space<vmem>>, vector<1x1x128xf32>,
    %30 = vector.shape_cast %26 : vector<1x128xf32> to vector<1x1x128xf32>
    %31 = vector.broadcast %30 : vector<1x1x128xf32> to vector<16x16x128xf32>
    %32 = arith.mulf %1, %31 : vector<16x16x128xf32>
    %cst_16 = arith.constant dense<0xFF800000> : vector<16x16xf32>
    %33 = vector.multi_reduction <maximumf>, %32, %cst_16 [2] : vector<16x16x128xf32> to vector<16x16xf32>
    %cst_17 = arith.constant dense<0.000000e+00> : vector<16x16xf32>
    %34 = vector.multi_reduction <add>, %32, %cst_17 [2] : vector<16x16x128xf32> to vector<16x16xf32>
    %cst_18 = arith.constant 1.280000e+02 : f32
    %35 = vector.broadcast %cst_18 : f32 to vector<16x16xf32>
    %36 = arith.divf %34, %35 : vector<16x16xf32>
    %cst_19 = arith.constant 0.000000e+00 : f32
    %37 = vector.broadcast %cst_19 : f32 to vector<3x128xf32>
    %cst_20 = arith.constant 0.000000e+00 : f32
    %38 = vector.broadcast %cst_20 : f32 to vector<16x3xf32>
    %cst_21 = arith.constant 0.000000e+00 : f32
    %39 = vector.broadcast %cst_21 : f32 to vector<16x109xf32>
    %c0_22 = arith.constant 0 : index
    %c0_23 = arith.constant 0 : index
    %c0_24 = arith.constant 0 : index
    %40 = vector.load %arg7[%c0_22, %c0_23, %c0_24] : memref<2x22x128xf32, #tpu.memory_space<vmem>>, vector<1x3x128xf32>
    %41 = vector.shape_cast %40 : vector<1x3x128xf32> to vector<3x128xf32>
    %42 = vector.shape_cast %37 : vector<3x128xf32> to vector<1x3x128xf32>
    tpu.vector_store %arg7[%c0_22, %c0_23, %c0_24], %42 {strides = array<i32>} : memref<2x22x128xf32, #tpu.memory_space<vmem>>, vector<1x3x128xf32>,
    %c0_25 = arith.constant 0 : index
    %c19 = arith.constant 19 : index
    %c0_26 = arith.constant 0 : index
    %43 = vector.load %arg7[%c0_25, %c19, %c0_26] : memref<2x22x128xf32, #tpu.memory_space<vmem>>, vector<1x3x128xf32>
    %44 = vector.shape_cast %43 : vector<1x3x128xf32> to vector<3x128xf32>
    %45 = vector.shape_cast %37 : vector<3x128xf32> to vector<1x3x128xf32>
    tpu.vector_store %arg7[%c0_25, %c19, %c0_26], %45 {strides = array<i32>} : memref<2x22x128xf32, #tpu.memory_space<vmem>>, vector<1x3x128xf32>,
    %c0_27 = arith.constant 0 : index
    %c3 = arith.constant 3 : index
    %c0_28 = arith.constant 0 : index
    %46 = vector.load %arg7[%c0_27, %c3, %c0_28] : memref<2x22x128xf32, #tpu.memory_space<vmem>>, vector<1x16x3xf32>
    %47 = vector.shape_cast %46 : vector<1x16x3xf32> to vector<16x3xf32>
    %48 = vector.shape_cast %38 : vector<16x3xf32> to vector<1x16x3xf32>
    tpu.vector_store %arg7[%c0_27, %c3, %c0_28], %48 {strides = array<i32>} : memref<2x22x128xf32, #tpu.memory_space<vmem>>, vector<1x16x3xf32>,
    %c0_29 = arith.constant 0 : index
    %c3_30 = arith.constant 3 : index
    %c19_31 = arith.constant 19 : index
    %49 = vector.load %arg7[%c0_29, %c3_30, %c19_31] : memref<2x22x128xf32, #tpu.memory_space<vmem>>, vector<1x16x109xf32>
    %50 = vector.shape_cast %49 : vector<1x16x109xf32> to vector<16x109xf32>
    %51 = vector.shape_cast %39 : vector<16x109xf32> to vector<1x16x109xf32>
    tpu.vector_store %arg7[%c0_29, %c3_30, %c19_31], %51 {strides = array<i32>} : memref<2x22x128xf32, #tpu.memory_space<vmem>>, vector<1x16x109xf32>,
    %c1 = arith.constant 1 : index
    %c0_32 = arith.constant 0 : index
    %c0_33 = arith.constant 0 : index
    %52 = vector.load %arg7[%c1, %c0_32, %c0_33] : memref<2x22x128xf32, #tpu.memory_space<vmem>>, vector<1x3x128xf32>
    %53 = vector.shape_cast %52 : vector<1x3x128xf32> to vector<3x128xf32>
    %54 = vector.shape_cast %37 : vector<3x128xf32> to vector<1x3x128xf32>
    tpu.vector_store %arg7[%c1, %c0_32, %c0_33], %54 {strides = array<i32>} : memref<2x22x128xf32, #tpu.memory_space<vmem>>, vector<1x3x128xf32>,
    %c1_34 = arith.constant 1 : index
    %c19_35 = arith.constant 19 : index
    %c0_36 = arith.constant 0 : index
    %55 = vector.load %arg7[%c1_34, %c19_35, %c0_36] : memref<2x22x128xf32, #tpu.memory_space<vmem>>, vector<1x3x128xf32>
    %56 = vector.shape_cast %55 : vector<1x3x128xf32> to vector<3x128xf32>
    %57 = vector.shape_cast %37 : vector<3x128xf32> to vector<1x3x128xf32>
    tpu.vector_store %arg7[%c1_34, %c19_35, %c0_36], %57 {strides = array<i32>} : memref<2x22x128xf32, #tpu.memory_space<vmem>>, vector<1x3x128xf32>,
    %c1_37 = arith.constant 1 : index
    %c3_38 = arith.constant 3 : index
    %c0_39 = arith.constant 0 : index
    %58 = vector.load %arg7[%c1_37, %c3_38, %c0_39] : memref<2x22x128xf32, #tpu.memory_space<vmem>>, vector<1x16x3xf32>
    %59 = vector.shape_cast %58 : vector<1x16x3xf32> to vector<16x3xf32>
    %60 = vector.shape_cast %38 : vector<16x3xf32> to vector<1x16x3xf32>
    tpu.vector_store %arg7[%c1_37, %c3_38, %c0_39], %60 {strides = array<i32>} : memref<2x22x128xf32, #tpu.memory_space<vmem>>, vector<1x16x3xf32>,
    %c1_40 = arith.constant 1 : index
    %c3_41 = arith.constant 3 : index
    %c19_42 = arith.constant 19 : index
    %61 = vector.load %arg7[%c1_40, %c3_41, %c19_42] : memref<2x22x128xf32, #tpu.memory_space<vmem>>, vector<1x16x109xf32>
    %62 = vector.shape_cast %61 : vector<1x16x109xf32> to vector<16x109xf32>
    %63 = vector.shape_cast %39 : vector<16x109xf32> to vector<1x16x109xf32>
    tpu.vector_store %arg7[%c1_40, %c3_41, %c19_42], %63 {strides = array<i32>} : memref<2x22x128xf32, #tpu.memory_space<vmem>>, vector<1x16x109xf32>,
    %c0_43 = arith.constant 0 : index
    %c3_44 = arith.constant 3 : index
    %c3_45 = arith.constant 3 : index
    %64 = vector.load %arg7[%c0_43, %c3_44, %c3_45] : memref<2x22x128xf32, #tpu.memory_space<vmem>>, vector<1x16x16xf32>
    %65 = vector.shape_cast %64 : vector<1x16x16xf32> to vector<16x16xf32>
    %66 = vector.shape_cast %33 : vector<16x16xf32> to vector<1x16x16xf32>
    tpu.vector_store %arg7[%c0_43, %c3_44, %c3_45], %66 {strides = array<i32>} : memref<2x22x128xf32, #tpu.memory_space<vmem>>, vector<1x16x16xf32>,
    %c1_46 = arith.constant 1 : index
    %c3_47 = arith.constant 3 : index
    %c3_48 = arith.constant 3 : index
    %67 = vector.load %arg7[%c1_46, %c3_47, %c3_48] : memref<2x22x128xf32, #tpu.memory_space<vmem>>, vector<1x16x16xf32>
    %68 = vector.shape_cast %67 : vector<1x16x16xf32> to vector<16x16xf32>
    %69 = vector.shape_cast %36 : vector<16x16xf32> to vector<1x16x16xf32>
    tpu.vector_store %arg7[%c1_46, %c3_47, %c3_48], %69 {strides = array<i32>} : memref<2x22x128xf32, #tpu.memory_space<vmem>>, vector<1x16x16xf32>,
    %cst_49 = arith.constant 0.000000e+00 : f32
    %70 = vector.broadcast %cst_49 : f32 to vector<16x16xf32>
    %c0_50 = arith.constant 0 : index
    %c0_51 = arith.constant 0 : index
    %c0_52 = arith.constant 0 : index
    %71 = vector.load %arg7[%c0_50, %c0_51, %c0_52] : memref<2x22x128xf32, #tpu.memory_space<vmem>>, vector<1x22x16xf32>
    %72 = vector.shape_cast %71 : vector<1x22x16xf32> to vector<22x16xf32>
    %c1_53 = arith.constant 1 : index
    %c0_54 = arith.constant 0 : index
    %c0_55 = arith.constant 0 : index
    %73 = vector.load %arg7[%c1_53, %c0_54, %c0_55] : memref<2x22x128xf32, #tpu.memory_space<vmem>>, vector<1x22x16xf32>
    %74 = vector.shape_cast %73 : vector<1x22x16xf32> to vector<22x16xf32>
    %75 = vector.extract_strided_slice %72 {offsets = [0, 0], sizes = [16, 16], strides = [1, 1]} : vector<22x16xf32> to vector<16x16xf32>
    %c0_56 = arith.constant 0 : index
    %76 = memref.load %arg4[%c0_56] : memref<98xf32, #tpu.memory_space<smem>>
    %77 = vector.broadcast %76 : f32 to vector<16x16xf32>
    %78 = arith.mulf %75, %77 : vector<16x16xf32>
    %79 = arith.addf %70, %78 : vector<16x16xf32>
    %80 = vector.extract_strided_slice %74 {offsets = [0, 0], sizes = [16, 16], strides = [1, 1]} : vector<22x16xf32> to vector<16x16xf32>
    %c1_57 = arith.constant 1 : index
    %81 = memref.load %arg4[%c1_57] : memref<98xf32, #tpu.memory_space<smem>>
    %82 = vector.broadcast %81 : f32 to vector<16x16xf32>
    %83 = arith.mulf %80, %82 : vector<16x16xf32>
    %84 = arith.addf %79, %83 : vector<16x16xf32>
    %85 = vector.extract_strided_slice %72 {offsets = [1, 0], sizes = [16, 16], strides = [1, 1]} : vector<22x16xf32> to vector<16x16xf32>
    %c14 = arith.constant 14 : index
    %86 = memref.load %arg4[%c14] : memref<98xf32, #tpu.memory_space<smem>>
    %87 = vector.broadcast %86 : f32 to vector<16x16xf32>
    %88 = arith.mulf %85, %87 : vector<16x16xf32>
    %89 = arith.addf %84, %88 : vector<16x16xf32>
    %90 = vector.extract_strided_slice %74 {offsets = [1, 0], sizes = [16, 16], strides = [1, 1]} : vector<22x16xf32> to vector<16x16xf32>
    %c15 = arith.constant 15 : index
    %91 = memref.load %arg4[%c15] : memref<98xf32, #tpu.memory_space<smem>>
    %92 = vector.broadcast %91 : f32 to vector<16x16xf32>
    %93 = arith.mulf %90, %92 : vector<16x16xf32>
    %94 = arith.addf %89, %93 : vector<16x16xf32>
    %95 = vector.extract_strided_slice %72 {offsets = [2, 0], sizes = [16, 16], strides = [1, 1]} : vector<22x16xf32> to vector<16x16xf32>
    %c28 = arith.constant 28 : index
    %96 = memref.load %arg4[%c28] : memref<98xf32, #tpu.memory_space<smem>>
    %97 = vector.broadcast %96 : f32 to vector<16x16xf32>
    %98 = arith.mulf %95, %97 : vector<16x16xf32>
    %99 = arith.addf %94, %98 : vector<16x16xf32>
    %100 = vector.extract_strided_slice %74 {offsets = [2, 0], sizes = [16, 16], strides = [1, 1]} : vector<22x16xf32> to vector<16x16xf32>
    %c29 = arith.constant 29 : index
    %101 = memref.load %arg4[%c29] : memref<98xf32, #tpu.memory_space<smem>>
    %102 = vector.broadcast %101 : f32 to vector<16x16xf32>
    %103 = arith.mulf %100, %102 : vector<16x16xf32>
    %104 = arith.addf %99, %103 : vector<16x16xf32>
    %105 = vector.extract_strided_slice %72 {offsets = [3, 0], sizes = [16, 16], strides = [1, 1]} : vector<22x16xf32> to vector<16x16xf32>
    %c42 = arith.constant 42 : index
    %106 = memref.load %arg4[%c42] : memref<98xf32, #tpu.memory_space<smem>>
    %107 = vector.broadcast %106 : f32 to vector<16x16xf32>
    %108 = arith.mulf %105, %107 : vector<16x16xf32>
    %109 = arith.addf %104, %108 : vector<16x16xf32>
    %110 = vector.extract_strided_slice %74 {offsets = [3, 0], sizes = [16, 16], strides = [1, 1]} : vector<22x16xf32> to vector<16x16xf32>
    %c43 = arith.constant 43 : index
    %111 = memref.load %arg4[%c43] : memref<98xf32, #tpu.memory_space<smem>>
    %112 = vector.broadcast %111 : f32 to vector<16x16xf32>
    %113 = arith.mulf %110, %112 : vector<16x16xf32>
    %114 = arith.addf %109, %113 : vector<16x16xf32>
    %115 = vector.extract_strided_slice %72 {offsets = [4, 0], sizes = [16, 16], strides = [1, 1]} : vector<22x16xf32> to vector<16x16xf32>
    %c56 = arith.constant 56 : index
    %116 = memref.load %arg4[%c56] : memref<98xf32, #tpu.memory_space<smem>>
    %117 = vector.broadcast %116 : f32 to vector<16x16xf32>
    %118 = arith.mulf %115, %117 : vector<16x16xf32>
    %119 = arith.addf %114, %118 : vector<16x16xf32>
    %120 = vector.extract_strided_slice %74 {offsets = [4, 0], sizes = [16, 16], strides = [1, 1]} : vector<22x16xf32> to vector<16x16xf32>
    %c57 = arith.constant 57 : index
    %121 = memref.load %arg4[%c57] : memref<98xf32, #tpu.memory_space<smem>>
    %122 = vector.broadcast %121 : f32 to vector<16x16xf32>
    %123 = arith.mulf %120, %122 : vector<16x16xf32>
    %124 = arith.addf %119, %123 : vector<16x16xf32>
    %125 = vector.extract_strided_slice %72 {offsets = [5, 0], sizes = [16, 16], strides = [1, 1]} : vector<22x16xf32> to vector<16x16xf32>
    %c70 = arith.constant 70 : index
    %126 = memref.load %arg4[%c70] : memref<98xf32, #tpu.memory_space<smem>>
    %127 = vector.broadcast %126 : f32 to vector<16x16xf32>
    %128 = arith.mulf %125, %127 : vector<16x16xf32>
    %129 = arith.addf %124, %128 : vector<16x16xf32>
    %130 = vector.extract_strided_slice %74 {offsets = [5, 0], sizes = [16, 16], strides = [1, 1]} : vector<22x16xf32> to vector<16x16xf32>
    %c71 = arith.constant 71 : index
    %131 = memref.load %arg4[%c71] : memref<98xf32, #tpu.memory_space<smem>>
    %132 = vector.broadcast %131 : f32 to vector<16x16xf32>
    %133 = arith.mulf %130, %132 : vector<16x16xf32>
    %134 = arith.addf %129, %133 : vector<16x16xf32>
    %135 = vector.extract_strided_slice %72 {offsets = [6, 0], sizes = [16, 16], strides = [1, 1]} : vector<22x16xf32> to vector<16x16xf32>
    %c84 = arith.constant 84 : index
    %136 = memref.load %arg4[%c84] : memref<98xf32, #tpu.memory_space<smem>>
    %137 = vector.broadcast %136 : f32 to vector<16x16xf32>
    %138 = arith.mulf %135, %137 : vector<16x16xf32>
    %139 = arith.addf %134, %138 : vector<16x16xf32>
    %140 = vector.extract_strided_slice %74 {offsets = [6, 0], sizes = [16, 16], strides = [1, 1]} : vector<22x16xf32> to vector<16x16xf32>
    %c85 = arith.constant 85 : index
    %141 = memref.load %arg4[%c85] : memref<98xf32, #tpu.memory_space<smem>>
    %142 = vector.broadcast %141 : f32 to vector<16x16xf32>
    %143 = arith.mulf %140, %142 : vector<16x16xf32>
    %144 = arith.addf %139, %143 : vector<16x16xf32>
    %c0_58 = arith.constant 0 : index
    %c0_59 = arith.constant 0 : index
    %c1_60 = arith.constant 1 : index
    %145 = vector.load %arg7[%c0_58, %c0_59, %c1_60] : memref<2x22x128xf32, #tpu.memory_space<vmem>>, vector<1x22x16xf32>
    %146 = vector.shape_cast %145 : vector<1x22x16xf32> to vector<22x16xf32>
    %c1_61 = arith.constant 1 : index
    %c0_62 = arith.constant 0 : index
    %c1_63 = arith.constant 1 : index
    %147 = vector.load %arg7[%c1_61, %c0_62, %c1_63] : memref<2x22x128xf32, #tpu.memory_space<vmem>>, vector<1x22x16xf32>
    %148 = vector.shape_cast %147 : vector<1x22x16xf32> to vector<22x16xf32>
    %149 = vector.extract_strided_slice %146 {offsets = [0, 0], sizes = [16, 16], strides = [1, 1]} : vector<22x16xf32> to vector<16x16xf32>
    %c2 = arith.constant 2 : index
    %150 = memref.load %arg4[%c2] : memref<98xf32, #tpu.memory_space<smem>>
    %151 = vector.broadcast %150 : f32 to vector<16x16xf32>
    %152 = arith.mulf %149, %151 : vector<16x16xf32>
    %153 = arith.addf %144, %152 : vector<16x16xf32>
    %154 = vector.extract_strided_slice %148 {offsets = [0, 0], sizes = [16, 16], strides = [1, 1]} : vector<22x16xf32> to vector<16x16xf32>
    %c3_64 = arith.constant 3 : index
    %155 = memref.load %arg4[%c3_64] : memref<98xf32, #tpu.memory_space<smem>>
    %156 = vector.broadcast %155 : f32 to vector<16x16xf32>
    %157 = arith.mulf %154, %156 : vector<16x16xf32>
    %158 = arith.addf %153, %157 : vector<16x16xf32>
    %159 = vector.extract_strided_slice %146 {offsets = [1, 0], sizes = [16, 16], strides = [1, 1]} : vector<22x16xf32> to vector<16x16xf32>
    %c16 = arith.constant 16 : index
    %160 = memref.load %arg4[%c16] : memref<98xf32, #tpu.memory_space<smem>>
    %161 = vector.broadcast %160 : f32 to vector<16x16xf32>
    %162 = arith.mulf %159, %161 : vector<16x16xf32>
    %163 = arith.addf %158, %162 : vector<16x16xf32>
    %164 = vector.extract_strided_slice %148 {offsets = [1, 0], sizes = [16, 16], strides = [1, 1]} : vector<22x16xf32> to vector<16x16xf32>
    %c17 = arith.constant 17 : index
    %165 = memref.load %arg4[%c17] : memref<98xf32, #tpu.memory_space<smem>>
    %166 = vector.broadcast %165 : f32 to vector<16x16xf32>
    %167 = arith.mulf %164, %166 : vector<16x16xf32>
    %168 = arith.addf %163, %167 : vector<16x16xf32>
    %169 = vector.extract_strided_slice %146 {offsets = [2, 0], sizes = [16, 16], strides = [1, 1]} : vector<22x16xf32> to vector<16x16xf32>
    %c30 = arith.constant 30 : index
    %170 = memref.load %arg4[%c30] : memref<98xf32, #tpu.memory_space<smem>>
    %171 = vector.broadcast %170 : f32 to vector<16x16xf32>
    %172 = arith.mulf %169, %171 : vector<16x16xf32>
    %173 = arith.addf %168, %172 : vector<16x16xf32>
    %174 = vector.extract_strided_slice %148 {offsets = [2, 0], sizes = [16, 16], strides = [1, 1]} : vector<22x16xf32> to vector<16x16xf32>
    %c31 = arith.constant 31 : index
    %175 = memref.load %arg4[%c31] : memref<98xf32, #tpu.memory_space<smem>>
    %176 = vector.broadcast %175 : f32 to vector<16x16xf32>
    %177 = arith.mulf %174, %176 : vector<16x16xf32>
    %178 = arith.addf %173, %177 : vector<16x16xf32>
    %179 = vector.extract_strided_slice %146 {offsets = [3, 0], sizes = [16, 16], strides = [1, 1]} : vector<22x16xf32> to vector<16x16xf32>
    %c44 = arith.constant 44 : index
    %180 = memref.load %arg4[%c44] : memref<98xf32, #tpu.memory_space<smem>>
    %181 = vector.broadcast %180 : f32 to vector<16x16xf32>
    %182 = arith.mulf %179, %181 : vector<16x16xf32>
    %183 = arith.addf %178, %182 : vector<16x16xf32>
    %184 = vector.extract_strided_slice %148 {offsets = [3, 0], sizes = [16, 16], strides = [1, 1]} : vector<22x16xf32> to vector<16x16xf32>
    %c45 = arith.constant 45 : index
    %185 = memref.load %arg4[%c45] : memref<98xf32, #tpu.memory_space<smem>>
    %186 = vector.broadcast %185 : f32 to vector<16x16xf32>
    %187 = arith.mulf %184, %186 : vector<16x16xf32>
    %188 = arith.addf %183, %187 : vector<16x16xf32>
    %189 = vector.extract_strided_slice %146 {offsets = [4, 0], sizes = [16, 16], strides = [1, 1]} : vector<22x16xf32> to vector<16x16xf32>
    %c58 = arith.constant 58 : index
    %190 = memref.load %arg4[%c58] : memref<98xf32, #tpu.memory_space<smem>>
    %191 = vector.broadcast %190 : f32 to vector<16x16xf32>
    %192 = arith.mulf %189, %191 : vector<16x16xf32>
    %193 = arith.addf %188, %192 : vector<16x16xf32>
    %194 = vector.extract_strided_slice %148 {offsets = [4, 0], sizes = [16, 16], strides = [1, 1]} : vector<22x16xf32> to vector<16x16xf32>
    %c59 = arith.constant 59 : index
    %195 = memref.load %arg4[%c59] : memref<98xf32, #tpu.memory_space<smem>>
    %196 = vector.broadcast %195 : f32 to vector<16x16xf32>
    %197 = arith.mulf %194, %196 : vector<16x16xf32>
    %198 = arith.addf %193, %197 : vector<16x16xf32>
    %199 = vector.extract_strided_slice %146 {offsets = [5, 0], sizes = [16, 16], strides = [1, 1]} : vector<22x16xf32> to vector<16x16xf32>
    %c72 = arith.constant 72 : index
    %200 = memref.load %arg4[%c72] : memref<98xf32, #tpu.memory_space<smem>>
    %201 = vector.broadcast %200 : f32 to vector<16x16xf32>
    %202 = arith.mulf %199, %201 : vector<16x16xf32>
    %203 = arith.addf %198, %202 : vector<16x16xf32>
    %204 = vector.extract_strided_slice %148 {offsets = [5, 0], sizes = [16, 16], strides = [1, 1]} : vector<22x16xf32> to vector<16x16xf32>
    %c73 = arith.constant 73 : index
    %205 = memref.load %arg4[%c73] : memref<98xf32, #tpu.memory_space<smem>>
    %206 = vector.broadcast %205 : f32 to vector<16x16xf32>
    %207 = arith.mulf %204, %206 : vector<16x16xf32>
    %208 = arith.addf %203, %207 : vector<16x16xf32>
    %209 = vector.extract_strided_slice %146 {offsets = [6, 0], sizes = [16, 16], strides = [1, 1]} : vector<22x16xf32> to vector<16x16xf32>
    %c86 = arith.constant 86 : index
    %210 = memref.load %arg4[%c86] : memref<98xf32, #tpu.memory_space<smem>>
    %211 = vector.broadcast %210 : f32 to vector<16x16xf32>
    %212 = arith.mulf %209, %211 : vector<16x16xf32>
    %213 = arith.addf %208, %212 : vector<16x16xf32>
    %214 = vector.extract_strided_slice %148 {offsets = [6, 0], sizes = [16, 16], strides = [1, 1]} : vector<22x16xf32> to vector<16x16xf32>
    %c87 = arith.constant 87 : index
    %215 = memref.load %arg4[%c87] : memref<98xf32, #tpu.memory_space<smem>>
    %216 = vector.broadcast %215 : f32 to vector<16x16xf32>
    %217 = arith.mulf %214, %216 : vector<16x16xf32>
    %218 = arith.addf %213, %217 : vector<16x16xf32>
    %c0_65 = arith.constant 0 : index
    %c0_66 = arith.constant 0 : index
    %c2_67 = arith.constant 2 : index
    %219 = vector.load %arg7[%c0_65, %c0_66, %c2_67] : memref<2x22x128xf32, #tpu.memory_space<vmem>>, vector<1x22x16xf32>
    %220 = vector.shape_cast %219 : vector<1x22x16xf32> to vector<22x16xf32>
    %c1_68 = arith.constant 1 : index
    %c0_69 = arith.constant 0 : index
    %c2_70 = arith.constant 2 : index
    %221 = vector.load %arg7[%c1_68, %c0_69, %c2_70] : memref<2x22x128xf32, #tpu.memory_space<vmem>>, vector<1x22x16xf32>
    %222 = vector.shape_cast %221 : vector<1x22x16xf32> to vector<22x16xf32>
    %223 = vector.extract_strided_slice %220 {offsets = [0, 0], sizes = [16, 16], strides = [1, 1]} : vector<22x16xf32> to vector<16x16xf32>
    %c4 = arith.constant 4 : index
    %224 = memref.load %arg4[%c4] : memref<98xf32, #tpu.memory_space<smem>>
    %225 = vector.broadcast %224 : f32 to vector<16x16xf32>
    %226 = arith.mulf %223, %225 : vector<16x16xf32>
    %227 = arith.addf %218, %226 : vector<16x16xf32>
    %228 = vector.extract_strided_slice %222 {offsets = [0, 0], sizes = [16, 16], strides = [1, 1]} : vector<22x16xf32> to vector<16x16xf32>
    %c5 = arith.constant 5 : index
    %229 = memref.load %arg4[%c5] : memref<98xf32, #tpu.memory_space<smem>>
    %230 = vector.broadcast %229 : f32 to vector<16x16xf32>
    %231 = arith.mulf %228, %230 : vector<16x16xf32>
    %232 = arith.addf %227, %231 : vector<16x16xf32>
    %233 = vector.extract_strided_slice %220 {offsets = [1, 0], sizes = [16, 16], strides = [1, 1]} : vector<22x16xf32> to vector<16x16xf32>
    %c18 = arith.constant 18 : index
    %234 = memref.load %arg4[%c18] : memref<98xf32, #tpu.memory_space<smem>>
    %235 = vector.broadcast %234 : f32 to vector<16x16xf32>
    %236 = arith.mulf %233, %235 : vector<16x16xf32>
    %237 = arith.addf %232, %236 : vector<16x16xf32>
    %238 = vector.extract_strided_slice %222 {offsets = [1, 0], sizes = [16, 16], strides = [1, 1]} : vector<22x16xf32> to vector<16x16xf32>
    %c19_71 = arith.constant 19 : index
    %239 = memref.load %arg4[%c19_71] : memref<98xf32, #tpu.memory_space<smem>>
    %240 = vector.broadcast %239 : f32 to vector<16x16xf32>
    %241 = arith.mulf %238, %240 : vector<16x16xf32>
    %242 = arith.addf %237, %241 : vector<16x16xf32>
    %243 = vector.extract_strided_slice %220 {offsets = [2, 0], sizes = [16, 16], strides = [1, 1]} : vector<22x16xf32> to vector<16x16xf32>
    %c32 = arith.constant 32 : index
    %244 = memref.load %arg4[%c32] : memref<98xf32, #tpu.memory_space<smem>>
    %245 = vector.broadcast %244 : f32 to vector<16x16xf32>
    %246 = arith.mulf %243, %245 : vector<16x16xf32>
    %247 = arith.addf %242, %246 : vector<16x16xf32>
    %248 = vector.extract_strided_slice %222 {offsets = [2, 0], sizes = [16, 16], strides = [1, 1]} : vector<22x16xf32> to vector<16x16xf32>
    %c33 = arith.constant 33 : index
    %249 = memref.load %arg4[%c33] : memref<98xf32, #tpu.memory_space<smem>>
    %250 = vector.broadcast %249 : f32 to vector<16x16xf32>
    %251 = arith.mulf %248, %250 : vector<16x16xf32>
    %252 = arith.addf %247, %251 : vector<16x16xf32>
    %253 = vector.extract_strided_slice %220 {offsets = [3, 0], sizes = [16, 16], strides = [1, 1]} : vector<22x16xf32> to vector<16x16xf32>
    %c46 = arith.constant 46 : index
    %254 = memref.load %arg4[%c46] : memref<98xf32, #tpu.memory_space<smem>>
    %255 = vector.broadcast %254 : f32 to vector<16x16xf32>
    %256 = arith.mulf %253, %255 : vector<16x16xf32>
    %257 = arith.addf %252, %256 : vector<16x16xf32>
    %258 = vector.extract_strided_slice %222 {offsets = [3, 0], sizes = [16, 16], strides = [1, 1]} : vector<22x16xf32> to vector<16x16xf32>
    %c47 = arith.constant 47 : index
    %259 = memref.load %arg4[%c47] : memref<98xf32, #tpu.memory_space<smem>>
    %260 = vector.broadcast %259 : f32 to vector<16x16xf32>
    %261 = arith.mulf %258, %260 : vector<16x16xf32>
    %262 = arith.addf %257, %261 : vector<16x16xf32>
    %263 = vector.extract_strided_slice %220 {offsets = [4, 0], sizes = [16, 16], strides = [1, 1]} : vector<22x16xf32> to vector<16x16xf32>
    %c60 = arith.constant 60 : index
    %264 = memref.load %arg4[%c60] : memref<98xf32, #tpu.memory_space<smem>>
    %265 = vector.broadcast %264 : f32 to vector<16x16xf32>
    %266 = arith.mulf %263, %265 : vector<16x16xf32>
    %267 = arith.addf %262, %266 : vector<16x16xf32>
    %268 = vector.extract_strided_slice %222 {offsets = [4, 0], sizes = [16, 16], strides = [1, 1]} : vector<22x16xf32> to vector<16x16xf32>
    %c61 = arith.constant 61 : index
    %269 = memref.load %arg4[%c61] : memref<98xf32, #tpu.memory_space<smem>>
    %270 = vector.broadcast %269 : f32 to vector<16x16xf32>
    %271 = arith.mulf %268, %270 : vector<16x16xf32>
    %272 = arith.addf %267, %271 : vector<16x16xf32>
    %273 = vector.extract_strided_slice %220 {offsets = [5, 0], sizes = [16, 16], strides = [1, 1]} : vector<22x16xf32> to vector<16x16xf32>
    %c74 = arith.constant 74 : index
    %274 = memref.load %arg4[%c74] : memref<98xf32, #tpu.memory_space<smem>>
    %275 = vector.broadcast %274 : f32 to vector<16x16xf32>
    %276 = arith.mulf %273, %275 : vector<16x16xf32>
    %277 = arith.addf %272, %276 : vector<16x16xf32>
    %278 = vector.extract_strided_slice %222 {offsets = [5, 0], sizes = [16, 16], strides = [1, 1]} : vector<22x16xf32> to vector<16x16xf32>
    %c75 = arith.constant 75 : index
    %279 = memref.load %arg4[%c75] : memref<98xf32, #tpu.memory_space<smem>>
    %280 = vector.broadcast %279 : f32 to vector<16x16xf32>
    %281 = arith.mulf %278, %280 : vector<16x16xf32>
    %282 = arith.addf %277, %281 : vector<16x16xf32>
    %283 = vector.extract_strided_slice %220 {offsets = [6, 0], sizes = [16, 16], strides = [1, 1]} : vector<22x16xf32> to vector<16x16xf32>
    %c88 = arith.constant 88 : index
    %284 = memref.load %arg4[%c88] : memref<98xf32, #tpu.memory_space<smem>>
    %285 = vector.broadcast %284 : f32 to vector<16x16xf32>
    %286 = arith.mulf %283, %285 : vector<16x16xf32>
    %287 = arith.addf %282, %286 : vector<16x16xf32>
    %288 = vector.extract_strided_slice %222 {offsets = [6, 0], sizes = [16, 16], strides = [1, 1]} : vector<22x16xf32> to vector<16x16xf32>
    %c89 = arith.constant 89 : index
    %289 = memref.load %arg4[%c89] : memref<98xf32, #tpu.memory_space<smem>>
    %290 = vector.broadcast %289 : f32 to vector<16x16xf32>
    %291 = arith.mulf %288, %290 : vector<16x16xf32>
    %292 = arith.addf %287, %291 : vector<16x16xf32>
    %c0_72 = arith.constant 0 : index
    %c0_73 = arith.constant 0 : index
    %c3_74 = arith.constant 3 : index
    %293 = vector.load %arg7[%c0_72, %c0_73, %c3_74] : memref<2x22x128xf32, #tpu.memory_space<vmem>>, vector<1x22x16xf32>
    %294 = vector.shape_cast %293 : vector<1x22x16xf32> to vector<22x16xf32>
    %c1_75 = arith.constant 1 : index
    %c0_76 = arith.constant 0 : index
    %c3_77 = arith.constant 3 : index
    %295 = vector.load %arg7[%c1_75, %c0_76, %c3_77] : memref<2x22x128xf32, #tpu.memory_space<vmem>>, vector<1x22x16xf32>
    %296 = vector.shape_cast %295 : vector<1x22x16xf32> to vector<22x16xf32>
    %297 = vector.extract_strided_slice %294 {offsets = [0, 0], sizes = [16, 16], strides = [1, 1]} : vector<22x16xf32> to vector<16x16xf32>
    %c6 = arith.constant 6 : index
    %298 = memref.load %arg4[%c6] : memref<98xf32, #tpu.memory_space<smem>>
    %299 = vector.broadcast %298 : f32 to vector<16x16xf32>
    %300 = arith.mulf %297, %299 : vector<16x16xf32>
    %301 = arith.addf %292, %300 : vector<16x16xf32>
    %302 = vector.extract_strided_slice %296 {offsets = [0, 0], sizes = [16, 16], strides = [1, 1]} : vector<22x16xf32> to vector<16x16xf32>
    %c7 = arith.constant 7 : index
    %303 = memref.load %arg4[%c7] : memref<98xf32, #tpu.memory_space<smem>>
    %304 = vector.broadcast %303 : f32 to vector<16x16xf32>
    %305 = arith.mulf %302, %304 : vector<16x16xf32>
    %306 = arith.addf %301, %305 : vector<16x16xf32>
    %307 = vector.extract_strided_slice %294 {offsets = [1, 0], sizes = [16, 16], strides = [1, 1]} : vector<22x16xf32> to vector<16x16xf32>
    %c20 = arith.constant 20 : index
    %308 = memref.load %arg4[%c20] : memref<98xf32, #tpu.memory_space<smem>>
    %309 = vector.broadcast %308 : f32 to vector<16x16xf32>
    %310 = arith.mulf %307, %309 : vector<16x16xf32>
    %311 = arith.addf %306, %310 : vector<16x16xf32>
    %312 = vector.extract_strided_slice %296 {offsets = [1, 0], sizes = [16, 16], strides = [1, 1]} : vector<22x16xf32> to vector<16x16xf32>
    %c21 = arith.constant 21 : index
    %313 = memref.load %arg4[%c21] : memref<98xf32, #tpu.memory_space<smem>>
    %314 = vector.broadcast %313 : f32 to vector<16x16xf32>
    %315 = arith.mulf %312, %314 : vector<16x16xf32>
    %316 = arith.addf %311, %315 : vector<16x16xf32>
    %317 = vector.extract_strided_slice %294 {offsets = [2, 0], sizes = [16, 16], strides = [1, 1]} : vector<22x16xf32> to vector<16x16xf32>
    %c34 = arith.constant 34 : index
    %318 = memref.load %arg4[%c34] : memref<98xf32, #tpu.memory_space<smem>>
    %319 = vector.broadcast %318 : f32 to vector<16x16xf32>
    %320 = arith.mulf %317, %319 : vector<16x16xf32>
    %321 = arith.addf %316, %320 : vector<16x16xf32>
    %322 = vector.extract_strided_slice %296 {offsets = [2, 0], sizes = [16, 16], strides = [1, 1]} : vector<22x16xf32> to vector<16x16xf32>
    %c35 = arith.constant 35 : index
    %323 = memref.load %arg4[%c35] : memref<98xf32, #tpu.memory_space<smem>>
    %324 = vector.broadcast %323 : f32 to vector<16x16xf32>
    %325 = arith.mulf %322, %324 : vector<16x16xf32>
    %326 = arith.addf %321, %325 : vector<16x16xf32>
    %327 = vector.extract_strided_slice %294 {offsets = [3, 0], sizes = [16, 16], strides = [1, 1]} : vector<22x16xf32> to vector<16x16xf32>
    %c48 = arith.constant 48 : index
    %328 = memref.load %arg4[%c48] : memref<98xf32, #tpu.memory_space<smem>>
    %329 = vector.broadcast %328 : f32 to vector<16x16xf32>
    %330 = arith.mulf %327, %329 : vector<16x16xf32>
    %331 = arith.addf %326, %330 : vector<16x16xf32>
    %332 = vector.extract_strided_slice %296 {offsets = [3, 0], sizes = [16, 16], strides = [1, 1]} : vector<22x16xf32> to vector<16x16xf32>
    %c49 = arith.constant 49 : index
    %333 = memref.load %arg4[%c49] : memref<98xf32, #tpu.memory_space<smem>>
    %334 = vector.broadcast %333 : f32 to vector<16x16xf32>
    %335 = arith.mulf %332, %334 : vector<16x16xf32>
    %336 = arith.addf %331, %335 : vector<16x16xf32>
    %337 = vector.extract_strided_slice %294 {offsets = [4, 0], sizes = [16, 16], strides = [1, 1]} : vector<22x16xf32> to vector<16x16xf32>
    %c62 = arith.constant 62 : index
    %338 = memref.load %arg4[%c62] : memref<98xf32, #tpu.memory_space<smem>>
    %339 = vector.broadcast %338 : f32 to vector<16x16xf32>
    %340 = arith.mulf %337, %339 : vector<16x16xf32>
    %341 = arith.addf %336, %340 : vector<16x16xf32>
    %342 = vector.extract_strided_slice %296 {offsets = [4, 0], sizes = [16, 16], strides = [1, 1]} : vector<22x16xf32> to vector<16x16xf32>
    %c63 = arith.constant 63 : index
    %343 = memref.load %arg4[%c63] : memref<98xf32, #tpu.memory_space<smem>>
    %344 = vector.broadcast %343 : f32 to vector<16x16xf32>
    %345 = arith.mulf %342, %344 : vector<16x16xf32>
    %346 = arith.addf %341, %345 : vector<16x16xf32>
    %347 = vector.extract_strided_slice %294 {offsets = [5, 0], sizes = [16, 16], strides = [1, 1]} : vector<22x16xf32> to vector<16x16xf32>
    %c76 = arith.constant 76 : index
    %348 = memref.load %arg4[%c76] : memref<98xf32, #tpu.memory_space<smem>>
    %349 = vector.broadcast %348 : f32 to vector<16x16xf32>
    %350 = arith.mulf %347, %349 : vector<16x16xf32>
    %351 = arith.addf %346, %350 : vector<16x16xf32>
    %352 = vector.extract_strided_slice %296 {offsets = [5, 0], sizes = [16, 16], strides = [1, 1]} : vector<22x16xf32> to vector<16x16xf32>
    %c77 = arith.constant 77 : index
    %353 = memref.load %arg4[%c77] : memref<98xf32, #tpu.memory_space<smem>>
    %354 = vector.broadcast %353 : f32 to vector<16x16xf32>
    %355 = arith.mulf %352, %354 : vector<16x16xf32>
    %356 = arith.addf %351, %355 : vector<16x16xf32>
    %357 = vector.extract_strided_slice %294 {offsets = [6, 0], sizes = [16, 16], strides = [1, 1]} : vector<22x16xf32> to vector<16x16xf32>
    %c90 = arith.constant 90 : index
    %358 = memref.load %arg4[%c90] : memref<98xf32, #tpu.memory_space<smem>>
    %359 = vector.broadcast %358 : f32 to vector<16x16xf32>
    %360 = arith.mulf %357, %359 : vector<16x16xf32>
    %361 = arith.addf %356, %360 : vector<16x16xf32>
    %362 = vector.extract_strided_slice %296 {offsets = [6, 0], sizes = [16, 16], strides = [1, 1]} : vector<22x16xf32> to vector<16x16xf32>
    %c91 = arith.constant 91 : index
    %363 = memref.load %arg4[%c91] : memref<98xf32, #tpu.memory_space<smem>>
    %364 = vector.broadcast %363 : f32 to vector<16x16xf32>
    %365 = arith.mulf %362, %364 : vector<16x16xf32>
    %366 = arith.addf %361, %365 : vector<16x16xf32>
    %c0_78 = arith.constant 0 : index
    %c0_79 = arith.constant 0 : index
    %c4_80 = arith.constant 4 : index
    %367 = vector.load %arg7[%c0_78, %c0_79, %c4_80] : memref<2x22x128xf32, #tpu.memory_space<vmem>>, vector<1x22x16xf32>
    %368 = vector.shape_cast %367 : vector<1x22x16xf32> to vector<22x16xf32>
    %c1_81 = arith.constant 1 : index
    %c0_82 = arith.constant 0 : index
    %c4_83 = arith.constant 4 : index
    %369 = vector.load %arg7[%c1_81, %c0_82, %c4_83] : memref<2x22x128xf32, #tpu.memory_space<vmem>>, vector<1x22x16xf32>
    %370 = vector.shape_cast %369 : vector<1x22x16xf32> to vector<22x16xf32>
    %371 = vector.extract_strided_slice %368 {offsets = [0, 0], sizes = [16, 16], strides = [1, 1]} : vector<22x16xf32> to vector<16x16xf32>
    %c8 = arith.constant 8 : index
    %372 = memref.load %arg4[%c8] : memref<98xf32, #tpu.memory_space<smem>>
    %373 = vector.broadcast %372 : f32 to vector<16x16xf32>
    %374 = arith.mulf %371, %373 : vector<16x16xf32>
    %375 = arith.addf %366, %374 : vector<16x16xf32>
    %376 = vector.extract_strided_slice %370 {offsets = [0, 0], sizes = [16, 16], strides = [1, 1]} : vector<22x16xf32> to vector<16x16xf32>
    %c9 = arith.constant 9 : index
    %377 = memref.load %arg4[%c9] : memref<98xf32, #tpu.memory_space<smem>>
    %378 = vector.broadcast %377 : f32 to vector<16x16xf32>
    %379 = arith.mulf %376, %378 : vector<16x16xf32>
    %380 = arith.addf %375, %379 : vector<16x16xf32>
    %381 = vector.extract_strided_slice %368 {offsets = [1, 0], sizes = [16, 16], strides = [1, 1]} : vector<22x16xf32> to vector<16x16xf32>
    %c22 = arith.constant 22 : index
    %382 = memref.load %arg4[%c22] : memref<98xf32, #tpu.memory_space<smem>>
    %383 = vector.broadcast %382 : f32 to vector<16x16xf32>
    %384 = arith.mulf %381, %383 : vector<16x16xf32>
    %385 = arith.addf %380, %384 : vector<16x16xf32>
    %386 = vector.extract_strided_slice %370 {offsets = [1, 0], sizes = [16, 16], strides = [1, 1]} : vector<22x16xf32> to vector<16x16xf32>
    %c23 = arith.constant 23 : index
    %387 = memref.load %arg4[%c23] : memref<98xf32, #tpu.memory_space<smem>>
    %388 = vector.broadcast %387 : f32 to vector<16x16xf32>
    %389 = arith.mulf %386, %388 : vector<16x16xf32>
    %390 = arith.addf %385, %389 : vector<16x16xf32>
    %391 = vector.extract_strided_slice %368 {offsets = [2, 0], sizes = [16, 16], strides = [1, 1]} : vector<22x16xf32> to vector<16x16xf32>
    %c36 = arith.constant 36 : index
    %392 = memref.load %arg4[%c36] : memref<98xf32, #tpu.memory_space<smem>>
    %393 = vector.broadcast %392 : f32 to vector<16x16xf32>
    %394 = arith.mulf %391, %393 : vector<16x16xf32>
    %395 = arith.addf %390, %394 : vector<16x16xf32>
    %396 = vector.extract_strided_slice %370 {offsets = [2, 0], sizes = [16, 16], strides = [1, 1]} : vector<22x16xf32> to vector<16x16xf32>
    %c37 = arith.constant 37 : index
    %397 = memref.load %arg4[%c37] : memref<98xf32, #tpu.memory_space<smem>>
    %398 = vector.broadcast %397 : f32 to vector<16x16xf32>
    %399 = arith.mulf %396, %398 : vector<16x16xf32>
    %400 = arith.addf %395, %399 : vector<16x16xf32>
    %401 = vector.extract_strided_slice %368 {offsets = [3, 0], sizes = [16, 16], strides = [1, 1]} : vector<22x16xf32> to vector<16x16xf32>
    %c50 = arith.constant 50 : index
    %402 = memref.load %arg4[%c50] : memref<98xf32, #tpu.memory_space<smem>>
    %403 = vector.broadcast %402 : f32 to vector<16x16xf32>
    %404 = arith.mulf %401, %403 : vector<16x16xf32>
    %405 = arith.addf %400, %404 : vector<16x16xf32>
    %406 = vector.extract_strided_slice %370 {offsets = [3, 0], sizes = [16, 16], strides = [1, 1]} : vector<22x16xf32> to vector<16x16xf32>
    %c51 = arith.constant 51 : index
    %407 = memref.load %arg4[%c51] : memref<98xf32, #tpu.memory_space<smem>>
    %408 = vector.broadcast %407 : f32 to vector<16x16xf32>
    %409 = arith.mulf %406, %408 : vector<16x16xf32>
    %410 = arith.addf %405, %409 : vector<16x16xf32>
    %411 = vector.extract_strided_slice %368 {offsets = [4, 0], sizes = [16, 16], strides = [1, 1]} : vector<22x16xf32> to vector<16x16xf32>
    %c64 = arith.constant 64 : index
    %412 = memref.load %arg4[%c64] : memref<98xf32, #tpu.memory_space<smem>>
    %413 = vector.broadcast %412 : f32 to vector<16x16xf32>
    %414 = arith.mulf %411, %413 : vector<16x16xf32>
    %415 = arith.addf %410, %414 : vector<16x16xf32>
    %416 = vector.extract_strided_slice %370 {offsets = [4, 0], sizes = [16, 16], strides = [1, 1]} : vector<22x16xf32> to vector<16x16xf32>
    %c65 = arith.constant 65 : index
    %417 = memref.load %arg4[%c65] : memref<98xf32, #tpu.memory_space<smem>>
    %418 = vector.broadcast %417 : f32 to vector<16x16xf32>
    %419 = arith.mulf %416, %418 : vector<16x16xf32>
    %420 = arith.addf %415, %419 : vector<16x16xf32>
    %421 = vector.extract_strided_slice %368 {offsets = [5, 0], sizes = [16, 16], strides = [1, 1]} : vector<22x16xf32> to vector<16x16xf32>
    %c78 = arith.constant 78 : index
    %422 = memref.load %arg4[%c78] : memref<98xf32, #tpu.memory_space<smem>>
    %423 = vector.broadcast %422 : f32 to vector<16x16xf32>
    %424 = arith.mulf %421, %423 : vector<16x16xf32>
    %425 = arith.addf %420, %424 : vector<16x16xf32>
    %426 = vector.extract_strided_slice %370 {offsets = [5, 0], sizes = [16, 16], strides = [1, 1]} : vector<22x16xf32> to vector<16x16xf32>
    %c79 = arith.constant 79 : index
    %427 = memref.load %arg4[%c79] : memref<98xf32, #tpu.memory_space<smem>>
    %428 = vector.broadcast %427 : f32 to vector<16x16xf32>
    %429 = arith.mulf %426, %428 : vector<16x16xf32>
    %430 = arith.addf %425, %429 : vector<16x16xf32>
    %431 = vector.extract_strided_slice %368 {offsets = [6, 0], sizes = [16, 16], strides = [1, 1]} : vector<22x16xf32> to vector<16x16xf32>
    %c92 = arith.constant 92 : index
    %432 = memref.load %arg4[%c92] : memref<98xf32, #tpu.memory_space<smem>>
    %433 = vector.broadcast %432 : f32 to vector<16x16xf32>
    %434 = arith.mulf %431, %433 : vector<16x16xf32>
    %435 = arith.addf %430, %434 : vector<16x16xf32>
    %436 = vector.extract_strided_slice %370 {offsets = [6, 0], sizes = [16, 16], strides = [1, 1]} : vector<22x16xf32> to vector<16x16xf32>
    %c93 = arith.constant 93 : index
    %437 = memref.load %arg4[%c93] : memref<98xf32, #tpu.memory_space<smem>>
    %438 = vector.broadcast %437 : f32 to vector<16x16xf32>
    %439 = arith.mulf %436, %438 : vector<16x16xf32>
    %440 = arith.addf %435, %439 : vector<16x16xf32>
    %c0_84 = arith.constant 0 : index
    %c0_85 = arith.constant 0 : index
    %c5_86 = arith.constant 5 : index
    %441 = vector.load %arg7[%c0_84, %c0_85, %c5_86] : memref<2x22x128xf32, #tpu.memory_space<vmem>>, vector<1x22x16xf32>
    %442 = vector.shape_cast %441 : vector<1x22x16xf32> to vector<22x16xf32>
    %c1_87 = arith.constant 1 : index
    %c0_88 = arith.constant 0 : index
    %c5_89 = arith.constant 5 : index
    %443 = vector.load %arg7[%c1_87, %c0_88, %c5_89] : memref<2x22x128xf32, #tpu.memory_space<vmem>>, vector<1x22x16xf32>
    %444 = vector.shape_cast %443 : vector<1x22x16xf32> to vector<22x16xf32>
    %445 = vector.extract_strided_slice %442 {offsets = [0, 0], sizes = [16, 16], strides = [1, 1]} : vector<22x16xf32> to vector<16x16xf32>
    %c10 = arith.constant 10 : index
    %446 = memref.load %arg4[%c10] : memref<98xf32, #tpu.memory_space<smem>>
    %447 = vector.broadcast %446 : f32 to vector<16x16xf32>
    %448 = arith.mulf %445, %447 : vector<16x16xf32>
    %449 = arith.addf %440, %448 : vector<16x16xf32>
    %450 = vector.extract_strided_slice %444 {offsets = [0, 0], sizes = [16, 16], strides = [1, 1]} : vector<22x16xf32> to vector<16x16xf32>
    %c11 = arith.constant 11 : index
    %451 = memref.load %arg4[%c11] : memref<98xf32, #tpu.memory_space<smem>>
    %452 = vector.broadcast %451 : f32 to vector<16x16xf32>
    %453 = arith.mulf %450, %452 : vector<16x16xf32>
    %454 = arith.addf %449, %453 : vector<16x16xf32>
    %455 = vector.extract_strided_slice %442 {offsets = [1, 0], sizes = [16, 16], strides = [1, 1]} : vector<22x16xf32> to vector<16x16xf32>
    %c24 = arith.constant 24 : index
    %456 = memref.load %arg4[%c24] : memref<98xf32, #tpu.memory_space<smem>>
    %457 = vector.broadcast %456 : f32 to vector<16x16xf32>
    %458 = arith.mulf %455, %457 : vector<16x16xf32>
    %459 = arith.addf %454, %458 : vector<16x16xf32>
    %460 = vector.extract_strided_slice %444 {offsets = [1, 0], sizes = [16, 16], strides = [1, 1]} : vector<22x16xf32> to vector<16x16xf32>
    %c25 = arith.constant 25 : index
    %461 = memref.load %arg4[%c25] : memref<98xf32, #tpu.memory_space<smem>>
    %462 = vector.broadcast %461 : f32 to vector<16x16xf32>
    %463 = arith.mulf %460, %462 : vector<16x16xf32>
    %464 = arith.addf %459, %463 : vector<16x16xf32>
    %465 = vector.extract_strided_slice %442 {offsets = [2, 0], sizes = [16, 16], strides = [1, 1]} : vector<22x16xf32> to vector<16x16xf32>
    %c38 = arith.constant 38 : index
    %466 = memref.load %arg4[%c38] : memref<98xf32, #tpu.memory_space<smem>>
    %467 = vector.broadcast %466 : f32 to vector<16x16xf32>
    %468 = arith.mulf %465, %467 : vector<16x16xf32>
    %469 = arith.addf %464, %468 : vector<16x16xf32>
    %470 = vector.extract_strided_slice %444 {offsets = [2, 0], sizes = [16, 16], strides = [1, 1]} : vector<22x16xf32> to vector<16x16xf32>
    %c39 = arith.constant 39 : index
    %471 = memref.load %arg4[%c39] : memref<98xf32, #tpu.memory_space<smem>>
    %472 = vector.broadcast %471 : f32 to vector<16x16xf32>
    %473 = arith.mulf %470, %472 : vector<16x16xf32>
    %474 = arith.addf %469, %473 : vector<16x16xf32>
    %475 = vector.extract_strided_slice %442 {offsets = [3, 0], sizes = [16, 16], strides = [1, 1]} : vector<22x16xf32> to vector<16x16xf32>
    %c52 = arith.constant 52 : index
    %476 = memref.load %arg4[%c52] : memref<98xf32, #tpu.memory_space<smem>>
    %477 = vector.broadcast %476 : f32 to vector<16x16xf32>
    %478 = arith.mulf %475, %477 : vector<16x16xf32>
    %479 = arith.addf %474, %478 : vector<16x16xf32>
    %480 = vector.extract_strided_slice %444 {offsets = [3, 0], sizes = [16, 16], strides = [1, 1]} : vector<22x16xf32> to vector<16x16xf32>
    %c53 = arith.constant 53 : index
    %481 = memref.load %arg4[%c53] : memref<98xf32, #tpu.memory_space<smem>>
    %482 = vector.broadcast %481 : f32 to vector<16x16xf32>
    %483 = arith.mulf %480, %482 : vector<16x16xf32>
    %484 = arith.addf %479, %483 : vector<16x16xf32>
    %485 = vector.extract_strided_slice %442 {offsets = [4, 0], sizes = [16, 16], strides = [1, 1]} : vector<22x16xf32> to vector<16x16xf32>
    %c66 = arith.constant 66 : index
    %486 = memref.load %arg4[%c66] : memref<98xf32, #tpu.memory_space<smem>>
    %487 = vector.broadcast %486 : f32 to vector<16x16xf32>
    %488 = arith.mulf %485, %487 : vector<16x16xf32>
    %489 = arith.addf %484, %488 : vector<16x16xf32>
    %490 = vector.extract_strided_slice %444 {offsets = [4, 0], sizes = [16, 16], strides = [1, 1]} : vector<22x16xf32> to vector<16x16xf32>
    %c67 = arith.constant 67 : index
    %491 = memref.load %arg4[%c67] : memref<98xf32, #tpu.memory_space<smem>>
    %492 = vector.broadcast %491 : f32 to vector<16x16xf32>
    %493 = arith.mulf %490, %492 : vector<16x16xf32>
    %494 = arith.addf %489, %493 : vector<16x16xf32>
    %495 = vector.extract_strided_slice %442 {offsets = [5, 0], sizes = [16, 16], strides = [1, 1]} : vector<22x16xf32> to vector<16x16xf32>
    %c80 = arith.constant 80 : index
    %496 = memref.load %arg4[%c80] : memref<98xf32, #tpu.memory_space<smem>>
    %497 = vector.broadcast %496 : f32 to vector<16x16xf32>
    %498 = arith.mulf %495, %497 : vector<16x16xf32>
    %499 = arith.addf %494, %498 : vector<16x16xf32>
    %500 = vector.extract_strided_slice %444 {offsets = [5, 0], sizes = [16, 16], strides = [1, 1]} : vector<22x16xf32> to vector<16x16xf32>
    %c81 = arith.constant 81 : index
    %501 = memref.load %arg4[%c81] : memref<98xf32, #tpu.memory_space<smem>>
    %502 = vector.broadcast %501 : f32 to vector<16x16xf32>
    %503 = arith.mulf %500, %502 : vector<16x16xf32>
    %504 = arith.addf %499, %503 : vector<16x16xf32>
    %505 = vector.extract_strided_slice %442 {offsets = [6, 0], sizes = [16, 16], strides = [1, 1]} : vector<22x16xf32> to vector<16x16xf32>
    %c94 = arith.constant 94 : index
    %506 = memref.load %arg4[%c94] : memref<98xf32, #tpu.memory_space<smem>>
    %507 = vector.broadcast %506 : f32 to vector<16x16xf32>
    %508 = arith.mulf %505, %507 : vector<16x16xf32>
    %509 = arith.addf %504, %508 : vector<16x16xf32>
    %510 = vector.extract_strided_slice %444 {offsets = [6, 0], sizes = [16, 16], strides = [1, 1]} : vector<22x16xf32> to vector<16x16xf32>
    %c95 = arith.constant 95 : index
    %511 = memref.load %arg4[%c95] : memref<98xf32, #tpu.memory_space<smem>>
    %512 = vector.broadcast %511 : f32 to vector<16x16xf32>
    %513 = arith.mulf %510, %512 : vector<16x16xf32>
    %514 = arith.addf %509, %513 : vector<16x16xf32>
    %c0_90 = arith.constant 0 : index
    %c0_91 = arith.constant 0 : index
    %c6_92 = arith.constant 6 : index
    %515 = vector.load %arg7[%c0_90, %c0_91, %c6_92] : memref<2x22x128xf32, #tpu.memory_space<vmem>>, vector<1x22x16xf32>
    %516 = vector.shape_cast %515 : vector<1x22x16xf32> to vector<22x16xf32>
    %c1_93 = arith.constant 1 : index
    %c0_94 = arith.constant 0 : index
    %c6_95 = arith.constant 6 : index
    %517 = vector.load %arg7[%c1_93, %c0_94, %c6_95] : memref<2x22x128xf32, #tpu.memory_space<vmem>>, vector<1x22x16xf32>
    %518 = vector.shape_cast %517 : vector<1x22x16xf32> to vector<22x16xf32>
    %519 = vector.extract_strided_slice %516 {offsets = [0, 0], sizes = [16, 16], strides = [1, 1]} : vector<22x16xf32> to vector<16x16xf32>
    %c12 = arith.constant 12 : index
    %520 = memref.load %arg4[%c12] : memref<98xf32, #tpu.memory_space<smem>>
    %521 = vector.broadcast %520 : f32 to vector<16x16xf32>
    %522 = arith.mulf %519, %521 : vector<16x16xf32>
    %523 = arith.addf %514, %522 : vector<16x16xf32>
    %524 = vector.extract_strided_slice %518 {offsets = [0, 0], sizes = [16, 16], strides = [1, 1]} : vector<22x16xf32> to vector<16x16xf32>
    %c13 = arith.constant 13 : index
    %525 = memref.load %arg4[%c13] : memref<98xf32, #tpu.memory_space<smem>>
    %526 = vector.broadcast %525 : f32 to vector<16x16xf32>
    %527 = arith.mulf %524, %526 : vector<16x16xf32>
    %528 = arith.addf %523, %527 : vector<16x16xf32>
    %529 = vector.extract_strided_slice %516 {offsets = [1, 0], sizes = [16, 16], strides = [1, 1]} : vector<22x16xf32> to vector<16x16xf32>
    %c26 = arith.constant 26 : index
    %530 = memref.load %arg4[%c26] : memref<98xf32, #tpu.memory_space<smem>>
    %531 = vector.broadcast %530 : f32 to vector<16x16xf32>
    %532 = arith.mulf %529, %531 : vector<16x16xf32>
    %533 = arith.addf %528, %532 : vector<16x16xf32>
    %534 = vector.extract_strided_slice %518 {offsets = [1, 0], sizes = [16, 16], strides = [1, 1]} : vector<22x16xf32> to vector<16x16xf32>
    %c27 = arith.constant 27 : index
    %535 = memref.load %arg4[%c27] : memref<98xf32, #tpu.memory_space<smem>>
    %536 = vector.broadcast %535 : f32 to vector<16x16xf32>
    %537 = arith.mulf %534, %536 : vector<16x16xf32>
    %538 = arith.addf %533, %537 : vector<16x16xf32>
    %539 = vector.extract_strided_slice %516 {offsets = [2, 0], sizes = [16, 16], strides = [1, 1]} : vector<22x16xf32> to vector<16x16xf32>
    %c40 = arith.constant 40 : index
    %540 = memref.load %arg4[%c40] : memref<98xf32, #tpu.memory_space<smem>>
    %541 = vector.broadcast %540 : f32 to vector<16x16xf32>
    %542 = arith.mulf %539, %541 : vector<16x16xf32>
    %543 = arith.addf %538, %542 : vector<16x16xf32>
    %544 = vector.extract_strided_slice %518 {offsets = [2, 0], sizes = [16, 16], strides = [1, 1]} : vector<22x16xf32> to vector<16x16xf32>
    %c41 = arith.constant 41 : index
    %545 = memref.load %arg4[%c41] : memref<98xf32, #tpu.memory_space<smem>>
    %546 = vector.broadcast %545 : f32 to vector<16x16xf32>
    %547 = arith.mulf %544, %546 : vector<16x16xf32>
    %548 = arith.addf %543, %547 : vector<16x16xf32>
    %549 = vector.extract_strided_slice %516 {offsets = [3, 0], sizes = [16, 16], strides = [1, 1]} : vector<22x16xf32> to vector<16x16xf32>
    %c54 = arith.constant 54 : index
    %550 = memref.load %arg4[%c54] : memref<98xf32, #tpu.memory_space<smem>>
    %551 = vector.broadcast %550 : f32 to vector<16x16xf32>
    %552 = arith.mulf %549, %551 : vector<16x16xf32>
    %553 = arith.addf %548, %552 : vector<16x16xf32>
    %554 = vector.extract_strided_slice %518 {offsets = [3, 0], sizes = [16, 16], strides = [1, 1]} : vector<22x16xf32> to vector<16x16xf32>
    %c55 = arith.constant 55 : index
    %555 = memref.load %arg4[%c55] : memref<98xf32, #tpu.memory_space<smem>>
    %556 = vector.broadcast %555 : f32 to vector<16x16xf32>
    %557 = arith.mulf %554, %556 : vector<16x16xf32>
    %558 = arith.addf %553, %557 : vector<16x16xf32>
    %559 = vector.extract_strided_slice %516 {offsets = [4, 0], sizes = [16, 16], strides = [1, 1]} : vector<22x16xf32> to vector<16x16xf32>
    %c68 = arith.constant 68 : index
    %560 = memref.load %arg4[%c68] : memref<98xf32, #tpu.memory_space<smem>>
    %561 = vector.broadcast %560 : f32 to vector<16x16xf32>
    %562 = arith.mulf %559, %561 : vector<16x16xf32>
    %563 = arith.addf %558, %562 : vector<16x16xf32>
    %564 = vector.extract_strided_slice %518 {offsets = [4, 0], sizes = [16, 16], strides = [1, 1]} : vector<22x16xf32> to vector<16x16xf32>
    %c69 = arith.constant 69 : index
    %565 = memref.load %arg4[%c69] : memref<98xf32, #tpu.memory_space<smem>>
    %566 = vector.broadcast %565 : f32 to vector<16x16xf32>
    %567 = arith.mulf %564, %566 : vector<16x16xf32>
    %568 = arith.addf %563, %567 : vector<16x16xf32>
    %569 = vector.extract_strided_slice %516 {offsets = [5, 0], sizes = [16, 16], strides = [1, 1]} : vector<22x16xf32> to vector<16x16xf32>
    %c82 = arith.constant 82 : index
    %570 = memref.load %arg4[%c82] : memref<98xf32, #tpu.memory_space<smem>>
    %571 = vector.broadcast %570 : f32 to vector<16x16xf32>
    %572 = arith.mulf %569, %571 : vector<16x16xf32>
    %573 = arith.addf %568, %572 : vector<16x16xf32>
    %574 = vector.extract_strided_slice %518 {offsets = [5, 0], sizes = [16, 16], strides = [1, 1]} : vector<22x16xf32> to vector<16x16xf32>
    %c83 = arith.constant 83 : index
    %575 = memref.load %arg4[%c83] : memref<98xf32, #tpu.memory_space<smem>>
    %576 = vector.broadcast %575 : f32 to vector<16x16xf32>
    %577 = arith.mulf %574, %576 : vector<16x16xf32>
    %578 = arith.addf %573, %577 : vector<16x16xf32>
    %579 = vector.extract_strided_slice %516 {offsets = [6, 0], sizes = [16, 16], strides = [1, 1]} : vector<22x16xf32> to vector<16x16xf32>
    %c96 = arith.constant 96 : index
    %580 = memref.load %arg4[%c96] : memref<98xf32, #tpu.memory_space<smem>>
    %581 = vector.broadcast %580 : f32 to vector<16x16xf32>
    %582 = arith.mulf %579, %581 : vector<16x16xf32>
    %583 = arith.addf %578, %582 : vector<16x16xf32>
    %584 = vector.extract_strided_slice %518 {offsets = [6, 0], sizes = [16, 16], strides = [1, 1]} : vector<22x16xf32> to vector<16x16xf32>
    %c97 = arith.constant 97 : index
    %585 = memref.load %arg4[%c97] : memref<98xf32, #tpu.memory_space<smem>>
    %586 = vector.broadcast %585 : f32 to vector<16x16xf32>
    %587 = arith.mulf %584, %586 : vector<16x16xf32>
    %588 = arith.addf %583, %587 : vector<16x16xf32>
    %589 = arith.negf %588 : vector<16x16xf32>
    %590 = math.exp %589 : vector<16x16xf32>
    %cst_96 = arith.constant 1.000000e+00 : f32
    %591 = vector.broadcast %cst_96 : f32 to vector<16x16xf32>
    %592 = arith.addf %591, %590 : vector<16x16xf32>
    %593 = arith.divf %591, %592 : vector<16x16xf32>
    %c0_97 = arith.constant 0 : index
    %c0_98 = arith.constant 0 : index
    %c0_99 = arith.constant 0 : index
    %594 = vector.load %arg6[%c0_97, %c0_98, %c0_99] : memref<1x16x16xf32, #tpu.memory_space<vmem>>, vector<1x16x16xf32>
    %595 = vector.shape_cast %594 : vector<1x16x16xf32> to vector<16x16xf32>
    %596 = vector.shape_cast %593 : vector<16x16xf32> to vector<1x16x16xf32>
    tpu.vector_store %arg6[%c0_97, %c0_98, %c0_99], %596 {strides = array<i32>} : memref<1x16x16xf32, #tpu.memory_space<vmem>>, vector<1x16x16xf32>,
    return
  }
  func.func @transform_0(%arg0: i32) -> (i32, i32, i32, i32) {
    %c0_i32 = arith.constant 0 : i32
    %c0_i32_0 = arith.constant 0 : i32
    %c0_i32_1 = arith.constant 0 : i32
    %c0_i32_2 = arith.constant 0 : i32
    return %arg0, %c0_i32, %c0_i32_0, %c0_i32_1 : i32, i32, i32, i32
  }
  func.func @transform_1(%arg0: i32) -> (i32, i32) {
    %c0_i32 = arith.constant 0 : i32
    %c0_i32_0 = arith.constant 0 : i32
    %c0_i32_1 = arith.constant 0 : i32
    return %c0_i32, %c0_i32_0 : i32, i32
  }
  func.func @transform_2(%arg0: i32) -> (i32, i32) {
    %c0_i32 = arith.constant 0 : i32
    %c0_i32_0 = arith.constant 0 : i32
    %c0_i32_1 = arith.constant 0 : i32
    return %c0_i32, %c0_i32_0 : i32, i32
  }
  func.func @transform_3(%arg0: i32) -> i32 {
    %c0_i32 = arith.constant 0 : i32
    %c0_i32_0 = arith.constant 0 : i32
    return %c0_i32 : i32
  }
  func.func @transform_4(%arg0: i32) -> (i32, i32, i32) {
    %c0_i32 = arith.constant 0 : i32
    %c0_i32_0 = arith.constant 0 : i32
    %c0_i32_1 = arith.constant 0 : i32
    return %arg0, %c0_i32, %c0_i32_0 : i32, i32, i32
  }
  func.func @transform_5(%arg0: i32) -> (i32, i32, i32) {
    %c0_i32 = arith.constant 0 : i32
    %c0_i32_0 = arith.constant 0 : i32
    %c0_i32_1 = arith.constant 0 : i32
    return %arg0, %c0_i32, %c0_i32_0 : i32, i32, i32
  }
}

</mosaic_0001>

<llo_original>
// kernel: _lambda_.3
$region0: #{_lambda_.3}
  #allocation0 [shape = 'u32[]', space=smem, size = 0x4, offset = 0x4, fixed_abs, tag = 'smem constant byte address 0x4 - core index']
  #allocation1 [shape = 'u32[144,128]{1,0:T(1,128)}', space=vmem, size = 0x12000, scoped, tag = 'internal scratch']
  %s0 = inlined_call_operand.vmem [shape: f32[2,16,16,128], index: 0, kind: input, shape index: {}]
  %s1 = inlined_call_operand.vmem [shape: f32[2,1,128], index: 1, kind: input, shape index: {}]
  %s2 = inlined_call_operand.vmem [shape: f32[2,16,16,1], index: 2, kind: input, shape index: {}]
  %s3 = inlined_call_operand.vmem [shape: bf16[128,128], index: 3, kind: input, shape index: {}]
  %s4 = inlined_call_operand.vmem [shape: f32[1,128], index: 4, kind: input, shape index: {}]
  %s5 = inlined_call_operand.vmem [shape: bf16[128,128], index: 5, kind: input, shape index: {}]
  %s6 = inlined_call_operand.vmem [shape: f32[1,128], index: 6, kind: input, shape index: {}]
  %s7 = inlined_call_operand.vmem [shape: bf16[128,128], index: 7, kind: input, shape index: {}]
  %s8 = inlined_call_operand.vmem [shape: f32[1,128], index: 8, kind: input, shape index: {}]
  %s9 = inlined_call_operand.hbm [shape: bf16[2,16,16,128], index: 9, kind: output, shape index: {}]
  %s10 = sld [smem:[#allocation0]]
  $region69: #{_lambda_.3} parent=0
    _
  %s12 = ssub.s32 1, %s10
  %s13 = scalar_select 0, %s12, %s10
  $region1: #{_lambda_.3} parent=0
    #allocation2 [shape = 'u8[65536]{0}', space=vmem, size = 0x10000, scoped, tag = 'output window, operand 0']
    #allocation3 [shape = 's32[2]{0}', space=sflag, size = 0x8, scoped, tag = 'scoped memory for _lambda_.3']
    %14 = vsyncpa [#allocation3], 0
    %s15 = scalar_lea.sflag [#allocation3], 1
    %16 = vsyncpa %s15, 0
    loop: start=0, step=1, limit=6
    $region2: #{_lambda_.3} parent=1 // loop_pre_header
      _
    $region3: #{_lambda_.3} parent=1 // loop_header
      %s18 = sphi 0, %s22
      %p19 = scmp.ge.s32.totalorder %s18, 6
      %s25 = sphi 0, %s37
      %s26 = sphi 0, %s33
      %s27 = sphi 0, %s25
      %s28 = sphi 0, %s26
      %s29 = sphi 0, %s27
      %s30 = sphi 0, %s28
      %s42 = sphi 0, %s44
      %s45 = sphi 0, %s42
      %s46 = sphi 0, %s45
      %s62 = sphi 0, %s46
      %s68 = sphi 0, %s70
      %s71 = sphi 0, %s68
      %s72 = sphi 0, %s71
      %s88 = sphi 0, %s72
      %s96 = sphi 0, %s98
      %s99 = sphi 0, %s96
      %s100 = sphi 0, %s99
      %s116 = sphi 0, %s100
      %s120 = sphi 0, %s120
      %s122 = sphi 0, %s120
      %s123 = sphi 0, %s122
      %s137 = sphi 0, %s123
      %s141 = sphi 0, %s141
      %s143 = sphi 0, %s141
      %s144 = sphi 0, %s143
      %s158 = sphi 0, %s144
      %s162 = sphi 0, %s162
      %s164 = sphi 0, %s162
      %s165 = sphi 0, %s164
      %s179 = sphi 0, %s165
      %s183 = sphi 0, %s183
      %s185 = sphi 0, %s183
      %s186 = sphi 0, %s185
      %s200 = sphi 0, %s186
      %s204 = sphi 0, %s204
      %s206 = sphi 0, %s204
      %s207 = sphi 0, %s206
      %s221 = sphi 0, %s207
      %s225 = sphi 0, %s225
      %s227 = sphi 0, %s225
      %s228 = sphi 0, %s227
      %s242 = sphi 0, %s228
      %s250 = sphi 0, %s252
      %s253 = sphi 0, %s250
      %s254 = sphi 0, %s253
      %s270 = sphi 0, %s254
    $region4: #{_lambda_.3} parent=1 // loop_header_branch
      %21 = sbr.rel (%p19) target = $region8
    $region5: #{_lambda_.3} parent=1 // loop_body
      %s23 = ssub.s32 %s18, 1
      %s24 = ssub.s32 %s18, 2
      %s31 = sadd.s32 1, %s26
      %p32 = scmp.ge.s32.totalorder %s31, 2
      %s33 = scalar_select %p32, 0, %s31
      %s34 = sadd.s32 1, %s25
      %s35 = scalar_select %p32, %s34, %s25
      %p36 = scmp.ge.s32.totalorder %s35, 2
      %s37 = scalar_select %p36, 0, %s35
      %s38 = ssub.s32 %s25, %s37
      %s39 = ssub.s32 %s26, %s33
      %s40 = sor.u32 %s38, %s39
      %p41 = scmp.eq.s32.totalorder %s40, 0
      %s43 = sadd.s32 %s42, 1
      %s44 = scalar_select %p41, %s42, %s43
      %p47 = pneg %p41
      %p48 = scmp.eq.s32.totalorder %s18, 3
      %p49 = por %p47, %p48
      %p50 = scmp.ne.s32.totalorder %s42, %s45
      %p51 = scmp.eq.s32.totalorder %s18, 0
      %p52 = por %p50, %p51
      %p53 = scmp.ne.s32.totalorder %s42, %s45
      %p54 = scmp.eq.s32.totalorder %s23, 3
      %p55 = por %p53, %p54
      %p56 = scmp.ne.s32.totalorder %s45, %s46
      %p57 = scmp.eq.s32.totalorder %s23, 0
      %p58 = por %p56, %p57
      %p59 = scmp.ne.s32.totalorder %s45, %s46
      %p60 = scmp.eq.s32.totalorder %s24, 3
      %p61 = por %p59, %p60
      %p63 = scmp.ne.s32.totalorder %s46, %s62
      %p64 = scmp.eq.s32.totalorder %s24, 0
      %p65 = por %p63, %p64
      %s66 = ssub.s32 %s25, %s37
      %p67 = scmp.eq.s32.totalorder %s66, 0
      %s69 = sadd.s32 %s68, 1
      %s70 = scalar_select %p67, %s68, %s69
      %p73 = pneg %p67
      %p74 = scmp.eq.s32.totalorder %s18, 3
      %p75 = por %p73, %p74
      %p76 = scmp.ne.s32.totalorder %s68, %s71
      %p77 = scmp.eq.s32.totalorder %s18, 0
      %p78 = por %p76, %p77
      %p79 = scmp.ne.s32.totalorder %s68, %s71
      %p80 = scmp.eq.s32.totalorder %s23, 3
      %p81 = por %p79, %p80
      %p82 = scmp.ne.s32.totalorder %s71, %s72
      %p83 = scmp.eq.s32.totalorder %s23, 0
      %p84 = por %p82, %p83
      %p85 = scmp.ne.s32.totalorder %s71, %s72
      %p86 = scmp.eq.s32.totalorder %s24, 3
      %p87 = por %p85, %p86
      %p89 = scmp.ne.s32.totalorder %s72, %s88
      %p90 = scmp.eq.s32.totalorder %s24, 0
      %p91 = por %p89, %p90
      %s92 = ssub.s32 %s25, %s37
      %s93 = ssub.s32 %s26, %s33
      %s94 = sor.u32 %s92, %s93
      %p95 = scmp.eq.s32.totalorder %s94, 0
      %s97 = sadd.s32 %s96, 1
      %s98 = scalar_select %p95, %s96, %s97
      %p101 = pneg %p95
      %p102 = scmp.eq.s32.totalorder %s18, 3
      %p103 = por %p101, %p102
      %p104 = scmp.ne.s32.totalorder %s96, %s99
      %p105 = scmp.eq.s32.totalorder %s18, 0
      %p106 = por %p104, %p105
      %p107 = scmp.ne.s32.totalorder %s96, %s99
      %p108 = scmp.eq.s32.totalorder %s23, 3
      %p109 = por %p107, %p108
      %p110 = scmp.ne.s32.totalorder %s99, %s100
      %p111 = scmp.eq.s32.totalorder %s23, 0
      %p112 = por %p110, %p111
      %p113 = scmp.ne.s32.totalorder %s99, %s100
      %p114 = scmp.eq.s32.totalorder %s24, 3
      %p115 = por %p113, %p114
      %p117 = scmp.ne.s32.totalorder %s100, %s116
      %p118 = scmp.eq.s32.totalorder %s24, 0
      %p119 = por %p117, %p118
      %s121 = sadd.s32 %s120, 1
      %p124 = scmp.eq.s32.totalorder %s18, 3
      %p125 = scmp.ne.s32.totalorder %s120, %s122
      %p126 = scmp.eq.s32.totalorder %s18, 0
      %p127 = por %p125, %p126
      %p128 = scmp.ne.s32.totalorder %s120, %s122
      %p129 = scmp.eq.s32.totalorder %s23, 3
      %p130 = por %p128, %p129
      %p131 = scmp.ne.s32.totalorder %s122, %s123
      %p132 = scmp.eq.s32.totalorder %s23, 0
      %p133 = por %p131, %p132
      %p134 = scmp.ne.s32.totalorder %s122, %s123
      %p135 = scmp.eq.s32.totalorder %s24, 3
      %p136 = por %p134, %p135
      %p138 = scmp.ne.s32.totalorder %s123, %s137
      %p139 = scmp.eq.s32.totalorder %s24, 0
      %p140 = por %p138, %p139
      %s142 = sadd.s32 %s141, 1
      %p145 = scmp.eq.s32.totalorder %s18, 3
      %p146 = scmp.ne.s32.totalorder %s141, %s143
      %p147 = scmp.eq.s32.totalorder %s18, 0
      %p148 = por %p146, %p147
      %p149 = scmp.ne.s32.totalorder %s141, %s143
      %p150 = scmp.eq.s32.totalorder %s23, 3
      %p151 = por %p149, %p150
      %p152 = scmp.ne.s32.totalorder %s143, %s144
      %p153 = scmp.eq.s32.totalorder %s23, 0
      %p154 = por %p152, %p153
      %p155 = scmp.ne.s32.totalorder %s143, %s144
      %p156 = scmp.eq.s32.totalorder %s24, 3
      %p157 = por %p155, %p156
      %p159 = scmp.ne.s32.totalorder %s144, %s158
      %p160 = scmp.eq.s32.totalorder %s24, 0
      %p161 = por %p159, %p160
      %s163 = sadd.s32 %s162, 1
      %p166 = scmp.eq.s32.totalorder %s18, 3
      %p167 = scmp.ne.s32.totalorder %s162, %s164
      %p168 = scmp.eq.s32.totalorder %s18, 0
      %p169 = por %p167, %p168
      %p170 = scmp.ne.s32.totalorder %s162, %s164
      %p171 = scmp.eq.s32.totalorder %s23, 3
      %p172 = por %p170, %p171
      %p173 = scmp.ne.s32.totalorder %s164, %s165
      %p174 = scmp.eq.s32.totalorder %s23, 0
      %p175 = por %p173, %p174
      %p176 = scmp.ne.s32.totalorder %s164, %s165
      %p177 = scmp.eq.s32.totalorder %s24, 3
      %p178 = por %p176, %p177
      %p180 = scmp.ne.s32.totalorder %s165, %s179
      %p181 = scmp.eq.s32.totalorder %s24, 0
      %p182 = por %p180, %p181
      %s184 = sadd.s32 %s183, 1
      %p187 = scmp.eq.s32.totalorder %s18, 3
      %p188 = scmp.ne.s32.totalorder %s183, %s185
      %p189 = scmp.eq.s32.totalorder %s18, 0
      %p190 = por %p188, %p189
      %p191 = scmp.ne.s32.totalorder %s183, %s185
      %p192 = scmp.eq.s32.totalorder %s23, 3
      %p193 = por %p191, %p192
      %p194 = scmp.ne.s32.totalorder %s185, %s186
      %p195 = scmp.eq.s32.totalorder %s23, 0
      %p196 = por %p194, %p195
      %p197 = scmp.ne.s32.totalorder %s185, %s186
      %p198 = scmp.eq.s32.totalorder %s24, 3
      %p199 = por %p197, %p198
      %p201 = scmp.ne.s32.totalorder %s186, %s200
      %p202 = scmp.eq.s32.totalorder %s24, 0
      %p203 = por %p201, %p202
      %s205 = sadd.s32 %s204, 1
      %p208 = scmp.eq.s32.totalorder %s18, 3
      %p209 = scmp.ne.s32.totalorder %s204, %s206
      %p210 = scmp.eq.s32.totalorder %s18, 0
      %p211 = por %p209, %p210
      %p212 = scmp.ne.s32.totalorder %s204, %s206
      %p213 = scmp.eq.s32.totalorder %s23, 3
      %p214 = por %p212, %p213
      %p215 = scmp.ne.s32.totalorder %s206, %s207
      %p216 = scmp.eq.s32.totalorder %s23, 0
      %p217 = por %p215, %p216
      %p218 = scmp.ne.s32.totalorder %s206, %s207
      %p219 = scmp.eq.s32.totalorder %s24, 3
      %p220 = por %p218, %p219
      %p222 = scmp.ne.s32.totalorder %s207, %s221
      %p223 = scmp.eq.s32.totalorder %s24, 0
      %p224 = por %p222, %p223
      %s226 = sadd.s32 %s225, 1
      %p229 = scmp.eq.s32.totalorder %s18, 3
      %p230 = scmp.ne.s32.totalorder %s225, %s227
      %p231 = scmp.eq.s32.totalorder %s18, 0
      %p232 = por %p230, %p231
      %p233 = scmp.ne.s32.totalorder %s225, %s227
      %p234 = scmp.eq.s32.totalorder %s23, 3
      %p235 = por %p233, %p234
      %p236 = scmp.ne.s32.totalorder %s227, %s228
      %p237 = scmp.eq.s32.totalorder %s23, 0
      %p238 = por %p236, %p237
      %p239 = scmp.ne.s32.totalorder %s227, %s228
      %p240 = scmp.eq.s32.totalorder %s24, 3
      %p241 = por %p239, %p240
      %p243 = scmp.ne.s32.totalorder %s228, %s242
      %p244 = scmp.eq.s32.totalorder %s24, 0
      %p245 = por %p243, %p244
      %s246 = ssub.s32 %s25, %s37
      %s247 = ssub.s32 %s26, %s33
      %s248 = sor.u32 %s246, %s247
      %p249 = scmp.eq.s32.totalorder %s248, 0
      %s251 = sadd.s32 %s250, 1
      %s252 = scalar_select %p249, %s250, %s251
      %p255 = pneg %p249
      %p256 = scmp.eq.s32.totalorder %s18, 3
      %p257 = por %p255, %p256
      %p258 = scmp.ne.s32.totalorder %s250, %s253
      %p259 = scmp.eq.s32.totalorder %s18, 0
      %p260 = por %p258, %p259
      %p261 = scmp.ne.s32.totalorder %s250, %s253
      %p262 = scmp.eq.s32.totalorder %s23, 3
      %p263 = por %p261, %p262
      %p264 = scmp.ne.s32.totalorder %s253, %s254
      %p265 = scmp.eq.s32.totalorder %s23, 0
      %p266 = por %p264, %p265
      %p267 = scmp.ne.s32.totalorder %s253, %s254
      %p268 = scmp.eq.s32.totalorder %s24, 3
      %p269 = por %p267, %p268
      %p271 = scmp.ne.s32.totalorder %s254, %s270
      %p272 = scmp.eq.s32.totalorder %s24, 0
      %p273 = por %p271, %p272
      %p274 = scmp.le.s32.totalorder 1, %s18
      %p275 = scmp.lt.s32.totalorder %s18, 5
      %p276 = pnand %p274, %p275
      %p277 = pneg %p276
      // Predicated region
      $region9: #{_lambda_.3} parent=5 // pred_check
        _
      $region10: #{_lambda_.3} parent=5 // pred_check_branch
        %279 = sbr.rel (%p276) target = $region12
      $region11: #{_lambda_.3} parent=5 // pred_region
        %s280 = ssub.s32 %s18, 1
        // Predicated region
        $region13: #{_lambda_.3} parent=11 // pred_check
          %p281 = pneg %p133
        $region14: #{_lambda_.3} parent=11 // pred_check_branch
          %283 = sbr.rel (%p281) target = $region16
        $region15: #{_lambda_.3} parent=11 // pred_region
          _
        $region16: #{_lambda_.3} parent=11 // pred_fallthru
          _
        // Predicated region
        $region17: #{_lambda_.3} parent=11 // pred_check
          %p284 = pneg %p154
        $region18: #{_lambda_.3} parent=11 // pred_check_branch
          %286 = sbr.rel (%p284) target = $region20
        $region19: #{_lambda_.3} parent=11 // pred_region
          _
        $region20: #{_lambda_.3} parent=11 // pred_fallthru
          _
        // Predicated region
        $region21: #{_lambda_.3} parent=11 // pred_check
          %p287 = pneg %p175
        $region22: #{_lambda_.3} parent=11 // pred_check_branch
          %289 = sbr.rel (%p287) target = $region24
        $region23: #{_lambda_.3} parent=11 // pred_region
          _
        $region24: #{_lambda_.3} parent=11 // pred_fallthru
          _
        // Predicated region
        $region25: #{_lambda_.3} parent=11 // pred_check
          %p290 = pneg %p196
        $region26: #{_lambda_.3} parent=11 // pred_check_branch
          %292 = sbr.rel (%p290) target = $region28
        $region27: #{_lambda_.3} parent=11 // pred_region
          _
        $region28: #{_lambda_.3} parent=11 // pred_fallthru
          _
        // Predicated region
        $region29: #{_lambda_.3} parent=11 // pred_check
          %p293 = pneg %p217
        $region30: #{_lambda_.3} parent=11 // pred_check_branch
          %295 = sbr.rel (%p293) target = $region32
        $region31: #{_lambda_.3} parent=11 // pred_region
          _
        $region32: #{_lambda_.3} parent=11 // pred_fallthru
          _
        // Predicated region
        $region33: #{_lambda_.3} parent=11 // pred_check
          %p296 = pneg %p238
        $region34: #{_lambda_.3} parent=11 // pred_check_branch
          %298 = sbr.rel (%p296) target = $region36
        $region35: #{_lambda_.3} parent=11 // pred_region
          _
        $region36: #{_lambda_.3} parent=11 // pred_fallthru
          _
      $region12: #{_lambda_.3} parent=5 // pred_fallthru
        _
      %p299 = scmp.lt.s32.totalorder %s18, 4
      // Predicated region
      $region37: #{_lambda_.3} parent=5 // pred_check
        %p300 = pneg %p299
      $region38: #{_lambda_.3} parent=5 // pred_check_branch
        %302 = sbr.rel (%p300) target = $region40
      $region39: #{_lambda_.3} parent=5 // pred_region
        // Predicated region
        $region41: #{_lambda_.3} parent=39 // pred_check
          %p303 = pneg %p52
        $region42: #{_lambda_.3} parent=39 // pred_check_branch
          %305 = sbr.rel (%p303) target = $region44
        $region43: #{_lambda_.3} parent=39 // pred_region
          %s306 = smul.u32 8, %s26
          %p307 = scmp.lt.s32.totalorder %s25, 1
          %s308 = scalar_select %p307, %s25, 1
          %p309 = scmp.lt.s32.totalorder %s306, 15
          %s310 = scalar_select %p309, %s306, 15
          %s311 = smul.addr %s310, 2
          %s312 = smul.addr %s308, 32
          %s313 = sadd.s32 %s311, %s312
          %s314 = smul.addr %s313, 8
          %s315 = scalar_lea.vmem %s0, %s314
          %s316 = smul.u32 8, %s26
        $region44: #{_lambda_.3} parent=39 // pred_fallthru
          _
        // Predicated region
        $region45: #{_lambda_.3} parent=39 // pred_check
          %p317 = pneg %p78
        $region46: #{_lambda_.3} parent=39 // pred_check_branch
          %319 = sbr.rel (%p317) target = $region48
        $region47: #{_lambda_.3} parent=39 // pred_region
          %p320 = scmp.lt.s32.totalorder %s25, 1
          %s321 = scalar_select %p320, %s25, 1
          %s322 = scalar_lea.vmem %s1, %s321
        $region48: #{_lambda_.3} parent=39 // pred_fallthru
          _
        // Predicated region
        $region49: #{_lambda_.3} parent=39 // pred_check
          %p323 = pneg %p106
        $region50: #{_lambda_.3} parent=39 // pred_check_branch
          %325 = sbr.rel (%p323) target = $region52
        $region51: #{_lambda_.3} parent=39 // pred_region
          %s326 = smul.u32 8, %s26
          %p327 = scmp.lt.s32.totalorder %s25, 1
          %s328 = scalar_select %p327, %s25, 1
          %p329 = scmp.lt.s32.totalorder %s326, 15
          %s330 = scalar_select %p329, %s326, 15
          %s331 = smul.addr %s330, 2
          %s332 = smul.addr %s328, 32
          %s333 = sadd.s32 %s331, %s332
          %s334 = smul.addr %s333, 8
          %s335 = scalar_lea.vmem %s2, %s334
          %s336 = smul.u32 8, %s26
        $region52: #{_lambda_.3} parent=39 // pred_fallthru
          _
      $region40: #{_lambda_.3} parent=5 // pred_fallthru
        _
      %p337 = scmp.le.s32.totalorder 1, %s18
      %p338 = scmp.lt.s32.totalorder %s18, 5
      %p339 = pnand %p337, %p338
      %p340 = pneg %p339
      // Predicated region
      $region53: #{_lambda_.3} parent=5 // pred_check
        _
      $region54: #{_lambda_.3} parent=5 // pred_check_branch
        %342 = sbr.rel (%p339) target = $region56
      $region55: #{_lambda_.3} parent=5 // pred_region
        %s343 = ssub.s32 %s18, 1
        %s344 = smul.u32 8, %s28
        %p345 = scmp.lt.s32.totalorder %s27, 1
        %s346 = scalar_select %p345, %s27, 1
        %p347 = scmp.lt.s32.totalorder %s344, 15
        %s348 = scalar_select %p347, %s344, 15
        %s349 = smul.addr %s348, 2
        %s350 = smul.addr %s346, 32
        %s351 = sadd.s32 %s349, %s350
        %s352 = smul.addr %s351, 8
        %s353 = scalar_lea.vmem %s0, %s352
        %p354 = pneg %p58
        %p355 = pneg %p55
        %p356 = scmp.lt.s32.totalorder %s27, 1
        %s357 = scalar_select %p356, %s27, 1
        %s358 = scalar_lea.vmem %s1, %s357
        %p359 = pneg %p84
        %p360 = pneg %p81
        %s361 = smul.u32 8, %s28
        %p362 = scmp.lt.s32.totalorder %s27, 1
        %s363 = scalar_select %p362, %s27, 1
        %p364 = scmp.lt.s32.totalorder %s361, 15
        %s365 = scalar_select %p364, %s361, 15
        %s366 = smul.addr %s365, 2
        %s367 = smul.addr %s363, 32
        %s368 = sadd.s32 %s366, %s367
        %s369 = smul.addr %s368, 8
        %s370 = scalar_lea.vmem %s2, %s369
        %p371 = pneg %p112
        %p372 = pneg %p109
        %p373 = pneg %p133
        %p374 = pneg %p130
        %p375 = pneg %p154
        %p376 = pneg %p151
        %p377 = pneg %p175
        %p378 = pneg %p172
        %p379 = pneg %p196
        %p380 = pneg %p193
        %p381 = pneg %p217
        %p382 = pneg %p214
        %p383 = pneg %p238
        %p384 = pneg %p235
        %p385 = pneg %p266
        %p386 = pneg %p263
        %s387 = sand.u32 %s253, 1
        %s388 = scalar_lea.sflag [#allocation3], %s387
        %s389 = sand.u32 %s253, 1
        %s390 = smul.addr %s389, 64
        %s391 = scalar_lea.vmem [#allocation2], %s390
        %s392 = smul.u32 8, %s28
        %p393 = scmp.lt.s32.totalorder %s27, 1
        %s394 = scalar_select %p393, %s27, 1
        %p395 = scmp.lt.s32.totalorder %s392, 15
        %s396 = scalar_select %p395, %s392, 15
        %s397 = smul.addr %s396, 2
        %s398 = smul.addr %s394, 32
        %s399 = sadd.s32 %s397, %s398
        %s400 = smul.addr %s399, 8
        %s401 = scalar_lea.vmem %s0, %s400
        %s402 = smul.u32 8, %s28
        %p403 = scmp.lt.s32.totalorder %s27, 1
        %s404 = scalar_select %p403, %s27, 1
        %s405 = scalar_lea.vmem %s1, %s404
        %s406 = smul.u32 8, %s28
        %p407 = scmp.lt.s32.totalorder %s27, 1
        %s408 = scalar_select %p407, %s27, 1
        %p409 = scmp.lt.s32.totalorder %s406, 15
        %s410 = scalar_select %p409, %s406, 15
        %s411 = smul.addr %s410, 2
        %s412 = smul.addr %s408, 32
        %s413 = sadd.s32 %s411, %s412
        %s414 = smul.addr %s413, 8
        %s415 = scalar_lea.vmem %s2, %s414
        %s416 = smul.u32 8, %s28
        %s417 = smul.u32 8, %s28
        %v419 = vld [vmem:[%s401] sm:$0xff]
        %v420 = vld [vmem:[%s401 + $0x8] sm:$0xff]
        %v421 = vld [vmem:[%s401 + $0x10] sm:$0xff]
        %v422 = vld [vmem:[%s401 + $0x18] sm:$0xff]
        %v423 = vld [vmem:[%s401 + $0x20] sm:$0xff]
        %v424 = vld [vmem:[%s401 + $0x28] sm:$0xff]
        %v425 = vld [vmem:[%s401 + $0x30] sm:$0xff]
        %v426 = vld [vmem:[%s401 + $0x38] sm:$0xff]
        %v427 = vld [vmem:[%s401 + $0x40] sm:$0xff]
        %v428 = vld [vmem:[%s401 + $0x48] sm:$0xff]
        %v429 = vld [vmem:[%s401 + $0x50] sm:$0xff]
        %v430 = vld [vmem:[%s401 + $0x58] sm:$0xff]
        %v431 = vld [vmem:[%s401 + $0x60] sm:$0xff]
        %v432 = vld [vmem:[%s401 + $0x68] sm:$0xff]
        %v433 = vld [vmem:[%s401 + $0x70] sm:$0xff]
        %v434 = vld [vmem:[%s401 + $0x78] sm:$0xff]
        %v435 = vld [vmem:[%s405] sm:$0x1]
        %v437 = vlaneseq
        %v438 = vshrl.u32 %v437, 7
        %v439 = vsub.s32 0, %v438
        %v440 = vrot.slane %v435, %v439
        %v442 = vmul.f32 %v419, %v440
        %v443 = vmul.f32 %v420, %v440
        %v444 = vmul.f32 %v421, %v440
        %v445 = vmul.f32 %v422, %v440
        %v446 = vmul.f32 %v423, %v440
        %v447 = vmul.f32 %v424, %v440
        %v448 = vmul.f32 %v425, %v440
        %v449 = vmul.f32 %v426, %v440
        %v450 = vmul.f32 %v427, %v440
        %v451 = vmul.f32 %v428, %v440
        %v452 = vmul.f32 %v429, %v440
        %v453 = vmul.f32 %v430, %v440
        %v454 = vmul.f32 %v431, %v440
        %v455 = vmul.f32 %v432, %v440
        %v456 = vmul.f32 %v433, %v440
        %v457 = vmul.f32 %v434, %v440
        %v458 = vld [vmem:[%s415] sm:$0xff]
        %v459 = vld [vmem:[%s415 + $0x8] sm:$0xff]
        %v460 = vld [vmem:[%s415 + $0x10] sm:$0xff]
        %v461 = vld [vmem:[%s415 + $0x18] sm:$0xff]
        %v462 = vld [vmem:[%s415 + $0x20] sm:$0xff]
        %v463 = vld [vmem:[%s415 + $0x28] sm:$0xff]
        %v464 = vld [vmem:[%s415 + $0x30] sm:$0xff]
        %v465 = vld [vmem:[%s415 + $0x38] sm:$0xff]
        %v466 = vld [vmem:[%s415 + $0x40] sm:$0xff]
        %v467 = vld [vmem:[%s415 + $0x48] sm:$0xff]
        %v468 = vld [vmem:[%s415 + $0x50] sm:$0xff]
        %v469 = vld [vmem:[%s415 + $0x58] sm:$0xff]
        %v470 = vld [vmem:[%s415 + $0x60] sm:$0xff]
        %v471 = vld [vmem:[%s415 + $0x68] sm:$0xff]
        %v472 = vld [vmem:[%s415 + $0x70] sm:$0xff]
        %v473 = vld [vmem:[%s415 + $0x78] sm:$0xff]
        %475 = vset.pattern.permute.xlu0 0
        %476 = vperm.xlu0 %475, %v458
        %v477 = vpop.permute.xlu0 %476
        %480 = vset.pattern.permute.xlu0 0
        %481 = vperm.xlu0 %480, %v459
        %v482 = vpop.permute.xlu0 %481
        %485 = vset.pattern.permute.xlu0 0
        %486 = vperm.xlu0 %485, %v460
        %v487 = vpop.permute.xlu0 %486
        %490 = vset.pattern.permute.xlu0 0
        %491 = vperm.xlu0 %490, %v461
        %v492 = vpop.permute.xlu0 %491
        %495 = vset.pattern.permute.xlu0 0
        %496 = vperm.xlu0 %495, %v462
        %v497 = vpop.permute.xlu0 %496
        %500 = vset.pattern.permute.xlu0 0
        %501 = vperm.xlu0 %500, %v463
        %v502 = vpop.permute.xlu0 %501
        %505 = vset.pattern.permute.xlu0 0
        %506 = vperm.xlu0 %505, %v464
        %v507 = vpop.permute.xlu0 %506
        %510 = vset.pattern.permute.xlu0 0
        %511 = vperm.xlu0 %510, %v465
        %v512 = vpop.permute.xlu0 %511
        %515 = vset.pattern.permute.xlu0 0
        %516 = vperm.xlu0 %515, %v466
        %v517 = vpop.permute.xlu0 %516
        %520 = vset.pattern.permute.xlu0 0
        %521 = vperm.xlu0 %520, %v467
        %v522 = vpop.permute.xlu0 %521
        %525 = vset.pattern.permute.xlu0 0
        %526 = vperm.xlu0 %525, %v468
        %v527 = vpop.permute.xlu0 %526
        %530 = vset.pattern.permute.xlu0 0
        %531 = vperm.xlu0 %530, %v469
        %v532 = vpop.permute.xlu0 %531
        %535 = vset.pattern.permute.xlu0 0
        %536 = vperm.xlu0 %535, %v470
        %v537 = vpop.permute.xlu0 %536
        %540 = vset.pattern.permute.xlu0 0
        %541 = vperm.xlu0 %540, %v471
        %v542 = vpop.permute.xlu0 %541
        %545 = vset.pattern.permute.xlu0 0
        %546 = vperm.xlu0 %545, %v472
        %v547 = vpop.permute.xlu0 %546
        %550 = vset.pattern.permute.xlu0 0
        %551 = vperm.xlu0 %550, %v473
        %v552 = vpop.permute.xlu0 %551
        %v554 = vmul.f32 %v442, %v477
        %v555 = vmul.f32 %v443, %v482
        %v556 = vmul.f32 %v444, %v487
        %v557 = vmul.f32 %v445, %v492
        %v558 = vmul.f32 %v446, %v497
        %v559 = vmul.f32 %v447, %v502
        %v560 = vmul.f32 %v448, %v507
        %v561 = vmul.f32 %v449, %v512
        %v562 = vmul.f32 %v450, %v517
        %v563 = vmul.f32 %v451, %v522
        %v564 = vmul.f32 %v452, %v527
        %v565 = vmul.f32 %v453, %v532
        %v566 = vmul.f32 %v454, %v537
        %v567 = vmul.f32 %v455, %v542
        %v568 = vmul.f32 %v456, %v547
        %v569 = vmul.f32 %v457, %v552
        %v570 = vpack.c.bf16 %v555, %v554
        %v571 = vpack.c.bf16 %v557, %v556
        %v572 = vpack.c.bf16 %v559, %v558
        %v573 = vpack.c.bf16 %v561, %v560
        %v574 = vpack.c.bf16 %v563, %v562
        %v575 = vpack.c.bf16 %v565, %v564
        %v576 = vpack.c.bf16 %v567, %v566
        %v577 = vpack.c.bf16 %v569, %v568
        %v578 = vld [vmem:[%s3] sm:$0xf]
        %v579 = vld [vmem:[%s3 + $0x4] sm:$0xf]
        %v580 = vld [vmem:[%s3 + $0x8] sm:$0xf]
        %v581 = vld [vmem:[%s3 + $0xc] sm:$0xf]
        %v582 = vld [vmem:[%s3 + $0x10] sm:$0xf]
        %v583 = vld [vmem:[%s3 + $0x14] sm:$0xf]
        %v584 = vld [vmem:[%s3 + $0x18] sm:$0xf]
        %v585 = vld [vmem:[%s3 + $0x1c] sm:$0xf]
        %v586 = vld [vmem:[%s3 + $0x20] sm:$0xf]
        %v587 = vld [vmem:[%s3 + $0x24] sm:$0xf]
        %v588 = vld [vmem:[%s3 + $0x28] sm:$0xf]
        %v589 = vld [vmem:[%s3 + $0x2c] sm:$0xf]
        %v590 = vld [vmem:[%s3 + $0x30] sm:$0xf]
        %v591 = vld [vmem:[%s3 + $0x34] sm:$0xf]
        %v592 = vld [vmem:[%s3 + $0x38] sm:$0xf]
        %v593 = vld [vmem:[%s3 + $0x3c] sm:$0xf]
        %v594 = vld [vmem:[%s4] sm:$0x1]
        %v596 = vlaneseq
        %v597 = vshrl.u32 %v596, 7
        %v598 = vsub.s32 0, %v597
        %v599 = vrot.slane %v594, %v598
        %v617 = vunpack.c.l.b16 %v578
        %v618 = vunpack.c.l.b16 %v579
        %v619 = vunpack.c.l.b16 %v580
        %v620 = vunpack.c.l.b16 %v581
        %v621 = vunpack.c.l.b16 %v582
        %v622 = vunpack.c.l.b16 %v583
        %v623 = vunpack.c.l.b16 %v584
        %v624 = vunpack.c.l.b16 %v585
        %v625 = vunpack.c.l.b16 %v586
        %v626 = vunpack.c.l.b16 %v587
        %v627 = vunpack.c.l.b16 %v588
        %v628 = vunpack.c.l.b16 %v589
        %v629 = vunpack.c.l.b16 %v590
        %v630 = vunpack.c.l.b16 %v591
        %v631 = vunpack.c.l.b16 %v592
        %v632 = vunpack.c.l.b16 %v593
        %v633 = vpack.c.b16 %v618, %v617
        %v634 = vpack.c.b16 %v620, %v619
        %v635 = vpack.c.b16 %v622, %v621
        %v636 = vpack.c.b16 %v624, %v623
        %v637 = vpack.c.b16 %v626, %v625
        %v638 = vpack.c.b16 %v628, %v627
        %v639 = vpack.c.b16 %v630, %v629
        %v640 = vpack.c.b16 %v632, %v631
        %649 = vmatprep.subr.bf16.mxu0 0
        %650 = vmatpush1.bf16.msra.mxu0 %v640
        %651 = vmatprep.subr.bf16.mxu0 0
        %652 = vmatpush1.bf16.msra.mxu0 %v639
        %653 = vmatprep.subr.bf16.mxu0 0
        %654 = vmatpush1.bf16.msra.mxu0 %v638
        %655 = vmatprep.subr.bf16.mxu0 0
        %656 = vmatpush1.bf16.msra.mxu0 %v637
        %657 = vmatprep.subr.bf16.mxu0 0
        %658 = vmatpush1.bf16.msra.mxu0 %v636
        %659 = vmatprep.subr.bf16.mxu0 0
        %660 = vmatpush1.bf16.msra.mxu0 %v635
        %661 = vmatprep.subr.bf16.mxu0 0
        %662 = vmatpush1.bf16.msra.mxu0 %v634
        %663 = vmatprep.subr.bf16.mxu0 0
        %664 = vmatpush1.bf16.msra.mxu0 %v633
        %665 = vmatprep.subr.bf16.mxu0 0
        %666 = vmatpush2.bf16.msra.mxu0 0
        %667 = vmatprep.subr.bf16.mxu0 0
        %668 = vmatpush2.bf16.msra.mxu0 0
        %669 = vmatprep.subr.bf16.mxu0 0
        %670 = vmatpush2.bf16.msra.mxu0 0
        %671 = vmatprep.subr.bf16.mxu0 0
        %672 = vmatpush2.bf16.msra.mxu0 0
        %673 = vmatprep.subr.bf16.mxu0 0
        %674 = vmatpush2.bf16.msra.mxu0 0
        %675 = vmatprep.subr.bf16.mxu0 0
        %676 = vmatpush2.bf16.msra.mxu0 0
        %677 = vmatprep.subr.bf16.mxu0 0
        %678 = vmatpush2.bf16.msra.mxu0 0
        %679 = vmatprep.subr.bf16.mxu0 0
        %680 = vmatpush2.bf16.msra.mxu0 0
        %681 = vmatprep.mubr.bf16.mxu0 0
        %682 = vmatmul.mubr.bf16.gmra.mxu0 %v570
        %v683 = vpop.f32.mrf.mxu0
        %v684 = vadd.f32 %v599, %v683
        %v685 = vpop.f32.mrf.mxu0
        %v686 = vpop.f32.mrf.mxu0
        %v687 = vadd.f32 %v599, %v686
        %v688 = vpop.f32.mrf.mxu0
        %689 = vmatprep.mubr.bf16.mxu0 0
        %690 = vmatmul.mubr.bf16.gmra.mxu0 %v571
        %v691 = vpop.f32.mrf.mxu0
        %v692 = vadd.f32 %v599, %v691
        %v693 = vpop.f32.mrf.mxu0
        %v694 = vpop.f32.mrf.mxu0
        %v695 = vadd.f32 %v599, %v694
        %v696 = vpop.f32.mrf.mxu0
        %697 = vmatprep.mubr.bf16.mxu0 0
        %698 = vmatmul.mubr.bf16.gmra.mxu0 %v572
        %v699 = vpop.f32.mrf.mxu0
        %v700 = vadd.f32 %v599, %v699
        %v701 = vpop.f32.mrf.mxu0
        %v702 = vpop.f32.mrf.mxu0
        %v703 = vadd.f32 %v599, %v702
        %v704 = vpop.f32.mrf.mxu0
        %705 = vmatprep.mubr.bf16.mxu0 0
        %706 = vmatmul.mubr.bf16.gmra.mxu0 %v573
        %v707 = vpop.f32.mrf.mxu0
        %v708 = vadd.f32 %v599, %v707
        %v709 = vpop.f32.mrf.mxu0
        %v710 = vpop.f32.mrf.mxu0
        %v711 = vadd.f32 %v599, %v710
        %v712 = vpop.f32.mrf.mxu0
        %713 = vmatprep.mubr.bf16.mxu0 0
        %714 = vmatmul.mubr.bf16.gmra.mxu0 %v574
        %v715 = vpop.f32.mrf.mxu0
        %v716 = vadd.f32 %v599, %v715
        %v717 = vpop.f32.mrf.mxu0
        %v718 = vpop.f32.mrf.mxu0
        %v719 = vadd.f32 %v599, %v718
        %v720 = vpop.f32.mrf.mxu0
        %721 = vmatprep.mubr.bf16.mxu0 0
        %722 = vmatmul.mubr.bf16.gmra.mxu0 %v575
        %v723 = vpop.f32.mrf.mxu0
        %v724 = vadd.f32 %v599, %v723
        %v725 = vpop.f32.mrf.mxu0
        %v726 = vpop.f32.mrf.mxu0
        %v727 = vadd.f32 %v599, %v726
        %v728 = vpop.f32.mrf.mxu0
        %729 = vmatprep.mubr.bf16.mxu0 0
        %730 = vmatmul.mubr.bf16.gmra.mxu0 %v576
        %v731 = vpop.f32.mrf.mxu0
        %v732 = vadd.f32 %v599, %v731
        %v733 = vpop.f32.mrf.mxu0
        %v734 = vpop.f32.mrf.mxu0
        %v735 = vadd.f32 %v599, %v734
        %v736 = vpop.f32.mrf.mxu0
        %737 = vmatprep.mubr.bf16.mxu0 0
        %738 = vmatmul.mubr.bf16.gmra.mxu0 %v577
        %v739 = vpop.f32.mrf.mxu0
        %v740 = vadd.f32 %v599, %v739
        %v741 = vpop.f32.mrf.mxu0
        %v742 = vpop.f32.mrf.mxu0
        %v743 = vadd.f32 %v599, %v742
        %v744 = vpop.f32.mrf.mxu0
        %745 = vdwg.mxu0
        %v746 = vmax.f32 %v684, 0.0
        %v747 = vmax.f32 %v687, 0.0
        %v748 = vmax.f32 %v692, 0.0
        %v749 = vmax.f32 %v695, 0.0
        %v750 = vmax.f32 %v700, 0.0
        %v751 = vmax.f32 %v703, 0.0
        %v752 = vmax.f32 %v708, 0.0
        %v753 = vmax.f32 %v711, 0.0
        %v754 = vmax.f32 %v716, 0.0
        %v755 = vmax.f32 %v719, 0.0
        %v756 = vmax.f32 %v724, 0.0
        %v757 = vmax.f32 %v727, 0.0
        %v758 = vmax.f32 %v732, 0.0
        %v759 = vmax.f32 %v735, 0.0
        %v760 = vmax.f32 %v740, 0.0
        %v761 = vmax.f32 %v743, 0.0
        %v762 = vpack.c.bf16 %v747, %v746
        %v763 = vpack.c.bf16 %v749, %v748
        %v764 = vpack.c.bf16 %v751, %v750
        %v765 = vpack.c.bf16 %v753, %v752
        %v766 = vpack.c.bf16 %v755, %v754
        %v767 = vpack.c.bf16 %v757, %v756
        %v768 = vpack.c.bf16 %v759, %v758
        %v769 = vpack.c.bf16 %v761, %v760
        %v770 = vld [vmem:[%s5] sm:$0xf]
        %v771 = vld [vmem:[%s5 + $0x4] sm:$0xf]
        %v772 = vld [vmem:[%s5 + $0x8] sm:$0xf]
        %v773 = vld [vmem:[%s5 + $0xc] sm:$0xf]
        %v774 = vld [vmem:[%s5 + $0x10] sm:$0xf]
        %v775 = vld [vmem:[%s5 + $0x14] sm:$0xf]
        %v776 = vld [vmem:[%s5 + $0x18] sm:$0xf]
        %v777 = vld [vmem:[%s5 + $0x1c] sm:$0xf]
        %v778 = vld [vmem:[%s5 + $0x20] sm:$0xf]
        %v779 = vld [vmem:[%s5 + $0x24] sm:$0xf]
        %v780 = vld [vmem:[%s5 + $0x28] sm:$0xf]
        %v781 = vld [vmem:[%s5 + $0x2c] sm:$0xf]
        %v782 = vld [vmem:[%s5 + $0x30] sm:$0xf]
        %v783 = vld [vmem:[%s5 + $0x34] sm:$0xf]
        %v784 = vld [vmem:[%s5 + $0x38] sm:$0xf]
        %v785 = vld [vmem:[%s5 + $0x3c] sm:$0xf]
        %v786 = vld [vmem:[%s6] sm:$0x1]
        %v788 = vlaneseq
        %v789 = vshrl.u32 %v788, 7
        %v790 = vsub.s32 0, %v789
        %v791 = vrot.slane %v786, %v790
        %v809 = vunpack.c.l.b16 %v770
        %v810 = vunpack.c.l.b16 %v771
        %v811 = vunpack.c.l.b16 %v772
        %v812 = vunpack.c.l.b16 %v773
        %v813 = vunpack.c.l.b16 %v774
        %v814 = vunpack.c.l.b16 %v775
        %v815 = vunpack.c.l.b16 %v776
        %v816 = vunpack.c.l.b16 %v777
        %v817 = vunpack.c.l.b16 %v778
        %v818 = vunpack.c.l.b16 %v779
        %v819 = vunpack.c.l.b16 %v780
        %v820 = vunpack.c.l.b16 %v781
        %v821 = vunpack.c.l.b16 %v782
        %v822 = vunpack.c.l.b16 %v783
        %v823 = vunpack.c.l.b16 %v784
        %v824 = vunpack.c.l.b16 %v785
        %v825 = vpack.c.b16 %v810, %v809
        %v826 = vpack.c.b16 %v812, %v811
        %v827 = vpack.c.b16 %v814, %v813
        %v828 = vpack.c.b16 %v816, %v815
        %v829 = vpack.c.b16 %v818, %v817
        %v830 = vpack.c.b16 %v820, %v819
        %v831 = vpack.c.b16 %v822, %v821
        %v832 = vpack.c.b16 %v824, %v823
        %841 = vmatprep.subr.bf16.mxu0 0
        %842 = vmatpush1.bf16.msra.mxu0 %v832
        %843 = vmatprep.subr.bf16.mxu0 0
        %844 = vmatpush1.bf16.msra.mxu0 %v831
        %845 = vmatprep.subr.bf16.mxu0 0
        %846 = vmatpush1.bf16.msra.mxu0 %v830
        %847 = vmatprep.subr.bf16.mxu0 0
        %848 = vmatpush1.bf16.msra.mxu0 %v829
        %849 = vmatprep.subr.bf16.mxu0 0
        %850 = vmatpush1.bf16.msra.mxu0 %v828
        %851 = vmatprep.subr.bf16.mxu0 0
        %852 = vmatpush1.bf16.msra.mxu0 %v827
        %853 = vmatprep.subr.bf16.mxu0 0
        %854 = vmatpush1.bf16.msra.mxu0 %v826
        %855 = vmatprep.subr.bf16.mxu0 0
        %856 = vmatpush1.bf16.msra.mxu0 %v825
        %857 = vmatprep.subr.bf16.mxu0 0
        %858 = vmatpush2.bf16.msra.mxu0 0
        %859 = vmatprep.subr.bf16.mxu0 0
        %860 = vmatpush2.bf16.msra.mxu0 0
        %861 = vmatprep.subr.bf16.mxu0 0
        %862 = vmatpush2.bf16.msra.mxu0 0
        %863 = vmatprep.subr.bf16.mxu0 0
        %864 = vmatpush2.bf16.msra.mxu0 0
        %865 = vmatprep.subr.bf16.mxu0 0
        %866 = vmatpush2.bf16.msra.mxu0 0
        %867 = vmatprep.subr.bf16.mxu0 0
        %868 = vmatpush2.bf16.msra.mxu0 0
        %869 = vmatprep.subr.bf16.mxu0 0
        %870 = vmatpush2.bf16.msra.mxu0 0
        %871 = vmatprep.subr.bf16.mxu0 0
        %872 = vmatpush2.bf16.msra.mxu0 0
        %873 = vmatprep.mubr.bf16.mxu0 0
        %874 = vmatmul.mubr.bf16.gmra.mxu0 %v762
        %v875 = vpop.f32.mrf.mxu0
        %v876 = vadd.f32 %v791, %v875
        %v877 = vpop.f32.mrf.mxu0
        %v878 = vpop.f32.mrf.mxu0
        %v879 = vadd.f32 %v791, %v878
        %v880 = vpop.f32.mrf.mxu0
        %881 = vmatprep.mubr.bf16.mxu0 0
        %882 = vmatmul.mubr.bf16.gmra.mxu0 %v763
        %v883 = vpop.f32.mrf.mxu0
        %v884 = vadd.f32 %v791, %v883
        %v885 = vpop.f32.mrf.mxu0
        %v886 = vpop.f32.mrf.mxu0
        %v887 = vadd.f32 %v791, %v886
        %v888 = vpop.f32.mrf.mxu0
        %889 = vmatprep.mubr.bf16.mxu0 0
        %890 = vmatmul.mubr.bf16.gmra.mxu0 %v764
        %v891 = vpop.f32.mrf.mxu0
        %v892 = vadd.f32 %v791, %v891
        %v893 = vpop.f32.mrf.mxu0
        %v894 = vpop.f32.mrf.mxu0
        %v895 = vadd.f32 %v791, %v894
        %v896 = vpop.f32.mrf.mxu0
        %897 = vmatprep.mubr.bf16.mxu0 0
        %898 = vmatmul.mubr.bf16.gmra.mxu0 %v765
        %v899 = vpop.f32.mrf.mxu0
        %v900 = vadd.f32 %v791, %v899
        %v901 = vpop.f32.mrf.mxu0
        %v902 = vpop.f32.mrf.mxu0
        %v903 = vadd.f32 %v791, %v902
        %v904 = vpop.f32.mrf.mxu0
        %905 = vmatprep.mubr.bf16.mxu0 0
        %906 = vmatmul.mubr.bf16.gmra.mxu0 %v766
        %v907 = vpop.f32.mrf.mxu0
        %v908 = vadd.f32 %v791, %v907
        %v909 = vpop.f32.mrf.mxu0
        %v910 = vpop.f32.mrf.mxu0
        %v911 = vadd.f32 %v791, %v910
        %v912 = vpop.f32.mrf.mxu0
        %913 = vmatprep.mubr.bf16.mxu0 0
        %914 = vmatmul.mubr.bf16.gmra.mxu0 %v767
        %v915 = vpop.f32.mrf.mxu0
        %v916 = vadd.f32 %v791, %v915
        %v917 = vpop.f32.mrf.mxu0
        %v918 = vpop.f32.mrf.mxu0
        %v919 = vadd.f32 %v791, %v918
        %v920 = vpop.f32.mrf.mxu0
        %921 = vmatprep.mubr.bf16.mxu0 0
        %922 = vmatmul.mubr.bf16.gmra.mxu0 %v768
        %v923 = vpop.f32.mrf.mxu0
        %v924 = vadd.f32 %v791, %v923
        %v925 = vpop.f32.mrf.mxu0
        %v926 = vpop.f32.mrf.mxu0
        %v927 = vadd.f32 %v791, %v926
        %v928 = vpop.f32.mrf.mxu0
        %929 = vmatprep.mubr.bf16.mxu0 0
        %930 = vmatmul.mubr.bf16.gmra.mxu0 %v769
        %v931 = vpop.f32.mrf.mxu0
        %v932 = vadd.f32 %v791, %v931
        %v933 = vpop.f32.mrf.mxu0
        %v934 = vpop.f32.mrf.mxu0
        %v935 = vadd.f32 %v791, %v934
        %v936 = vpop.f32.mrf.mxu0
        %937 = vdwg.mxu0
        %v938 = vmax.f32 %v876, 0.0
        %v939 = vmax.f32 %v879, 0.0
        %v940 = vmax.f32 %v884, 0.0
        %v941 = vmax.f32 %v887, 0.0
        %v942 = vmax.f32 %v892, 0.0
        %v943 = vmax.f32 %v895, 0.0
        %v944 = vmax.f32 %v900, 0.0
        %v945 = vmax.f32 %v903, 0.0
        %v946 = vmax.f32 %v908, 0.0
        %v947 = vmax.f32 %v911, 0.0
        %v948 = vmax.f32 %v916, 0.0
        %v949 = vmax.f32 %v919, 0.0
        %v950 = vmax.f32 %v924, 0.0
        %v951 = vmax.f32 %v927, 0.0
        %v952 = vmax.f32 %v932, 0.0
        %v953 = vmax.f32 %v935, 0.0
        %v954 = vpack.c.bf16 %v939, %v938
        %v955 = vpack.c.bf16 %v941, %v940
        %v956 = vpack.c.bf16 %v943, %v942
        %v957 = vpack.c.bf16 %v945, %v944
        %v958 = vpack.c.bf16 %v947, %v946
        %v959 = vpack.c.bf16 %v949, %v948
        %v960 = vpack.c.bf16 %v951, %v950
        %v961 = vpack.c.bf16 %v953, %v952
        %v962 = vld [vmem:[%s7] sm:$0xf]
        %v963 = vld [vmem:[%s7 + $0x4] sm:$0xf]
        %v964 = vld [vmem:[%s7 + $0x8] sm:$0xf]
        %v965 = vld [vmem:[%s7 + $0xc] sm:$0xf]
        %v966 = vld [vmem:[%s7 + $0x10] sm:$0xf]
        %v967 = vld [vmem:[%s7 + $0x14] sm:$0xf]
        %v968 = vld [vmem:[%s7 + $0x18] sm:$0xf]
        %v969 = vld [vmem:[%s7 + $0x1c] sm:$0xf]
        %v970 = vld [vmem:[%s7 + $0x20] sm:$0xf]
        %v971 = vld [vmem:[%s7 + $0x24] sm:$0xf]
        %v972 = vld [vmem:[%s7 + $0x28] sm:$0xf]
        %v973 = vld [vmem:[%s7 + $0x2c] sm:$0xf]
        %v974 = vld [vmem:[%s7 + $0x30] sm:$0xf]
        %v975 = vld [vmem:[%s7 + $0x34] sm:$0xf]
        %v976 = vld [vmem:[%s7 + $0x38] sm:$0xf]
        %v977 = vld [vmem:[%s7 + $0x3c] sm:$0xf]
        %v978 = vld [vmem:[%s8] sm:$0x1]
        %v980 = vlaneseq
        %v981 = vshrl.u32 %v980, 7
        %v982 = vsub.s32 0, %v981
        %v983 = vrot.slane %v978, %v982
        %v1001 = vunpack.c.l.b16 %v962
        %v1002 = vunpack.c.l.b16 %v963
        %v1003 = vunpack.c.l.b16 %v964
        %v1004 = vunpack.c.l.b16 %v965
        %v1005 = vunpack.c.l.b16 %v966
        %v1006 = vunpack.c.l.b16 %v967
        %v1007 = vunpack.c.l.b16 %v968
        %v1008 = vunpack.c.l.b16 %v969
        %v1009 = vunpack.c.l.b16 %v970
        %v1010 = vunpack.c.l.b16 %v971
        %v1011 = vunpack.c.l.b16 %v972
        %v1012 = vunpack.c.l.b16 %v973
        %v1013 = vunpack.c.l.b16 %v974
        %v1014 = vunpack.c.l.b16 %v975
        %v1015 = vunpack.c.l.b16 %v976
        %v1016 = vunpack.c.l.b16 %v977
        %v1017 = vpack.c.b16 %v1002, %v1001
        %v1018 = vpack.c.b16 %v1004, %v1003
        %v1019 = vpack.c.b16 %v1006, %v1005
        %v1020 = vpack.c.b16 %v1008, %v1007
        %v1021 = vpack.c.b16 %v1010, %v1009
        %v1022 = vpack.c.b16 %v1012, %v1011
        %v1023 = vpack.c.b16 %v1014, %v1013
        %v1024 = vpack.c.b16 %v1016, %v1015
        %1033 = vmatprep.subr.bf16.mxu0 0
        %1034 = vmatpush1.bf16.msra.mxu0 %v1024
        %1035 = vmatprep.subr.bf16.mxu0 0
        %1036 = vmatpush1.bf16.msra.mxu0 %v1023
        %1037 = vmatprep.subr.bf16.mxu0 0
        %1038 = vmatpush1.bf16.msra.mxu0 %v1022
        %1039 = vmatprep.subr.bf16.mxu0 0
        %1040 = vmatpush1.bf16.msra.mxu0 %v1021
        %1041 = vmatprep.subr.bf16.mxu0 0
        %1042 = vmatpush1.bf16.msra.mxu0 %v1020
        %1043 = vmatprep.subr.bf16.mxu0 0
        %1044 = vmatpush1.bf16.msra.mxu0 %v1019
        %1045 = vmatprep.subr.bf16.mxu0 0
        %1046 = vmatpush1.bf16.msra.mxu0 %v1018
        %1047 = vmatprep.subr.bf16.mxu0 0
        %1048 = vmatpush1.bf16.msra.mxu0 %v1017
        %1049 = vmatprep.subr.bf16.mxu0 0
        %1050 = vmatpush2.bf16.msra.mxu0 0
        %1051 = vmatprep.subr.bf16.mxu0 0
        %1052 = vmatpush2.bf16.msra.mxu0 0
        %1053 = vmatprep.subr.bf16.mxu0 0
        %1054 = vmatpush2.bf16.msra.mxu0 0
        %1055 = vmatprep.subr.bf16.mxu0 0
        %1056 = vmatpush2.bf16.msra.mxu0 0
        %1057 = vmatprep.subr.bf16.mxu0 0
        %1058 = vmatpush2.bf16.msra.mxu0 0
        %1059 = vmatprep.subr.bf16.mxu0 0
        %1060 = vmatpush2.bf16.msra.mxu0 0
        %1061 = vmatprep.subr.bf16.mxu0 0
        %1062 = vmatpush2.bf16.msra.mxu0 0
        %1063 = vmatprep.subr.bf16.mxu0 0
        %1064 = vmatpush2.bf16.msra.mxu0 0
        %1065 = vmatprep.mubr.bf16.mxu0 0
        %1066 = vmatmul.mubr.bf16.gmra.mxu0 %v954
        %v1067 = vpop.f32.mrf.mxu0
        %v1068 = vadd.f32 %v983, %v1067
        %v1069 = vpop.f32.mrf.mxu0
        %v1070 = vpop.f32.mrf.mxu0
        %v1071 = vadd.f32 %v983, %v1070
        %v1072 = vpop.f32.mrf.mxu0
        %1073 = vmatprep.mubr.bf16.mxu0 0
        %1074 = vmatmul.mubr.bf16.gmra.mxu0 %v955
        %v1075 = vpop.f32.mrf.mxu0
        %v1076 = vadd.f32 %v983, %v1075
        %v1077 = vpop.f32.mrf.mxu0
        %v1078 = vpop.f32.mrf.mxu0
        %v1079 = vadd.f32 %v983, %v1078
        %v1080 = vpop.f32.mrf.mxu0
        %1081 = vmatprep.mubr.bf16.mxu0 0
        %1082 = vmatmul.mubr.bf16.gmra.mxu0 %v956
        %v1083 = vpop.f32.mrf.mxu0
        %v1084 = vadd.f32 %v983, %v1083
        %v1085 = vpop.f32.mrf.mxu0
        %v1086 = vpop.f32.mrf.mxu0
        %v1087 = vadd.f32 %v983, %v1086
        %v1088 = vpop.f32.mrf.mxu0
        %1089 = vmatprep.mubr.bf16.mxu0 0
        %1090 = vmatmul.mubr.bf16.gmra.mxu0 %v957
        %v1091 = vpop.f32.mrf.mxu0
        %v1092 = vadd.f32 %v983, %v1091
        %v1093 = vpop.f32.mrf.mxu0
        %v1094 = vpop.f32.mrf.mxu0
        %v1095 = vadd.f32 %v983, %v1094
        %v1096 = vpop.f32.mrf.mxu0
        %1097 = vmatprep.mubr.bf16.mxu0 0
        %1098 = vmatmul.mubr.bf16.gmra.mxu0 %v958
        %v1099 = vpop.f32.mrf.mxu0
        %v1100 = vadd.f32 %v983, %v1099
        %v1101 = vpop.f32.mrf.mxu0
        %v1102 = vpop.f32.mrf.mxu0
        %v1103 = vadd.f32 %v983, %v1102
        %v1104 = vpop.f32.mrf.mxu0
        %1105 = vmatprep.mubr.bf16.mxu0 0
        %1106 = vmatmul.mubr.bf16.gmra.mxu0 %v959
        %v1107 = vpop.f32.mrf.mxu0
        %v1108 = vadd.f32 %v983, %v1107
        %v1109 = vpop.f32.mrf.mxu0
        %v1110 = vpop.f32.mrf.mxu0
        %v1111 = vadd.f32 %v983, %v1110
        %v1112 = vpop.f32.mrf.mxu0
        %1113 = vmatprep.mubr.bf16.mxu0 0
        %1114 = vmatmul.mubr.bf16.gmra.mxu0 %v960
        %v1115 = vpop.f32.mrf.mxu0
        %v1116 = vadd.f32 %v983, %v1115
        %v1117 = vpop.f32.mrf.mxu0
        %v1118 = vpop.f32.mrf.mxu0
        %v1119 = vadd.f32 %v983, %v1118
        %v1120 = vpop.f32.mrf.mxu0
        %1121 = vmatprep.mubr.bf16.mxu0 0
        %1122 = vmatmul.mubr.bf16.gmra.mxu0 %v961
        %v1123 = vpop.f32.mrf.mxu0
        %v1124 = vadd.f32 %v983, %v1123
        %v1125 = vpop.f32.mrf.mxu0
        %v1126 = vpop.f32.mrf.mxu0
        %v1127 = vadd.f32 %v983, %v1126
        %v1128 = vpop.f32.mrf.mxu0
        %1129 = vdwg.mxu0
        %v1130 = vpack.c.bf16 %v1071, %v1068
        %v1131 = vpack.c.bf16 %v1079, %v1076
        %v1132 = vpack.c.bf16 %v1087, %v1084
        %v1133 = vpack.c.bf16 %v1095, %v1092
        %v1134 = vpack.c.bf16 %v1103, %v1100
        %v1135 = vpack.c.bf16 %v1111, %v1108
        %v1136 = vpack.c.bf16 %v1119, %v1116
        %v1137 = vpack.c.bf16 %v1127, %v1124
        %v1146 = vunpack.c.l.b16 %v1130
        %v1147 = vunpack.c.h.b16 %v1130
        %v1148 = vunpack.c.l.b16 %v1131
        %v1149 = vunpack.c.h.b16 %v1131
        %v1150 = vunpack.c.l.b16 %v1132
        %v1151 = vunpack.c.h.b16 %v1132
        %v1152 = vunpack.c.l.b16 %v1133
        %v1153 = vunpack.c.h.b16 %v1133
        %v1154 = vunpack.c.l.b16 %v1134
        %v1155 = vunpack.c.h.b16 %v1134
        %v1156 = vunpack.c.l.b16 %v1135
        %v1157 = vunpack.c.h.b16 %v1135
        %v1158 = vunpack.c.l.b16 %v1136
        %v1159 = vunpack.c.h.b16 %v1136
        %v1160 = vunpack.c.l.b16 %v1137
        %v1161 = vunpack.c.h.b16 %v1137
        %v1162 = vpack.c.b16 %v1146, %v1146
        %v1163 = vpack.c.b16 %v1147, %v1147
        %v1164 = vpack.c.b16 %v1148, %v1148
        %v1165 = vpack.c.b16 %v1149, %v1149
        %v1166 = vpack.c.b16 %v1150, %v1150
        %v1167 = vpack.c.b16 %v1151, %v1151
        %v1168 = vpack.c.b16 %v1152, %v1152
        %v1169 = vpack.c.b16 %v1153, %v1153
        %v1170 = vpack.c.b16 %v1154, %v1154
        %v1171 = vpack.c.b16 %v1155, %v1155
        %v1172 = vpack.c.b16 %v1156, %v1156
        %v1173 = vpack.c.b16 %v1157, %v1157
        %v1174 = vpack.c.b16 %v1158, %v1158
        %v1175 = vpack.c.b16 %v1159, %v1159
        %v1176 = vpack.c.b16 %v1160, %v1160
        %v1177 = vpack.c.b16 %v1161, %v1161
        %1194 = vst [vmem:[%s391] sm:$0xf] %v1162
        %1195 = vst [vmem:[%s391 + $0x4] sm:$0xf] %v1163
        %1196 = vst [vmem:[%s391 + $0x8] sm:$0xf] %v1164
        %1197 = vst [vmem:[%s391 + $0xc] sm:$0xf] %v1165
        %1198 = vst [vmem:[%s391 + $0x10] sm:$0xf] %v1166
        %1199 = vst [vmem:[%s391 + $0x14] sm:$0xf] %v1167
        %1200 = vst [vmem:[%s391 + $0x18] sm:$0xf] %v1168
        %1201 = vst [vmem:[%s391 + $0x1c] sm:$0xf] %v1169
        %1202 = vst [vmem:[%s391 + $0x20] sm:$0xf] %v1170
        %1203 = vst [vmem:[%s391 + $0x24] sm:$0xf] %v1171
        %1204 = vst [vmem:[%s391 + $0x28] sm:$0xf] %v1172
        %1205 = vst [vmem:[%s391 + $0x2c] sm:$0xf] %v1173
        %1206 = vst [vmem:[%s391 + $0x30] sm:$0xf] %v1174
        %1207 = vst [vmem:[%s391 + $0x34] sm:$0xf] %v1175
        %1208 = vst [vmem:[%s391 + $0x38] sm:$0xf] %v1176
        %1209 = vst [vmem:[%s391 + $0x3c] sm:$0xf] %v1177
        %s1210 = sand.u32 %s253, 1
        %s1211 = scalar_lea.sflag [#allocation3], %s1210
        %s1212 = sand.u32 %s253, 1
        %s1213 = smul.addr %s1212, 64
        %s1214 = scalar_lea.vmem [#allocation2], %s1213
        // Predicated region
        $region57: #{_lambda_.3} parent=55 // pred_check
          %p1215 = pneg %p263
        $region58: #{_lambda_.3} parent=55 // pred_check_branch
          %1217 = sbr.rel (%p1215) target = $region60
        $region59: #{_lambda_.3} parent=55 // pred_region
          %s1218 = smul.u32 8, %s28
          %s1220 = ssub.s32 1024, 1024
          %1221 = vsyncadd %s1211, %s1220
          %s1222 = smul.addr %s1218, 2
          %s1223 = smul.addr %s27, 32
          %s1224 = sadd.s32 %s1222, %s1223
          %s1225 = smul.addr %s1224, 64
          %s1226 = scalar_lea.hbm %s9, %s1225
          %s1227 = sshll.u32 %s1214, 4
          %s1228 = int_to_ptr.vmem [resolvable:$true] %s1227
          %1233 = dma.vmem_to_hbm [thread:$0]  %s1228, 1024, %s1226, %s1211, 64, 64, 4
        $region60: #{_lambda_.3} parent=55 // pred_fallthru
          _
      $region56: #{_lambda_.3} parent=5 // pred_fallthru
        _
      %p1234 = scmp.le.s32.totalorder 2, %s18
      // Predicated region
      $region61: #{_lambda_.3} parent=5 // pred_check
        %p1235 = pneg %p1234
      $region62: #{_lambda_.3} parent=5 // pred_check_branch
        %1237 = sbr.rel (%p1235) target = $region64
      $region63: #{_lambda_.3} parent=5 // pred_region
        %s1238 = ssub.s32 %s18, 2
        // Predicated region
        $region65: #{_lambda_.3} parent=63 // pred_check
          %p1239 = pneg %p269
        $region66: #{_lambda_.3} parent=63 // pred_check_branch
          %1241 = sbr.rel (%p1239) target = $region68
        $region67: #{_lambda_.3} parent=63 // pred_region
          %s1242 = sand.u32 %s254, 1
          %s1243 = scalar_lea.sflag [#allocation3], %s1242
          %s1244 = sand.u32 %s254, 1
          %s1245 = smul.addr %s1244, 64
          %s1246 = scalar_lea.vmem [#allocation2], %s1245
          %1247 = dma.done %s1243, 1024
        $region68: #{_lambda_.3} parent=63 // pred_fallthru
          _
      $region64: #{_lambda_.3} parent=5 // pred_fallthru
        _
    $region6: #{_lambda_.3} parent=1 // loop_footer
      %s22 = sadd.s32 1, %s18
    $region7: #{_lambda_.3} parent=1 // loop_footer_branch
      %17 = sbr.rel target = $region3
    $region8: #{_lambda_.3} parent=1 // loop_exit
      _
    %1248 = vsyncpa [#allocation3], 1
    %s1249 = scalar_lea.sflag [#allocation3], 1
    %1250 = vsyncpa %s1249, 1

// kernel: _lambda_.2
$region0: #{_lambda_.2}
  #allocation0 [shape = 'u32[]', space=smem, size = 0x4, offset = 0x4, fixed_abs, tag = 'smem constant byte address 0x4 - core index']
  #allocation1 [shape = 'u32[144,128]{1,0:T(1,128)}', space=vmem, size = 0x12000, scoped, tag = 'internal scratch']
  #allocation2 [shape = 'f32[2,22,128]{2,1,0:T(8,128)}', space=vmem, size = 0x6000, scoped, tag = 'scratch operand']
  %s0 = inlined_call_operand.hbm [shape: f32[2,16,16,128], index: 0, kind: input, shape index: {}]
  %s1 = inlined_call_operand.vmem [shape: bf16[128,16], index: 1, kind: input, shape index: {}]
  %s2 = inlined_call_operand.vmem [shape: bf16[16,128], index: 2, kind: input, shape index: {}]
  %s3 = inlined_call_operand.vmem [shape: f32[98], index: 3, kind: input, shape index: {}]
  %s4 = inlined_call_operand.vmem [shape: f32[2,1,128], index: 4, kind: output, shape index: {0}]
  %s5 = inlined_call_operand.vmem [shape: f32[2,16,16], index: 5, kind: output, shape index: {1}]
  %6 = xla_tuple %s4, %s5
  %s7 = sld [smem:[#allocation0]]
  $region65: #{_lambda_.2} parent=0
    _
  %s9 = ssub.s32 1, %s7
  %s10 = scalar_select 0, %s9, %s7
  $region1: #{_lambda_.2} parent=0
    #allocation3 [shape = 'u8[262144]{0}', space=vmem, size = 0x40000, scoped, tag = 'input window, operand 0']
    #allocation4 [shape = 's32[2]{0}', space=sflag, size = 0x8, scoped, tag = 'scoped memory for _lambda_.2']
    #allocation5 [shape = 's32[2]{0}', space=sflag, size = 0x8, scoped, tag = 'scoped memory for _lambda_.2']
    #allocation6 [shape = 'u8[512]{0}', space=smem, size = 0x200, scoped, tag = 'input window, operand 3, single buffered']
    %11 = vsyncpa [#allocation4], 0
    %s12 = scalar_lea.sflag [#allocation4], 1
    %13 = vsyncpa %s12, 0
    %14 = vsyncpa [#allocation5], 0
    loop: start=0, step=1, limit=4
    $region2: #{_lambda_.2} parent=1 // loop_pre_header
      _
    $region3: #{_lambda_.2} parent=1 // loop_header
      %s16 = sphi 0, %s20
      %p17 = scmp.ge.s32.totalorder %s16, 4
      %s26 = sphi 0, %s28
      %s29 = sphi 0, %s26
      %s30 = sphi 0, %s29
      %s46 = sphi 0, %s30
      %s50 = sphi 0, %s50
      %s52 = sphi 0, %s50
      %s53 = sphi 0, %s52
      %s67 = sphi 0, %s53
      %s71 = sphi 0, %s71
      %s73 = sphi 0, %s71
      %s74 = sphi 0, %s73
      %s88 = sphi 0, %s74
      %s92 = sphi 0, %s92
      %s94 = sphi 0, %s92
      %s95 = sphi 0, %s94
      %s109 = sphi 0, %s95
      %s115 = sphi 0, %s117
      %s118 = sphi 0, %s115
      %s119 = sphi 0, %s118
      %s135 = sphi 0, %s119
      %s141 = sphi 0, %s143
      %s144 = sphi 0, %s141
      %s145 = sphi 0, %s144
      %s161 = sphi 0, %s145
    $region4: #{_lambda_.2} parent=1 // loop_header_branch
      %19 = sbr.rel (%p17) target = $region8
    $region5: #{_lambda_.2} parent=1 // loop_body
      %s21 = ssub.s32 %s16, 1
      %s22 = ssub.s32 %s16, 2
      %s23 = sadd.s32 %s16, 1
      %s24 = ssub.s32 %s16, %s23
      %p25 = scmp.eq.s32.totalorder %s24, 0
      %s27 = sadd.s32 %s26, 1
      %s28 = scalar_select %p25, %s26, %s27
      %p31 = pneg %p25
      %p32 = scmp.eq.s32.totalorder %s16, 1
      %p33 = por %p31, %p32
      %p34 = scmp.ne.s32.totalorder %s26, %s29
      %p35 = scmp.eq.s32.totalorder %s16, 0
      %p36 = por %p34, %p35
      %p37 = scmp.ne.s32.totalorder %s26, %s29
      %p38 = scmp.eq.s32.totalorder %s21, 1
      %p39 = por %p37, %p38
      %p40 = scmp.ne.s32.totalorder %s29, %s30
      %p41 = scmp.eq.s32.totalorder %s21, 0
      %p42 = por %p40, %p41
      %p43 = scmp.ne.s32.totalorder %s29, %s30
      %p44 = scmp.eq.s32.totalorder %s22, 1
      %p45 = por %p43, %p44
      %p47 = scmp.ne.s32.totalorder %s30, %s46
      %p48 = scmp.eq.s32.totalorder %s22, 0
      %p49 = por %p47, %p48
      %s51 = sadd.s32 %s50, 1
      %p54 = scmp.eq.s32.totalorder %s16, 1
      %p55 = scmp.ne.s32.totalorder %s50, %s52
      %p56 = scmp.eq.s32.totalorder %s16, 0
      %p57 = por %p55, %p56
      %p58 = scmp.ne.s32.totalorder %s50, %s52
      %p59 = scmp.eq.s32.totalorder %s21, 1
      %p60 = por %p58, %p59
      %p61 = scmp.ne.s32.totalorder %s52, %s53
      %p62 = scmp.eq.s32.totalorder %s21, 0
      %p63 = por %p61, %p62
      %p64 = scmp.ne.s32.totalorder %s52, %s53
      %p65 = scmp.eq.s32.totalorder %s22, 1
      %p66 = por %p64, %p65
      %p68 = scmp.ne.s32.totalorder %s53, %s67
      %p69 = scmp.eq.s32.totalorder %s22, 0
      %p70 = por %p68, %p69
      %s72 = sadd.s32 %s71, 1
      %p75 = scmp.eq.s32.totalorder %s16, 1
      %p76 = scmp.ne.s32.totalorder %s71, %s73
      %p77 = scmp.eq.s32.totalorder %s16, 0
      %p78 = por %p76, %p77
      %p79 = scmp.ne.s32.totalorder %s71, %s73
      %p80 = scmp.eq.s32.totalorder %s21, 1
      %p81 = por %p79, %p80
      %p82 = scmp.ne.s32.totalorder %s73, %s74
      %p83 = scmp.eq.s32.totalorder %s21, 0
      %p84 = por %p82, %p83
      %p85 = scmp.ne.s32.totalorder %s73, %s74
      %p86 = scmp.eq.s32.totalorder %s22, 1
      %p87 = por %p85, %p86
      %p89 = scmp.ne.s32.totalorder %s74, %s88
      %p90 = scmp.eq.s32.totalorder %s22, 0
      %p91 = por %p89, %p90
      %s93 = sadd.s32 %s92, 1
      %p96 = scmp.eq.s32.totalorder %s16, 1
      %p97 = scmp.ne.s32.totalorder %s92, %s94
      %p98 = scmp.eq.s32.totalorder %s16, 0
      %p99 = por %p97, %p98
      %p100 = scmp.ne.s32.totalorder %s92, %s94
      %p101 = scmp.eq.s32.totalorder %s21, 1
      %p102 = por %p100, %p101
      %p103 = scmp.ne.s32.totalorder %s94, %s95
      %p104 = scmp.eq.s32.totalorder %s21, 0
      %p105 = por %p103, %p104
      %p106 = scmp.ne.s32.totalorder %s94, %s95
      %p107 = scmp.eq.s32.totalorder %s22, 1
      %p108 = por %p106, %p107
      %p110 = scmp.ne.s32.totalorder %s95, %s109
      %p111 = scmp.eq.s32.totalorder %s22, 0
      %p112 = por %p110, %p111
      %s113 = ssub.s32 %s16, %s23
      %p114 = scmp.eq.s32.totalorder %s113, 0
      %s116 = sadd.s32 %s115, 1
      %s117 = scalar_select %p114, %s115, %s116
      %p120 = pneg %p114
      %p121 = scmp.eq.s32.totalorder %s16, 1
      %p122 = por %p120, %p121
      %p123 = scmp.ne.s32.totalorder %s115, %s118
      %p124 = scmp.eq.s32.totalorder %s16, 0
      %p125 = por %p123, %p124
      %p126 = scmp.ne.s32.totalorder %s115, %s118
      %p127 = scmp.eq.s32.totalorder %s21, 1
      %p128 = por %p126, %p127
      %p129 = scmp.ne.s32.totalorder %s118, %s119
      %p130 = scmp.eq.s32.totalorder %s21, 0
      %p131 = por %p129, %p130
      %p132 = scmp.ne.s32.totalorder %s118, %s119
      %p133 = scmp.eq.s32.totalorder %s22, 1
      %p134 = por %p132, %p133
      %p136 = scmp.ne.s32.totalorder %s119, %s135
      %p137 = scmp.eq.s32.totalorder %s22, 0
      %p138 = por %p136, %p137
      %s139 = ssub.s32 %s16, %s23
      %p140 = scmp.eq.s32.totalorder %s139, 0
      %s142 = sadd.s32 %s141, 1
      %s143 = scalar_select %p140, %s141, %s142
      %p146 = pneg %p140
      %p147 = scmp.eq.s32.totalorder %s16, 1
      %p148 = por %p146, %p147
      %p149 = scmp.ne.s32.totalorder %s141, %s144
      %p150 = scmp.eq.s32.totalorder %s16, 0
      %p151 = por %p149, %p150
      %p152 = scmp.ne.s32.totalorder %s141, %s144
      %p153 = scmp.eq.s32.totalorder %s21, 1
      %p154 = por %p152, %p153
      %p155 = scmp.ne.s32.totalorder %s144, %s145
      %p156 = scmp.eq.s32.totalorder %s21, 0
      %p157 = por %p155, %p156
      %p158 = scmp.ne.s32.totalorder %s144, %s145
      %p159 = scmp.eq.s32.totalorder %s22, 1
      %p160 = por %p158, %p159
      %p162 = scmp.ne.s32.totalorder %s145, %s161
      %p163 = scmp.eq.s32.totalorder %s22, 0
      %p164 = por %p162, %p163
      %p165 = scmp.le.s32.totalorder 1, %s16
      %p166 = scmp.lt.s32.totalorder %s16, 3
      %p167 = pnand %p165, %p166
      %p168 = pneg %p167
      // Predicated region
      $region9: #{_lambda_.2} parent=5 // pred_check
        _
      $region10: #{_lambda_.2} parent=5 // pred_check_branch
        %170 = sbr.rel (%p167) target = $region12
      $region11: #{_lambda_.2} parent=5 // pred_region
        %s171 = ssub.s32 %s16, 1
        // Predicated region
        $region13: #{_lambda_.2} parent=11 // pred_check
          %p172 = pneg %p63
        $region14: #{_lambda_.2} parent=11 // pred_check_branch
          %174 = sbr.rel (%p172) target = $region16
        $region15: #{_lambda_.2} parent=11 // pred_region
          _
        $region16: #{_lambda_.2} parent=11 // pred_fallthru
          _
        // Predicated region
        $region17: #{_lambda_.2} parent=11 // pred_check
          %p175 = pneg %p84
        $region18: #{_lambda_.2} parent=11 // pred_check_branch
          %177 = sbr.rel (%p175) target = $region20
        $region19: #{_lambda_.2} parent=11 // pred_region
          _
        $region20: #{_lambda_.2} parent=11 // pred_fallthru
          _
        // Predicated region
        $region21: #{_lambda_.2} parent=11 // pred_check
          %p178 = pneg %p105
        $region22: #{_lambda_.2} parent=11 // pred_check_branch
          %180 = sbr.rel (%p178) target = $region24
        $region23: #{_lambda_.2} parent=11 // pred_region
          %s182 = ssub.s32 16, 16
          %183 = vsyncadd [#allocation5], %s182
          %s185 = sshll.u32 %s3, 4
          %s186 = int_to_ptr.vmem [resolvable:$true] %s185
          %188 = dma.vmem_to_smem %s186, 16, [#allocation6], [#allocation5]
        $region24: #{_lambda_.2} parent=11 // pred_fallthru
          _
      $region12: #{_lambda_.2} parent=5 // pred_fallthru
        _
      %p189 = scmp.lt.s32.totalorder %s16, 2
      // Predicated region
      $region25: #{_lambda_.2} parent=5 // pred_check
        %p190 = pneg %p189
      $region26: #{_lambda_.2} parent=5 // pred_check_branch
        %192 = sbr.rel (%p190) target = $region28
      $region27: #{_lambda_.2} parent=5 // pred_region
        // Predicated region
        $region29: #{_lambda_.2} parent=27 // pred_check
          %p193 = pneg %p36
        $region30: #{_lambda_.2} parent=27 // pred_check_branch
          %195 = sbr.rel (%p193) target = $region32
        $region31: #{_lambda_.2} parent=27 // pred_region
          %s196 = sand.u32 %s26, 1
          %s197 = scalar_lea.sflag [#allocation4], %s196
          %s198 = sand.u32 %s26, 1
          %s199 = smul.addr %s198, 256
          %s200 = scalar_lea.vmem [#allocation3], %s199
          %s202 = ssub.s32 4096, 4096
          %203 = vsyncadd %s197, %s202
          %s204 = smul.addr %s16, 32
          %s205 = smul.addr %s204, 128
          %s206 = scalar_lea.hbm %s0, %s205
          %s207 = sshll.u32 %s200, 4
          %s208 = int_to_ptr.vmem [resolvable:$true] %s207
          %213 = dma.hbm_to_vmem [thread:$0]  %s206, 4096, %s208, %s197, 128, 128, 8
        $region32: #{_lambda_.2} parent=27 // pred_fallthru
          _
      $region28: #{_lambda_.2} parent=5 // pred_fallthru
        _
      %p214 = scmp.le.s32.totalorder 1, %s16
      %p215 = scmp.lt.s32.totalorder %s16, 3
      %p216 = pnand %p214, %p215
      %p217 = pneg %p216
      // Predicated region
      $region33: #{_lambda_.2} parent=5 // pred_check
        _
      $region34: #{_lambda_.2} parent=5 // pred_check_branch
        %219 = sbr.rel (%p216) target = $region36
      $region35: #{_lambda_.2} parent=5 // pred_region
        %s220 = ssub.s32 %s16, 1
        %s221 = sand.u32 %s29, 1
        %s222 = scalar_lea.sflag [#allocation4], %s221
        %s223 = sand.u32 %s29, 1
        %s224 = smul.addr %s223, 256
        %s225 = scalar_lea.vmem [#allocation3], %s224
        // Predicated region
        $region37: #{_lambda_.2} parent=35 // pred_check
          %p226 = pneg %p42
        $region38: #{_lambda_.2} parent=35 // pred_check_branch
          %228 = sbr.rel (%p226) target = $region40
        $region39: #{_lambda_.2} parent=35 // pred_region
          %229 = dma.done %s222, 4096
        $region40: #{_lambda_.2} parent=35 // pred_fallthru
          _
        // Predicated region
        $region41: #{_lambda_.2} parent=35 // pred_check
          %p230 = pneg %p105
        $region42: #{_lambda_.2} parent=35 // pred_check_branch
          %232 = sbr.rel (%p230) target = $region44
        $region43: #{_lambda_.2} parent=35 // pred_region
          %233 = dma.done [#allocation5], 16
        $region44: #{_lambda_.2} parent=35 // pred_fallthru
          _
        %234 = sfence
        %s235 = sand.u32 %s29, 1
        %s236 = scalar_lea.sflag [#allocation4], %s235
        %s237 = sand.u32 %s29, 1
        %s238 = smul.addr %s237, 256
        %s239 = scalar_lea.vmem [#allocation3], %s238
        %p240 = pneg %p42
        %p241 = pneg %p39
        %p242 = pneg %p63
        %p243 = pneg %p60
        %p244 = pneg %p84
        %p245 = pneg %p81
        %p246 = pneg %p105
        %p247 = pneg %p102
        %p248 = pneg %p131
        %p249 = pneg %p128
        %p250 = scmp.lt.s32.totalorder %s21, 1
        %s251 = scalar_select %p250, %s21, 1
        %s252 = scalar_lea.vmem %s4, %s251
        %p253 = pneg %p157
        %p254 = pneg %p154
        %p255 = scmp.lt.s32.totalorder %s21, 1
        %s256 = scalar_select %p255, %s21, 1
        %s257 = smul.addr %s256, 2
        %s258 = smul.addr %s257, 8
        %s259 = scalar_lea.vmem %s5, %s258
        %p260 = scmp.lt.s32.totalorder %s21, 1
        %s261 = scalar_select %p260, %s21, 1
        %s262 = scalar_lea.vmem %s4, %s261
        %p263 = scmp.lt.s32.totalorder %s21, 1
        %s264 = scalar_select %p263, %s21, 1
        %s265 = smul.addr %s264, 2
        %s266 = smul.addr %s265, 8
        %s267 = scalar_lea.vmem %s5, %s266
        %v269 = vld [vmem:[%s225] sm:$0xff]
        %v270 = vld [vmem:[%s225 + $0x8] sm:$0xff]
        %v271 = vld [vmem:[%s225 + $0x10] sm:$0xff]
        %v272 = vld [vmem:[%s225 + $0x18] sm:$0xff]
        %v273 = vld [vmem:[%s225 + $0x20] sm:$0xff]
        %v274 = vld [vmem:[%s225 + $0x28] sm:$0xff]
        %v275 = vld [vmem:[%s225 + $0x30] sm:$0xff]
        %v276 = vld [vmem:[%s225 + $0x38] sm:$0xff]
        %v277 = vld [vmem:[%s225 + $0x40] sm:$0xff]
        %v278 = vld [vmem:[%s225 + $0x48] sm:$0xff]
        %v279 = vld [vmem:[%s225 + $0x50] sm:$0xff]
        %v280 = vld [vmem:[%s225 + $0x58] sm:$0xff]
        %v281 = vld [vmem:[%s225 + $0x60] sm:$0xff]
        %v282 = vld [vmem:[%s225 + $0x68] sm:$0xff]
        %v283 = vld [vmem:[%s225 + $0x70] sm:$0xff]
        %v284 = vld [vmem:[%s225 + $0x78] sm:$0xff]
        %v285 = vld [vmem:[%s225 + $0x80] sm:$0xff]
        %v286 = vld [vmem:[%s225 + $0x88] sm:$0xff]
        %v287 = vld [vmem:[%s225 + $0x90] sm:$0xff]
        %v288 = vld [vmem:[%s225 + $0x98] sm:$0xff]
        %v289 = vld [vmem:[%s225 + $0xa0] sm:$0xff]
        %v290 = vld [vmem:[%s225 + $0xa8] sm:$0xff]
        %v291 = vld [vmem:[%s225 + $0xb0] sm:$0xff]
        %v292 = vld [vmem:[%s225 + $0xb8] sm:$0xff]
        %v293 = vld [vmem:[%s225 + $0xc0] sm:$0xff]
        %v294 = vld [vmem:[%s225 + $0xc8] sm:$0xff]
        %v295 = vld [vmem:[%s225 + $0xd0] sm:$0xff]
        %v296 = vld [vmem:[%s225 + $0xd8] sm:$0xff]
        %v297 = vld [vmem:[%s225 + $0xe0] sm:$0xff]
        %v298 = vld [vmem:[%s225 + $0xe8] sm:$0xff]
        %v299 = vld [vmem:[%s225 + $0xf0] sm:$0xff]
        %v300 = vld [vmem:[%s225 + $0xf8] sm:$0xff]
        %v301 = vmax.f32 %v269, %v273
        %v302 = vmax.f32 %v270, %v274
        %v303 = vmax.f32 %v271, %v275
        %v304 = vmax.f32 %v272, %v276
        %v305 = vmax.f32 %v301, %v277
        %v306 = vmax.f32 %v302, %v278
        %v307 = vmax.f32 %v303, %v279
        %v308 = vmax.f32 %v304, %v280
        %v309 = vmax.f32 %v305, %v281
        %v310 = vmax.f32 %v306, %v282
        %v311 = vmax.f32 %v307, %v283
        %v312 = vmax.f32 %v308, %v284
        %v313 = vmax.f32 %v309, %v285
        %v314 = vmax.f32 %v310, %v286
        %v315 = vmax.f32 %v311, %v287
        %v316 = vmax.f32 %v312, %v288
        %v317 = vmax.f32 %v313, %v289
        %v318 = vmax.f32 %v314, %v290
        %v319 = vmax.f32 %v315, %v291
        %v320 = vmax.f32 %v316, %v292
        %v321 = vmax.f32 %v317, %v293
        %v322 = vmax.f32 %v318, %v294
        %v323 = vmax.f32 %v319, %v295
        %v324 = vmax.f32 %v320, %v296
        %v325 = vmax.f32 %v321, %v297
        %v326 = vmax.f32 %v322, %v298
        %v327 = vmax.f32 %v323, %v299
        %v328 = vmax.f32 %v324, %v300
        %v329 = vmax.f32 %v325, %v326
        %v330 = vmax.f32 %v327, %v328
        %v331 = vmax.f32 %v329, %v330
        %v332 = vrot.slane %v331, 4
        %v333 = vmax.f32 %v331, %v332
        %v334 = vrot.slane %v333, 2
        %v335 = vmax.f32 %v333, %v334
        %v336 = vrot.slane %v335, 1
        %v337 = vmax.f32 %v335, %v336
        %v338 = vadd.f32 %v269, %v270
        %v339 = vadd.f32 %v338, %v271
        %v340 = vadd.f32 %v339, %v272
        %v341 = vadd.f32 %v340, %v273
        %v342 = vadd.f32 %v341, %v274
        %v343 = vadd.f32 %v342, %v275
        %v344 = vadd.f32 %v343, %v276
        %v345 = vadd.f32 %v344, %v277
        %v346 = vadd.f32 %v345, %v278
        %v347 = vadd.f32 %v346, %v279
        %v348 = vadd.f32 %v347, %v280
        %v349 = vadd.f32 %v348, %v281
        %v350 = vadd.f32 %v349, %v282
        %v351 = vadd.f32 %v350, %v283
        %v352 = vadd.f32 %v351, %v284
        %v353 = vadd.f32 %v352, %v285
        %v354 = vadd.f32 %v353, %v286
        %v355 = vadd.f32 %v354, %v287
        %v356 = vadd.f32 %v355, %v288
        %v357 = vadd.f32 %v356, %v289
        %v358 = vadd.f32 %v357, %v290
        %v359 = vadd.f32 %v358, %v291
        %v360 = vadd.f32 %v359, %v292
        %v361 = vadd.f32 %v360, %v293
        %v362 = vadd.f32 %v361, %v294
        %v363 = vadd.f32 %v362, %v295
        %v364 = vadd.f32 %v363, %v296
        %v365 = vadd.f32 %v364, %v297
        %v366 = vadd.f32 %v365, %v298
        %v367 = vadd.f32 %v366, %v299
        %v368 = vadd.f32 %v367, %v300
        %v369 = vrot.slane %v368, 4
        %v370 = vadd.f32 %v368, %v369
        %v371 = vrot.slane %v370, 2
        %v372 = vadd.f32 %v370, %v371
        %v373 = vrot.slane %v372, 1
        %v374 = vadd.f32 %v372, %v373
        %v375 = vmul.f32 %v374, 0.00390625
        %vm376 = vcmask 1040384
        %v377 = vsel %vm376, %v337, %v375
        %v378 = vpack.c.bf16 %v377, %v377
        %v379 = vld [vmem:[%s1] sm:$0xf]
        %v380 = vld [vmem:[%s1 + $0x4] sm:$0xf]
        %v381 = vld [vmem:[%s1 + $0x8] sm:$0xf]
        %v382 = vld [vmem:[%s1 + $0xc] sm:$0xf]
        %v383 = vld [vmem:[%s1 + $0x10] sm:$0xf]
        %v384 = vld [vmem:[%s1 + $0x14] sm:$0xf]
        %v385 = vld [vmem:[%s1 + $0x18] sm:$0xf]
        %v386 = vld [vmem:[%s1 + $0x1c] sm:$0xf]
        %v387 = vld [vmem:[%s1 + $0x20] sm:$0xf]
        %v388 = vld [vmem:[%s1 + $0x24] sm:$0xf]
        %v389 = vld [vmem:[%s1 + $0x28] sm:$0xf]
        %v390 = vld [vmem:[%s1 + $0x2c] sm:$0xf]
        %v391 = vld [vmem:[%s1 + $0x30] sm:$0xf]
        %v392 = vld [vmem:[%s1 + $0x34] sm:$0xf]
        %v393 = vld [vmem:[%s1 + $0x38] sm:$0xf]
        %v394 = vld [vmem:[%s1 + $0x3c] sm:$0xf]
        %v411 = vunpack.c.l.b16 %v379
        %v412 = vunpack.c.l.b16 %v380
        %v413 = vunpack.c.l.b16 %v381
        %v414 = vunpack.c.l.b16 %v382
        %v415 = vunpack.c.l.b16 %v383
        %v416 = vunpack.c.l.b16 %v384
        %v417 = vunpack.c.l.b16 %v385
        %v418 = vunpack.c.l.b16 %v386
        %v419 = vunpack.c.l.b16 %v387
        %v420 = vunpack.c.l.b16 %v388
        %v421 = vunpack.c.l.b16 %v389
        %v422 = vunpack.c.l.b16 %v390
        %v423 = vunpack.c.l.b16 %v391
        %v424 = vunpack.c.l.b16 %v392
        %v425 = vunpack.c.l.b16 %v393
        %v426 = vunpack.c.l.b16 %v394
        %v427 = vpack.c.b16 %v412, %v411
        %v428 = vpack.c.b16 %v414, %v413
        %v429 = vpack.c.b16 %v416, %v415
        %v430 = vpack.c.b16 %v418, %v417
        %v431 = vpack.c.b16 %v420, %v419
        %v432 = vpack.c.b16 %v422, %v421
        %v433 = vpack.c.b16 %v424, %v423
        %v434 = vpack.c.b16 %v426, %v425
        %443 = vmatprep.subr.bf16.mxu0 0
        %444 = vmatpush1.bf16.msra.mxu0 %v434
        %445 = vmatprep.subr.bf16.mxu0 0
        %446 = vmatpush1.bf16.msra.mxu0 %v433
        %447 = vmatprep.subr.bf16.mxu0 0
        %448 = vmatpush1.bf16.msra.mxu0 %v432
        %449 = vmatprep.subr.bf16.mxu0 0
        %450 = vmatpush1.bf16.msra.mxu0 %v431
        %451 = vmatprep.subr.bf16.mxu0 0
        %452 = vmatpush1.bf16.msra.mxu0 %v430
        %453 = vmatprep.subr.bf16.mxu0 0
        %454 = vmatpush1.bf16.msra.mxu0 %v429
        %455 = vmatprep.subr.bf16.mxu0 0
        %456 = vmatpush1.bf16.msra.mxu0 %v428
        %457 = vmatprep.subr.bf16.mxu0 0
        %458 = vmatpush1.bf16.msra.mxu0 %v427
        %459 = vmatprep.subr.bf16.mxu0 0
        %460 = vmatpush2.bf16.msra.mxu0 0
        %461 = vmatprep.subr.bf16.mxu0 0
        %462 = vmatpush2.bf16.msra.mxu0 0
        %463 = vmatprep.subr.bf16.mxu0 0
        %464 = vmatpush2.bf16.msra.mxu0 0
        %465 = vmatprep.subr.bf16.mxu0 0
        %466 = vmatpush2.bf16.msra.mxu0 0
        %467 = vmatprep.subr.bf16.mxu0 0
        %468 = vmatpush2.bf16.msra.mxu0 0
        %469 = vmatprep.subr.bf16.mxu0 0
        %470 = vmatpush2.bf16.msra.mxu0 0
        %471 = vmatprep.subr.bf16.mxu0 0
        %472 = vmatpush2.bf16.msra.mxu0 0
        %473 = vmatprep.subr.bf16.mxu0 0
        %474 = vmatpush2.bf16.msra.mxu0 0
        %475 = vmatprep.mubr.bf16.mxu0 0
        %476 = vmatmul.mubr.bf16.gmra.mxu0 %v378
        %v477 = vpop.f32.mrf.mxu0
        %v478 = vadd.f32 0.0, %v477
        %v479 = vpop.f32.mrf.mxu0
        %v480 = vpop.f32.mrf.mxu0
        %v481 = vpop.f32.mrf.mxu0
        %482 = vdwg.mxu0
        %v483 = vmax.f32 %v478, 0.0
        %v484 = vpack.c.bf16 %v483, %v483
        %v485 = vld [vmem:[%s2] sm:$0xf]
        %v486 = vld [vmem:[%s2 + $0x4] sm:$0xf]
        %v489 = vunpack.c.l.b16 %v485
        %v490 = vunpack.c.l.b16 %v486
        %v491 = vpack.c.b16 %v490, %v489
        %vm493 = vcmask 130048
        %v495 = vsel %vm493, %v484, 0
        %497 = vmatprep.subr.bf16.mxu0 0
        %498 = vmatpush1.bf16.msra.mxu0 0
        %499 = vmatprep.subr.bf16.mxu0 0
        %500 = vmatpush1.bf16.msra.mxu0 0
        %501 = vmatprep.subr.bf16.mxu0 0
        %502 = vmatpush1.bf16.msra.mxu0 0
        %503 = vmatprep.subr.bf16.mxu0 0
        %504 = vmatpush1.bf16.msra.mxu0 0
        %505 = vmatprep.subr.bf16.mxu0 0
        %506 = vmatpush1.bf16.msra.mxu0 0
        %507 = vmatprep.subr.bf16.mxu0 0
        %508 = vmatpush1.bf16.msra.mxu0 0
        %509 = vmatprep.subr.bf16.mxu0 0
        %510 = vmatpush1.bf16.msra.mxu0 0
        %511 = vmatprep.subr.bf16.mxu0 0
        %512 = vmatpush1.bf16.msra.mxu0 %v491
        %513 = vmatprep.subr.bf16.mxu0 0
        %514 = vmatpush2.bf16.msra.mxu0 0
        %515 = vmatprep.subr.bf16.mxu0 0
        %516 = vmatpush2.bf16.msra.mxu0 0
        %517 = vmatprep.subr.bf16.mxu0 0
        %518 = vmatpush2.bf16.msra.mxu0 0
        %519 = vmatprep.subr.bf16.mxu0 0
        %520 = vmatpush2.bf16.msra.mxu0 0
        %521 = vmatprep.subr.bf16.mxu0 0
        %522 = vmatpush2.bf16.msra.mxu0 0
        %523 = vmatprep.subr.bf16.mxu0 0
        %524 = vmatpush2.bf16.msra.mxu0 0
        %525 = vmatprep.subr.bf16.mxu0 0
        %526 = vmatpush2.bf16.msra.mxu0 0
        %527 = vmatprep.subr.bf16.mxu0 0
        %528 = vmatpush2.bf16.msra.mxu0 0
        %529 = vmatprep.mubr.bf16.mxu0 0
        %530 = vmatmul.mubr.bf16.gmra.mxu0 %v495
        %v531 = vpop.f32.mrf.mxu0
        %v532 = vadd.f32 0.0, %v531
        %v533 = vpop.f32.mrf.mxu0
        %v534 = vpop.f32.mrf.mxu0
        %v535 = vpop.f32.mrf.mxu0
        %536 = vdwg.mxu0
        %v538 = vrot.slane %v532, 1
        %v540 = vadd.f32 %v532, %v538
        %v541 = vxor.u32 %v540, 2147483648
        %v542 = vmul.f32 %v541, 1.442695
        %v543 = vpow.pop %v542
        %v544 = vadd.f32 %v543, 1.0
        %v545 = vrcp.pop %v544
        %v546 = vmul.f32 1.0, %v545
        %547 = vst [vmem:[%s262] sm:$0x1] %v546
        %v548 = vlaneseq
        %v549 = vshrl.u32 %v548, 7
        %v550 = vsub.s32 0, %v549
        %v551 = vrot.slane %v546, %v550
        %v552 = vmul.f32 %v269, %v551
        %v553 = vmul.f32 %v270, %v551
        %v554 = vmul.f32 %v271, %v551
        %v555 = vmul.f32 %v272, %v551
        %v556 = vmul.f32 %v273, %v551
        %v557 = vmul.f32 %v274, %v551
        %v558 = vmul.f32 %v275, %v551
        %v559 = vmul.f32 %v276, %v551
        %v560 = vmul.f32 %v277, %v551
        %v561 = vmul.f32 %v278, %v551
        %v562 = vmul.f32 %v279, %v551
        %v563 = vmul.f32 %v280, %v551
        %v564 = vmul.f32 %v281, %v551
        %v565 = vmul.f32 %v282, %v551
        %v566 = vmul.f32 %v283, %v551
        %v567 = vmul.f32 %v284, %v551
        %v568 = vmul.f32 %v285, %v551
        %v569 = vmul.f32 %v286, %v551
        %v570 = vmul.f32 %v287, %v551
        %v571 = vmul.f32 %v288, %v551
        %v572 = vmul.f32 %v289, %v551
        %v573 = vmul.f32 %v290, %v551
        %v574 = vmul.f32 %v291, %v551
        %v575 = vmul.f32 %v292, %v551
        %v576 = vmul.f32 %v293, %v551
        %v577 = vmul.f32 %v294, %v551
        %v578 = vmul.f32 %v295, %v551
        %v579 = vmul.f32 %v296, %v551
        %v580 = vmul.f32 %v297, %v551
        %v581 = vmul.f32 %v298, %v551
        %v582 = vmul.f32 %v299, %v551
        %v583 = vmul.f32 %v300, %v551
        %584 = vmax.xlane.f32.xlu0 %v552
        %v585 = vpop.xlane.xlu0 %584
        %586 = vmax.xlane.f32.xlu0 %v553
        %v587 = vpop.xlane.xlu0 %586
        %588 = vmax.xlane.f32.xlu0 %v554
        %v589 = vpop.xlane.xlu0 %588
        %590 = vmax.xlane.f32.xlu0 %v555
        %v591 = vpop.xlane.xlu0 %590
        %592 = vmax.xlane.f32.xlu0 %v556
        %v593 = vpop.xlane.xlu0 %592
        %594 = vmax.xlane.f32.xlu0 %v557
        %v595 = vpop.xlane.xlu0 %594
        %596 = vmax.xlane.f32.xlu0 %v558
        %v597 = vpop.xlane.xlu0 %596
        %598 = vmax.xlane.f32.xlu0 %v559
        %v599 = vpop.xlane.xlu0 %598
        %600 = vmax.xlane.f32.xlu0 %v560
        %v601 = vpop.xlane.xlu0 %600
        %602 = vmax.xlane.f32.xlu0 %v561
        %v603 = vpop.xlane.xlu0 %602
        %604 = vmax.xlane.f32.xlu0 %v562
        %v605 = vpop.xlane.xlu0 %604
        %606 = vmax.xlane.f32.xlu0 %v563
        %v607 = vpop.xlane.xlu0 %606
        %608 = vmax.xlane.f32.xlu0 %v564
        %v609 = vpop.xlane.xlu0 %608
        %610 = vmax.xlane.f32.xlu0 %v565
        %v611 = vpop.xlane.xlu0 %610
        %612 = vmax.xlane.f32.xlu0 %v566
        %v613 = vpop.xlane.xlu0 %612
        %614 = vmax.xlane.f32.xlu0 %v567
        %v615 = vpop.xlane.xlu0 %614
        %616 = vmax.xlane.f32.xlu0 %v568
        %v617 = vpop.xlane.xlu0 %616
        %618 = vmax.xlane.f32.xlu0 %v569
        %v619 = vpop.xlane.xlu0 %618
        %620 = vmax.xlane.f32.xlu0 %v570
        %v621 = vpop.xlane.xlu0 %620
        %622 = vmax.xlane.f32.xlu0 %v571
        %v623 = vpop.xlane.xlu0 %622
        %624 = vmax.xlane.f32.xlu0 %v572
        %v625 = vpop.xlane.xlu0 %624
        %626 = vmax.xlane.f32.xlu0 %v573
        %v627 = vpop.xlane.xlu0 %626
        %628 = vmax.xlane.f32.xlu0 %v574
        %v629 = vpop.xlane.xlu0 %628
        %630 = vmax.xlane.f32.xlu0 %v575
        %v631 = vpop.xlane.xlu0 %630
        %632 = vmax.xlane.f32.xlu0 %v576
        %v633 = vpop.xlane.xlu0 %632
        %634 = vmax.xlane.f32.xlu0 %v577
        %v635 = vpop.xlane.xlu0 %634
        %636 = vmax.xlane.f32.xlu0 %v578
        %v637 = vpop.xlane.xlu0 %636
        %638 = vmax.xlane.f32.xlu0 %v579
        %v639 = vpop.xlane.xlu0 %638
        %640 = vmax.xlane.f32.xlu0 %v580
        %v641 = vpop.xlane.xlu0 %640
        %642 = vmax.xlane.f32.xlu0 %v581
        %v643 = vpop.xlane.xlu0 %642
        %644 = vmax.xlane.f32.xlu0 %v582
        %v645 = vpop.xlane.xlu0 %644
        %646 = vmax.xlane.f32.xlu0 %v583
        %v647 = vpop.xlane.xlu0 %646
        %648 = vadd.xlane.f32.xlu0 %v552
        %v649 = vpop.xlane.xlu0 %648
        %650 = vadd.xlane.f32.xlu0 %v553
        %v651 = vpop.xlane.xlu0 %650
        %652 = vadd.xlane.f32.xlu0 %v554
        %v653 = vpop.xlane.xlu0 %652
        %654 = vadd.xlane.f32.xlu0 %v555
        %v655 = vpop.xlane.xlu0 %654
        %656 = vadd.xlane.f32.xlu0 %v556
        %v657 = vpop.xlane.xlu0 %656
        %658 = vadd.xlane.f32.xlu0 %v557
        %v659 = vpop.xlane.xlu0 %658
        %660 = vadd.xlane.f32.xlu0 %v558
        %v661 = vpop.xlane.xlu0 %660
        %662 = vadd.xlane.f32.xlu0 %v559
        %v663 = vpop.xlane.xlu0 %662
        %664 = vadd.xlane.f32.xlu0 %v560
        %v665 = vpop.xlane.xlu0 %664
        %666 = vadd.xlane.f32.xlu0 %v561
        %v667 = vpop.xlane.xlu0 %666
        %668 = vadd.xlane.f32.xlu0 %v562
        %v669 = vpop.xlane.xlu0 %668
        %670 = vadd.xlane.f32.xlu0 %v563
        %v671 = vpop.xlane.xlu0 %670
        %672 = vadd.xlane.f32.xlu0 %v564
        %v673 = vpop.xlane.xlu0 %672
        %674 = vadd.xlane.f32.xlu0 %v565
        %v675 = vpop.xlane.xlu0 %674
        %676 = vadd.xlane.f32.xlu0 %v566
        %v677 = vpop.xlane.xlu0 %676
        %678 = vadd.xlane.f32.xlu0 %v567
        %v679 = vpop.xlane.xlu0 %678
        %680 = vadd.xlane.f32.xlu0 %v568
        %v681 = vpop.xlane.xlu0 %680
        %682 = vadd.xlane.f32.xlu0 %v569
        %v683 = vpop.xlane.xlu0 %682
        %684 = vadd.xlane.f32.xlu0 %v570
        %v685 = vpop.xlane.xlu0 %684
        %686 = vadd.xlane.f32.xlu0 %v571
        %v687 = vpop.xlane.xlu0 %686
        %688 = vadd.xlane.f32.xlu0 %v572
        %v689 = vpop.xlane.xlu0 %688
        %690 = vadd.xlane.f32.xlu0 %v573
        %v691 = vpop.xlane.xlu0 %690
        %692 = vadd.xlane.f32.xlu0 %v574
        %v693 = vpop.xlane.xlu0 %692
        %694 = vadd.xlane.f32.xlu0 %v575
        %v695 = vpop.xlane.xlu0 %694
        %696 = vadd.xlane.f32.xlu0 %v576
        %v697 = vpop.xlane.xlu0 %696
        %698 = vadd.xlane.f32.xlu0 %v577
        %v699 = vpop.xlane.xlu0 %698
        %700 = vadd.xlane.f32.xlu0 %v578
        %v701 = vpop.xlane.xlu0 %700
        %702 = vadd.xlane.f32.xlu0 %v579
        %v703 = vpop.xlane.xlu0 %702
        %704 = vadd.xlane.f32.xlu0 %v580
        %v705 = vpop.xlane.xlu0 %704
        %706 = vadd.xlane.f32.xlu0 %v581
        %v707 = vpop.xlane.xlu0 %706
        %708 = vadd.xlane.f32.xlu0 %v582
        %v709 = vpop.xlane.xlu0 %708
        %710 = vadd.xlane.f32.xlu0 %v583
        %v711 = vpop.xlane.xlu0 %710
        %v712 = vrcp.pop 128.0
        %v713 = vmul.f32 %v649, %v712
        %v714 = vmul.f32 %v651, %v712
        %v715 = vmul.f32 %v653, %v712
        %v716 = vmul.f32 %v655, %v712
        %v717 = vmul.f32 %v657, %v712
        %v718 = vmul.f32 %v659, %v712
        %v719 = vmul.f32 %v661, %v712
        %v720 = vmul.f32 %v663, %v712
        %v721 = vmul.f32 %v665, %v712
        %v722 = vmul.f32 %v667, %v712
        %v723 = vmul.f32 %v669, %v712
        %v724 = vmul.f32 %v671, %v712
        %v725 = vmul.f32 %v673, %v712
        %v726 = vmul.f32 %v675, %v712
        %v727 = vmul.f32 %v677, %v712
        %v728 = vmul.f32 %v679, %v712
        %v729 = vmul.f32 %v681, %v712
        %v730 = vmul.f32 %v683, %v712
        %v731 = vmul.f32 %v685, %v712
        %v732 = vmul.f32 %v687, %v712
        %v733 = vmul.f32 %v689, %v712
        %v734 = vmul.f32 %v691, %v712
        %v735 = vmul.f32 %v693, %v712
        %v736 = vmul.f32 %v695, %v712
        %v737 = vmul.f32 %v697, %v712
        %v738 = vmul.f32 %v699, %v712
        %v739 = vmul.f32 %v701, %v712
        %v740 = vmul.f32 %v703, %v712
        %v741 = vmul.f32 %v705, %v712
        %v742 = vmul.f32 %v707, %v712
        %v743 = vmul.f32 %v709, %v712
        %v744 = vmul.f32 %v711, %v712
        %745 = vst [vmem:[#allocation2] sm:$0x7] 0.0
        %746 = vst [vmem:[#allocation2 + $0x13] sm:$0x7] 0.0
        %vm747 = vcmask 23552
        %748 = vst.msk [vmem:[#allocation2 + $0x3] sm:$0xff] %vm747, 0.0
        %749 = vst.msk [vmem:[#allocation2 + $0xb] sm:$0xff] %vm747, 0.0
        %vm750 = vcmask 1047704
        %751 = vst.msk [vmem:[#allocation2 + $0x3] sm:$0xff] %vm750, 0.0
        %752 = vst.msk [vmem:[#allocation2 + $0xb] sm:$0xff] %vm750, 0.0
        %s753 = scalar_lea.vmem [#allocation2], 24
        %754 = vst [vmem:[%s753] sm:$0x7] 0.0
        %755 = vst [vmem:[%s753 + $0x13] sm:$0x7] 0.0
        %756 = vst.msk [vmem:[%s753 + $0x3] sm:$0xff] %vm747, 0.0
        %757 = vst.msk [vmem:[%s753 + $0xb] sm:$0xff] %vm747, 0.0
        %758 = vst.msk [vmem:[%s753 + $0x3] sm:$0xff] %vm750, 0.0
        %759 = vst.msk [vmem:[%s753 + $0xb] sm:$0xff] %vm750, 0.0
        %v792 = vlaneseq
        %v793 = vand.u32 %v792, 127
        %v794 = vadd.s32 %v793, 4294967293
        %v795 = vlaneseq
        %v796 = vshrl.u32 %v795, 7
        %v797 = vsub.s32 %v794, %v796
        %v798 = vrot.slane %v585, %v797
        %v799 = vadd.s32 %v793, 4294967285
        %v800 = vlaneseq
        %v801 = vshrl.u32 %v800, 7
        %v802 = vsub.s32 %v799, %v801
        %v803 = vrot.slane %v587, %v802
        %vm804 = vcmask 154712
        %v805 = vsel %vm804, %v803, %v798
        %v806 = vlaneseq
        %v807 = vshrl.u32 %v806, 7
        %v808 = vsub.s32 %v794, %v807
        %v809 = vrot.slane %v589, %v808
        %v810 = vlaneseq
        %v811 = vshrl.u32 %v810, 7
        %v812 = vsub.s32 %v799, %v811
        %v813 = vrot.slane %v591, %v812
        %v814 = vsel %vm804, %v813, %v809
        %v815 = vlaneseq
        %v816 = vshrl.u32 %v815, 7
        %v817 = vsub.s32 %v794, %v816
        %v818 = vrot.slane %v593, %v817
        %v819 = vlaneseq
        %v820 = vshrl.u32 %v819, 7
        %v821 = vsub.s32 %v799, %v820
        %v822 = vrot.slane %v595, %v821
        %v823 = vsel %vm804, %v822, %v818
        %v824 = vlaneseq
        %v825 = vshrl.u32 %v824, 7
        %v826 = vsub.s32 %v794, %v825
        %v827 = vrot.slane %v597, %v826
        %v828 = vlaneseq
        %v829 = vshrl.u32 %v828, 7
        %v830 = vsub.s32 %v799, %v829
        %v831 = vrot.slane %v599, %v830
        %v832 = vsel %vm804, %v831, %v827
        %v833 = vlaneseq
        %v834 = vshrl.u32 %v833, 7
        %v835 = vsub.s32 %v794, %v834
        %v836 = vrot.slane %v601, %v835
        %v837 = vlaneseq
        %v838 = vshrl.u32 %v837, 7
        %v839 = vsub.s32 %v799, %v838
        %v840 = vrot.slane %v603, %v839
        %v841 = vsel %vm804, %v840, %v836
        %v842 = vlaneseq
        %v843 = vshrl.u32 %v842, 7
        %v844 = vsub.s32 %v794, %v843
        %v845 = vrot.slane %v605, %v844
        %v846 = vlaneseq
        %v847 = vshrl.u32 %v846, 7
        %v848 = vsub.s32 %v799, %v847
        %v849 = vrot.slane %v607, %v848
        %v850 = vsel %vm804, %v849, %v845
        %v851 = vlaneseq
        %v852 = vshrl.u32 %v851, 7
        %v853 = vsub.s32 %v794, %v852
        %v854 = vrot.slane %v609, %v853
        %v855 = vlaneseq
        %v856 = vshrl.u32 %v855, 7
        %v857 = vsub.s32 %v799, %v856
        %v858 = vrot.slane %v611, %v857
        %v859 = vsel %vm804, %v858, %v854
        %v860 = vlaneseq
        %v861 = vshrl.u32 %v860, 7
        %v862 = vsub.s32 %v794, %v861
        %v863 = vrot.slane %v613, %v862
        %v864 = vlaneseq
        %v865 = vshrl.u32 %v864, 7
        %v866 = vsub.s32 %v799, %v865
        %v867 = vrot.slane %v615, %v866
        %v868 = vsel %vm804, %v867, %v863
        %v869 = vlaneseq
        %v870 = vshrl.u32 %v869, 7
        %v871 = vsub.s32 %v794, %v870
        %v872 = vrot.slane %v617, %v871
        %v873 = vlaneseq
        %v874 = vshrl.u32 %v873, 7
        %v875 = vsub.s32 %v799, %v874
        %v876 = vrot.slane %v619, %v875
        %v877 = vsel %vm804, %v876, %v872
        %v878 = vlaneseq
        %v879 = vshrl.u32 %v878, 7
        %v880 = vsub.s32 %v794, %v879
        %v881 = vrot.slane %v621, %v880
        %v882 = vlaneseq
        %v883 = vshrl.u32 %v882, 7
        %v884 = vsub.s32 %v799, %v883
        %v885 = vrot.slane %v623, %v884
        %v886 = vsel %vm804, %v885, %v881
        %v887 = vlaneseq
        %v888 = vshrl.u32 %v887, 7
        %v889 = vsub.s32 %v794, %v888
        %v890 = vrot.slane %v625, %v889
        %v891 = vlaneseq
        %v892 = vshrl.u32 %v891, 7
        %v893 = vsub.s32 %v799, %v892
        %v894 = vrot.slane %v627, %v893
        %v895 = vsel %vm804, %v894, %v890
        %v896 = vlaneseq
        %v897 = vshrl.u32 %v896, 7
        %v898 = vsub.s32 %v794, %v897
        %v899 = vrot.slane %v629, %v898
        %v900 = vlaneseq
        %v901 = vshrl.u32 %v900, 7
        %v902 = vsub.s32 %v799, %v901
        %v903 = vrot.slane %v631, %v902
        %v904 = vsel %vm804, %v903, %v899
        %v905 = vlaneseq
        %v906 = vshrl.u32 %v905, 7
        %v907 = vsub.s32 %v794, %v906
        %v908 = vrot.slane %v633, %v907
        %v909 = vlaneseq
        %v910 = vshrl.u32 %v909, 7
        %v911 = vsub.s32 %v799, %v910
        %v912 = vrot.slane %v635, %v911
        %v913 = vsel %vm804, %v912, %v908
        %v914 = vlaneseq
        %v915 = vshrl.u32 %v914, 7
        %v916 = vsub.s32 %v794, %v915
        %v917 = vrot.slane %v637, %v916
        %v918 = vlaneseq
        %v919 = vshrl.u32 %v918, 7
        %v920 = vsub.s32 %v799, %v919
        %v921 = vrot.slane %v639, %v920
        %v922 = vsel %vm804, %v921, %v917
        %v923 = vlaneseq
        %v924 = vshrl.u32 %v923, 7
        %v925 = vsub.s32 %v794, %v924
        %v926 = vrot.slane %v641, %v925
        %v927 = vlaneseq
        %v928 = vshrl.u32 %v927, 7
        %v929 = vsub.s32 %v799, %v928
        %v930 = vrot.slane %v643, %v929
        %v931 = vsel %vm804, %v930, %v926
        %v932 = vlaneseq
        %v933 = vshrl.u32 %v932, 7
        %v934 = vsub.s32 %v794, %v933
        %v935 = vrot.slane %v645, %v934
        %v936 = vlaneseq
        %v937 = vshrl.u32 %v936, 7
        %v938 = vsub.s32 %v799, %v937
        %v939 = vrot.slane %v647, %v938
        %v940 = vsel %vm804, %v939, %v935
        %vm941 = vcmask 1041409
        %v942 = vsel %vm941, %v814, %v805
        %vm943 = vcmask 1042434
        %v944 = vsel %vm943, %v823, %v942
        %vm945 = vcmask 1043459
        %v946 = vsel %vm945, %v832, %v944
        %vm947 = vcmask 1044484
        %v948 = vsel %vm947, %v841, %v946
        %vm949 = vcmask 1045509
        %v950 = vsel %vm949, %v850, %v948
        %vm951 = vcmask 1046534
        %v952 = vsel %vm951, %v859, %v950
        %vm953 = vcmask 1047559
        %v954 = vsel %vm953, %v868, %v952
        %v955 = vsel %vm941, %v886, %v877
        %v956 = vsel %vm943, %v895, %v955
        %v957 = vsel %vm945, %v904, %v956
        %v958 = vsel %vm947, %v913, %v957
        %v959 = vsel %vm949, %v922, %v958
        %v960 = vsel %vm951, %v931, %v959
        %v961 = vsel %vm953, %v940, %v960
        %vm964 = vcmask 154648
        %965 = vst.msk [vmem:[#allocation2 + $0x3] sm:$0xff] %vm964, %v954
        %966 = vst.msk [vmem:[#allocation2 + $0xb] sm:$0xff] %vm964, %v961
        %v999 = vlaneseq
        %v1000 = vshrl.u32 %v999, 7
        %v1001 = vsub.s32 %v794, %v1000
        %v1002 = vrot.slane %v713, %v1001
        %v1003 = vlaneseq
        %v1004 = vshrl.u32 %v1003, 7
        %v1005 = vsub.s32 %v799, %v1004
        %v1006 = vrot.slane %v714, %v1005
        %v1007 = vsel %vm804, %v1006, %v1002
        %v1008 = vlaneseq
        %v1009 = vshrl.u32 %v1008, 7
        %v1010 = vsub.s32 %v794, %v1009
        %v1011 = vrot.slane %v715, %v1010
        %v1012 = vlaneseq
        %v1013 = vshrl.u32 %v1012, 7
        %v1014 = vsub.s32 %v799, %v1013
        %v1015 = vrot.slane %v716, %v1014
        %v1016 = vsel %vm804, %v1015, %v1011
        %v1017 = vlaneseq
        %v1018 = vshrl.u32 %v1017, 7
        %v1019 = vsub.s32 %v794, %v1018
        %v1020 = vrot.slane %v717, %v1019
        %v1021 = vlaneseq
        %v1022 = vshrl.u32 %v1021, 7
        %v1023 = vsub.s32 %v799, %v1022
        %v1024 = vrot.slane %v718, %v1023
        %v1025 = vsel %vm804, %v1024, %v1020
        %v1026 = vlaneseq
        %v1027 = vshrl.u32 %v1026, 7
        %v1028 = vsub.s32 %v794, %v1027
        %v1029 = vrot.slane %v719, %v1028
        %v1030 = vlaneseq
        %v1031 = vshrl.u32 %v1030, 7
        %v1032 = vsub.s32 %v799, %v1031
        %v1033 = vrot.slane %v720, %v1032
        %v1034 = vsel %vm804, %v1033, %v1029
        %v1035 = vlaneseq
        %v1036 = vshrl.u32 %v1035, 7
        %v1037 = vsub.s32 %v794, %v1036
        %v1038 = vrot.slane %v721, %v1037
        %v1039 = vlaneseq
        %v1040 = vshrl.u32 %v1039, 7
        %v1041 = vsub.s32 %v799, %v1040
        %v1042 = vrot.slane %v722, %v1041
        %v1043 = vsel %vm804, %v1042, %v1038
        %v1044 = vlaneseq
        %v1045 = vshrl.u32 %v1044, 7
        %v1046 = vsub.s32 %v794, %v1045
        %v1047 = vrot.slane %v723, %v1046
        %v1048 = vlaneseq
        %v1049 = vshrl.u32 %v1048, 7
        %v1050 = vsub.s32 %v799, %v1049
        %v1051 = vrot.slane %v724, %v1050
        %v1052 = vsel %vm804, %v1051, %v1047
        %v1053 = vlaneseq
        %v1054 = vshrl.u32 %v1053, 7
        %v1055 = vsub.s32 %v794, %v1054
        %v1056 = vrot.slane %v725, %v1055
        %v1057 = vlaneseq
        %v1058 = vshrl.u32 %v1057, 7
        %v1059 = vsub.s32 %v799, %v1058
        %v1060 = vrot.slane %v726, %v1059
        %v1061 = vsel %vm804, %v1060, %v1056
        %v1062 = vlaneseq
        %v1063 = vshrl.u32 %v1062, 7
        %v1064 = vsub.s32 %v794, %v1063
        %v1065 = vrot.slane %v727, %v1064
        %v1066 = vlaneseq
        %v1067 = vshrl.u32 %v1066, 7
        %v1068 = vsub.s32 %v799, %v1067
        %v1069 = vrot.slane %v728, %v1068
        %v1070 = vsel %vm804, %v1069, %v1065
        %v1071 = vlaneseq
        %v1072 = vshrl.u32 %v1071, 7
        %v1073 = vsub.s32 %v794, %v1072
        %v1074 = vrot.slane %v729, %v1073
        %v1075 = vlaneseq
        %v1076 = vshrl.u32 %v1075, 7
        %v1077 = vsub.s32 %v799, %v1076
        %v1078 = vrot.slane %v730, %v1077
        %v1079 = vsel %vm804, %v1078, %v1074
        %v1080 = vlaneseq
        %v1081 = vshrl.u32 %v1080, 7
        %v1082 = vsub.s32 %v794, %v1081
        %v1083 = vrot.slane %v731, %v1082
        %v1084 = vlaneseq
        %v1085 = vshrl.u32 %v1084, 7
        %v1086 = vsub.s32 %v799, %v1085
        %v1087 = vrot.slane %v732, %v1086
        %v1088 = vsel %vm804, %v1087, %v1083
        %v1089 = vlaneseq
        %v1090 = vshrl.u32 %v1089, 7
        %v1091 = vsub.s32 %v794, %v1090
        %v1092 = vrot.slane %v733, %v1091
        %v1093 = vlaneseq
        %v1094 = vshrl.u32 %v1093, 7
        %v1095 = vsub.s32 %v799, %v1094
        %v1096 = vrot.slane %v734, %v1095
        %v1097 = vsel %vm804, %v1096, %v1092
        %v1098 = vlaneseq
        %v1099 = vshrl.u32 %v1098, 7
        %v1100 = vsub.s32 %v794, %v1099
        %v1101 = vrot.slane %v735, %v1100
        %v1102 = vlaneseq
        %v1103 = vshrl.u32 %v1102, 7
        %v1104 = vsub.s32 %v799, %v1103
        %v1105 = vrot.slane %v736, %v1104
        %v1106 = vsel %vm804, %v1105, %v1101
        %v1107 = vlaneseq
        %v1108 = vshrl.u32 %v1107, 7
        %v1109 = vsub.s32 %v794, %v1108
        %v1110 = vrot.slane %v737, %v1109
        %v1111 = vlaneseq
        %v1112 = vshrl.u32 %v1111, 7
        %v1113 = vsub.s32 %v799, %v1112
        %v1114 = vrot.slane %v738, %v1113
        %v1115 = vsel %vm804, %v1114, %v1110
        %v1116 = vlaneseq
        %v1117 = vshrl.u32 %v1116, 7
        %v1118 = vsub.s32 %v794, %v1117
        %v1119 = vrot.slane %v739, %v1118
        %v1120 = vlaneseq
        %v1121 = vshrl.u32 %v1120, 7
        %v1122 = vsub.s32 %v799, %v1121
        %v1123 = vrot.slane %v740, %v1122
        %v1124 = vsel %vm804, %v1123, %v1119
        %v1125 = vlaneseq
        %v1126 = vshrl.u32 %v1125, 7
        %v1127 = vsub.s32 %v794, %v1126
        %v1128 = vrot.slane %v741, %v1127
        %v1129 = vlaneseq
        %v1130 = vshrl.u32 %v1129, 7
        %v1131 = vsub.s32 %v799, %v1130
        %v1132 = vrot.slane %v742, %v1131
        %v1133 = vsel %vm804, %v1132, %v1128
        %v1134 = vlaneseq
        %v1135 = vshrl.u32 %v1134, 7
        %v1136 = vsub.s32 %v794, %v1135
        %v1137 = vrot.slane %v743, %v1136
        %v1138 = vlaneseq
        %v1139 = vshrl.u32 %v1138, 7
        %v1140 = vsub.s32 %v799, %v1139
        %v1141 = vrot.slane %v744, %v1140
        %v1142 = vsel %vm804, %v1141, %v1137
        %v1143 = vsel %vm941, %v1016, %v1007
        %v1144 = vsel %vm943, %v1025, %v1143
        %v1145 = vsel %vm945, %v1034, %v1144
        %v1146 = vsel %vm947, %v1043, %v1145
        %v1147 = vsel %vm949, %v1052, %v1146
        %v1148 = vsel %vm951, %v1061, %v1147
        %v1149 = vsel %vm953, %v1070, %v1148
        %v1150 = vsel %vm941, %v1088, %v1079
        %v1151 = vsel %vm943, %v1097, %v1150
        %v1152 = vsel %vm945, %v1106, %v1151
        %v1153 = vsel %vm947, %v1115, %v1152
        %v1154 = vsel %vm949, %v1124, %v1153
        %v1155 = vsel %vm951, %v1133, %v1154
        %v1156 = vsel %vm953, %v1142, %v1155
        %1159 = vst.msk [vmem:[%s753 + $0x3] sm:$0xff] %vm964, %v1149
        %1160 = vst.msk [vmem:[%s753 + $0xb] sm:$0xff] %vm964, %v1156
        %v1161 = vld [vmem:[#allocation2] sm:$0xff]
        %v1162 = vld [vmem:[#allocation2 + $0x8] sm:$0xff]
        %v1163 = vld [vmem:[#allocation2 + $0x10] sm:$0x3f]
        %v1164 = vld [vmem:[%s753] sm:$0xff]
        %v1165 = vld [vmem:[%s753 + $0x8] sm:$0xff]
        %v1166 = vld [vmem:[%s753 + $0x10] sm:$0x3f]
        %s1167 = sld [smem:[#allocation6]]
        %v1168 = vstv %s1167
        %v1169 = vmul.f32 %v1161, %v1168
        %v1170 = vmul.f32 %v1162, %v1168
        %v1171 = vadd.f32 %v1169, 0.0
        %v1172 = vadd.f32 %v1170, 0.0
        %s1173 = sld [smem:[#allocation6 + $0x1]]
        %v1174 = vstv %s1173
        %v1175 = vmul.f32 %v1164, %v1174
        %v1176 = vmul.f32 %v1165, %v1174
        %v1177 = vadd.f32 %v1171, %v1175
        %v1178 = vadd.f32 %v1172, %v1176
        %s1179 = sld [smem:[#allocation6 + $0xe]]
        %v1180 = vstv %s1179
        %v1181 = vmul.f32 %v1161, %v1180
        %v1182 = vmul.f32 %v1162, %v1180
        %v1183 = vmul.f32 %v1163, %v1180
        %vm1187 = vcmask 1046528
        %v1188 = vrot.slane %v1181, 1
        %v1189 = vrot.slane %v1182, 1
        %v1190 = vsel %vm1187, %v1188, %v1189
        %v1191 = vrot.slane %v1183, 1
        %v1192 = vsel %vm1187, %v1189, %v1191
        %v1195 = vadd.f32 %v1177, %v1190
        %v1196 = vadd.f32 %v1178, %v1192
        %s1197 = sld [smem:[#allocation6 + $0xf]]
        %v1198 = vstv %s1197
        %v1199 = vmul.f32 %v1164, %v1198
        %v1200 = vmul.f32 %v1165, %v1198
        %v1201 = vmul.f32 %v1166, %v1198
        %v1205 = vrot.slane %v1199, 1
        %v1206 = vrot.slane %v1200, 1
        %v1207 = vsel %vm1187, %v1205, %v1206
        %v1208 = vrot.slane %v1201, 1
        %v1209 = vsel %vm1187, %v1206, %v1208
        %v1212 = vadd.f32 %v1195, %v1207
        %v1213 = vadd.f32 %v1196, %v1209
        %s1214 = sld [smem:[#allocation6 + $0x1c]]
        %v1215 = vstv %s1214
        %v1216 = vmul.f32 %v1161, %v1215
        %v1217 = vmul.f32 %v1162, %v1215
        %v1218 = vmul.f32 %v1163, %v1215
        %vm1222 = vcmask 1045504
        %v1223 = vrot.slane %v1216, 2
        %v1224 = vrot.slane %v1217, 2
        %v1225 = vsel %vm1222, %v1223, %v1224
        %v1226 = vrot.slane %v1218, 2
        %v1227 = vsel %vm1222, %v1224, %v1226
        %v1230 = vadd.f32 %v1212, %v1225
        %v1231 = vadd.f32 %v1213, %v1227
        %s1232 = sld [smem:[#allocation6 + $0x1d]]
        %v1233 = vstv %s1232
        %v1234 = vmul.f32 %v1164, %v1233
        %v1235 = vmul.f32 %v1165, %v1233
        %v1236 = vmul.f32 %v1166, %v1233
        %v1240 = vrot.slane %v1234, 2
        %v1241 = vrot.slane %v1235, 2
        %v1242 = vsel %vm1222, %v1240, %v1241
        %v1243 = vrot.slane %v1236, 2
        %v1244 = vsel %vm1222, %v1241, %v1243
        %v1247 = vadd.f32 %v1230, %v1242
        %v1248 = vadd.f32 %v1231, %v1244
        %s1249 = sld [smem:[#allocation6 + $0x2a]]
        %v1250 = vstv %s1249
        %v1251 = vmul.f32 %v1161, %v1250
        %v1252 = vmul.f32 %v1162, %v1250
        %v1253 = vmul.f32 %v1163, %v1250
        %vm1257 = vcmask 1044480
        %v1258 = vrot.slane %v1251, 3
        %v1259 = vrot.slane %v1252, 3
        %v1260 = vsel %vm1257, %v1258, %v1259
        %v1261 = vrot.slane %v1253, 3
        %v1262 = vsel %vm1257, %v1259, %v1261
        %v1265 = vadd.f32 %v1247, %v1260
        %v1266 = vadd.f32 %v1248, %v1262
        %s1267 = sld [smem:[#allocation6 + $0x2b]]
        %v1268 = vstv %s1267
        %v1269 = vmul.f32 %v1164, %v1268
        %v1270 = vmul.f32 %v1165, %v1268
        %v1271 = vmul.f32 %v1166, %v1268
        %v1275 = vrot.slane %v1269, 3
        %v1276 = vrot.slane %v1270, 3
        %v1277 = vsel %vm1257, %v1275, %v1276
        %v1278 = vrot.slane %v1271, 3
        %v1279 = vsel %vm1257, %v1276, %v1278
        %v1282 = vadd.f32 %v1265, %v1277
        %v1283 = vadd.f32 %v1266, %v1279
        %s1284 = sld [smem:[#allocation6 + $0x38]]
        %v1285 = vstv %s1284
        %v1286 = vmul.f32 %v1161, %v1285
        %v1287 = vmul.f32 %v1162, %v1285
        %v1288 = vmul.f32 %v1163, %v1285
        %vm1292 = vcmask 1043456
        %v1293 = vrot.slane %v1286, 4
        %v1294 = vrot.slane %v1287, 4
        %v1295 = vsel %vm1292, %v1293, %v1294
        %v1296 = vrot.slane %v1288, 4
        %v1297 = vsel %vm1292, %v1294, %v1296
        %v1300 = vadd.f32 %v1282, %v1295
        %v1301 = vadd.f32 %v1283, %v1297
        %s1302 = sld [smem:[#allocation6 + $0x39]]
        %v1303 = vstv %s1302
        %v1304 = vmul.f32 %v1164, %v1303
        %v1305 = vmul.f32 %v1165, %v1303
        %v1306 = vmul.f32 %v1166, %v1303
        %v1310 = vrot.slane %v1304, 4
        %v1311 = vrot.slane %v1305, 4
        %v1312 = vsel %vm1292, %v1310, %v1311
        %v1313 = vrot.slane %v1306, 4
        %v1314 = vsel %vm1292, %v1311, %v1313
        %v1317 = vadd.f32 %v1300, %v1312
        %v1318 = vadd.f32 %v1301, %v1314
        %s1319 = sld [smem:[#allocation6 + $0x46]]
        %v1320 = vstv %s1319
        %v1321 = vmul.f32 %v1161, %v1320
        %v1322 = vmul.f32 %v1162, %v1320
        %v1323 = vmul.f32 %v1163, %v1320
        %vm1327 = vcmask 1042432
        %v1328 = vrot.slane %v1321, 5
        %v1329 = vrot.slane %v1322, 5
        %v1330 = vsel %vm1327, %v1328, %v1329
        %v1331 = vrot.slane %v1323, 5
        %v1332 = vsel %vm1327, %v1329, %v1331
        %v1335 = vadd.f32 %v1317, %v1330
        %v1336 = vadd.f32 %v1318, %v1332
        %s1337 = sld [smem:[#allocation6 + $0x47]]
        %v1338 = vstv %s1337
        %v1339 = vmul.f32 %v1164, %v1338
        %v1340 = vmul.f32 %v1165, %v1338
        %v1341 = vmul.f32 %v1166, %v1338
        %v1345 = vrot.slane %v1339, 5
        %v1346 = vrot.slane %v1340, 5
        %v1347 = vsel %vm1327, %v1345, %v1346
        %v1348 = vrot.slane %v1341, 5
        %v1349 = vsel %vm1327, %v1346, %v1348
        %v1352 = vadd.f32 %v1335, %v1347
        %v1353 = vadd.f32 %v1336, %v1349
        %s1354 = sld [smem:[#allocation6 + $0x54]]
        %v1355 = vstv %s1354
        %v1356 = vmul.f32 %v1161, %v1355
        %v1357 = vmul.f32 %v1162, %v1355
        %v1358 = vmul.f32 %v1163, %v1355
        %vm1362 = vcmask 1041408
        %v1363 = vrot.slane %v1356, 6
        %v1364 = vrot.slane %v1357, 6
        %v1365 = vsel %vm1362, %v1363, %v1364
        %v1366 = vrot.slane %v1358, 6
        %v1367 = vsel %vm1362, %v1364, %v1366
        %v1370 = vadd.f32 %v1352, %v1365
        %v1371 = vadd.f32 %v1353, %v1367
        %s1372 = sld [smem:[#allocation6 + $0x55]]
        %v1373 = vstv %s1372
        %v1374 = vmul.f32 %v1164, %v1373
        %v1375 = vmul.f32 %v1165, %v1373
        %v1376 = vmul.f32 %v1166, %v1373
        %v1380 = vrot.slane %v1374, 6
        %v1381 = vrot.slane %v1375, 6
        %v1382 = vsel %vm1362, %v1380, %v1381
        %v1383 = vrot.slane %v1376, 6
        %v1384 = vsel %vm1362, %v1381, %v1383
        %v1387 = vadd.f32 %v1370, %v1382
        %v1388 = vadd.f32 %v1371, %v1384
        %s1389 = sld [smem:[#allocation6 + $0x2]]
        %v1390 = vstv %s1389
        %v1391 = vmul.f32 %v1161, %v1390
        %v1392 = vmul.f32 %v1162, %v1390
        %1395 = vrot.lane.b32.xlu0 %v1391, 127
        %v1396 = vpop.permute.xlu0 %1395
        %1397 = vrot.lane.b32.xlu0 %v1392, 127
        %v1398 = vpop.permute.xlu0 %1397
        %v1401 = vadd.f32 %v1387, %v1396
        %v1402 = vadd.f32 %v1388, %v1398
        %s1403 = sld [smem:[#allocation6 + $0x3]]
        %v1404 = vstv %s1403
        %v1405 = vmul.f32 %v1164, %v1404
        %v1406 = vmul.f32 %v1165, %v1404
        %1409 = vrot.lane.b32.xlu0 %v1405, 127
        %v1410 = vpop.permute.xlu0 %1409
        %1411 = vrot.lane.b32.xlu0 %v1406, 127
        %v1412 = vpop.permute.xlu0 %1411
        %v1415 = vadd.f32 %v1401, %v1410
        %v1416 = vadd.f32 %v1402, %v1412
        %s1417 = sld [smem:[#allocation6 + $0x10]]
        %v1418 = vstv %s1417
        %v1419 = vmul.f32 %v1161, %v1418
        %v1420 = vmul.f32 %v1162, %v1418
        %v1421 = vmul.f32 %v1163, %v1418
        %v1425 = vrot.slane %v1419, 1
        %v1426 = vrot.slane %v1420, 1
        %v1427 = vsel %vm1187, %v1425, %v1426
        %v1428 = vrot.slane %v1421, 1
        %v1429 = vsel %vm1187, %v1426, %v1428
        %1430 = vrot.lane.b32.xlu0 %v1427, 127
        %v1431 = vpop.permute.xlu0 %1430
        %1432 = vrot.lane.b32.xlu0 %v1429, 127
        %v1433 = vpop.permute.xlu0 %1432
        %v1436 = vadd.f32 %v1415, %v1431
        %v1437 = vadd.f32 %v1416, %v1433
        %s1438 = sld [smem:[#allocation6 + $0x11]]
        %v1439 = vstv %s1438
        %v1440 = vmul.f32 %v1164, %v1439
        %v1441 = vmul.f32 %v1165, %v1439
        %v1442 = vmul.f32 %v1166, %v1439
        %v1446 = vrot.slane %v1440, 1
        %v1447 = vrot.slane %v1441, 1
        %v1448 = vsel %vm1187, %v1446, %v1447
        %v1449 = vrot.slane %v1442, 1
        %v1450 = vsel %vm1187, %v1447, %v1449
        %1451 = vrot.lane.b32.xlu0 %v1448, 127
        %v1452 = vpop.permute.xlu0 %1451
        %1453 = vrot.lane.b32.xlu0 %v1450, 127
        %v1454 = vpop.permute.xlu0 %1453
        %v1457 = vadd.f32 %v1436, %v1452
        %v1458 = vadd.f32 %v1437, %v1454
        %s1459 = sld [smem:[#allocation6 + $0x1e]]
        %v1460 = vstv %s1459
        %v1461 = vmul.f32 %v1161, %v1460
        %v1462 = vmul.f32 %v1162, %v1460
        %v1463 = vmul.f32 %v1163, %v1460
        %v1467 = vrot.slane %v1461, 2
        %v1468 = vrot.slane %v1462, 2
        %v1469 = vsel %vm1222, %v1467, %v1468
        %v1470 = vrot.slane %v1463, 2
        %v1471 = vsel %vm1222, %v1468, %v1470
        %1472 = vrot.lane.b32.xlu0 %v1469, 127
        %v1473 = vpop.permute.xlu0 %1472
        %1474 = vrot.lane.b32.xlu0 %v1471, 127
        %v1475 = vpop.permute.xlu0 %1474
        %v1478 = vadd.f32 %v1457, %v1473
        %v1479 = vadd.f32 %v1458, %v1475
        %s1480 = sld [smem:[#allocation6 + $0x1f]]
        %v1481 = vstv %s1480
        %v1482 = vmul.f32 %v1164, %v1481
        %v1483 = vmul.f32 %v1165, %v1481
        %v1484 = vmul.f32 %v1166, %v1481
        %v1488 = vrot.slane %v1482, 2
        %v1489 = vrot.slane %v1483, 2
        %v1490 = vsel %vm1222, %v1488, %v1489
        %v1491 = vrot.slane %v1484, 2
        %v1492 = vsel %vm1222, %v1489, %v1491
        %1493 = vrot.lane.b32.xlu0 %v1490, 127
        %v1494 = vpop.permute.xlu0 %1493
        %1495 = vrot.lane.b32.xlu0 %v1492, 127
        %v1496 = vpop.permute.xlu0 %1495
        %v1499 = vadd.f32 %v1478, %v1494
        %v1500 = vadd.f32 %v1479, %v1496
        %s1501 = sld [smem:[#allocation6 + $0x2c]]
        %v1502 = vstv %s1501
        %v1503 = vmul.f32 %v1161, %v1502
        %v1504 = vmul.f32 %v1162, %v1502
        %v1505 = vmul.f32 %v1163, %v1502
        %v1509 = vrot.slane %v1503, 3
        %v1510 = vrot.slane %v1504, 3
        %v1511 = vsel %vm1257, %v1509, %v1510
        %v1512 = vrot.slane %v1505, 3
        %v1513 = vsel %vm1257, %v1510, %v1512
        %1514 = vrot.lane.b32.xlu0 %v1511, 127
        %v1515 = vpop.permute.xlu0 %1514
        %1516 = vrot.lane.b32.xlu0 %v1513, 127
        %v1517 = vpop.permute.xlu0 %1516
        %v1520 = vadd.f32 %v1499, %v1515
        %v1521 = vadd.f32 %v1500, %v1517
        %s1522 = sld [smem:[#allocation6 + $0x2d]]
        %v1523 = vstv %s1522
        %v1524 = vmul.f32 %v1164, %v1523
        %v1525 = vmul.f32 %v1165, %v1523
        %v1526 = vmul.f32 %v1166, %v1523
        %v1530 = vrot.slane %v1524, 3
        %v1531 = vrot.slane %v1525, 3
        %v1532 = vsel %vm1257, %v1530, %v1531
        %v1533 = vrot.slane %v1526, 3
        %v1534 = vsel %vm1257, %v1531, %v1533
        %1535 = vrot.lane.b32.xlu0 %v1532, 127
        %v1536 = vpop.permute.xlu0 %1535
        %1537 = vrot.lane.b32.xlu0 %v1534, 127
        %v1538 = vpop.permute.xlu0 %1537
        %v1541 = vadd.f32 %v1520, %v1536
        %v1542 = vadd.f32 %v1521, %v1538
        %s1543 = sld [smem:[#allocation6 + $0x3a]]
        %v1544 = vstv %s1543
        %v1545 = vmul.f32 %v1161, %v1544
        %v1546 = vmul.f32 %v1162, %v1544
        %v1547 = vmul.f32 %v1163, %v1544
        %v1551 = vrot.slane %v1545, 4
        %v1552 = vrot.slane %v1546, 4
        %v1553 = vsel %vm1292, %v1551, %v1552
        %v1554 = vrot.slane %v1547, 4
        %v1555 = vsel %vm1292, %v1552, %v1554
        %1556 = vrot.lane.b32.xlu0 %v1553, 127
        %v1557 = vpop.permute.xlu0 %1556
        %1558 = vrot.lane.b32.xlu0 %v1555, 127
        %v1559 = vpop.permute.xlu0 %1558
        %v1562 = vadd.f32 %v1541, %v1557
        %v1563 = vadd.f32 %v1542, %v1559
        %s1564 = sld [smem:[#allocation6 + $0x3b]]
        %v1565 = vstv %s1564
        %v1566 = vmul.f32 %v1164, %v1565
        %v1567 = vmul.f32 %v1165, %v1565
        %v1568 = vmul.f32 %v1166, %v1565
        %v1572 = vrot.slane %v1566, 4
        %v1573 = vrot.slane %v1567, 4
        %v1574 = vsel %vm1292, %v1572, %v1573
        %v1575 = vrot.slane %v1568, 4
        %v1576 = vsel %vm1292, %v1573, %v1575
        %1577 = vrot.lane.b32.xlu0 %v1574, 127
        %v1578 = vpop.permute.xlu0 %1577
        %1579 = vrot.lane.b32.xlu0 %v1576, 127
        %v1580 = vpop.permute.xlu0 %1579
        %v1583 = vadd.f32 %v1562, %v1578
        %v1584 = vadd.f32 %v1563, %v1580
        %s1585 = sld [smem:[#allocation6 + $0x48]]
        %v1586 = vstv %s1585
        %v1587 = vmul.f32 %v1161, %v1586
        %v1588 = vmul.f32 %v1162, %v1586
        %v1589 = vmul.f32 %v1163, %v1586
        %v1593 = vrot.slane %v1587, 5
        %v1594 = vrot.slane %v1588, 5
        %v1595 = vsel %vm1327, %v1593, %v1594
        %v1596 = vrot.slane %v1589, 5
        %v1597 = vsel %vm1327, %v1594, %v1596
        %1598 = vrot.lane.b32.xlu0 %v1595, 127
        %v1599 = vpop.permute.xlu0 %1598
        %1600 = vrot.lane.b32.xlu0 %v1597, 127
        %v1601 = vpop.permute.xlu0 %1600
        %v1604 = vadd.f32 %v1583, %v1599
        %v1605 = vadd.f32 %v1584, %v1601
        %s1606 = sld [smem:[#allocation6 + $0x49]]
        %v1607 = vstv %s1606
        %v1608 = vmul.f32 %v1164, %v1607
        %v1609 = vmul.f32 %v1165, %v1607
        %v1610 = vmul.f32 %v1166, %v1607
        %v1614 = vrot.slane %v1608, 5
        %v1615 = vrot.slane %v1609, 5
        %v1616 = vsel %vm1327, %v1614, %v1615
        %v1617 = vrot.slane %v1610, 5
        %v1618 = vsel %vm1327, %v1615, %v1617
        %1619 = vrot.lane.b32.xlu0 %v1616, 127
        %v1620 = vpop.permute.xlu0 %1619
        %1621 = vrot.lane.b32.xlu0 %v1618, 127
        %v1622 = vpop.permute.xlu0 %1621
        %v1625 = vadd.f32 %v1604, %v1620
        %v1626 = vadd.f32 %v1605, %v1622
        %s1627 = sld [smem:[#allocation6 + $0x56]]
        %v1628 = vstv %s1627
        %v1629 = vmul.f32 %v1161, %v1628
        %v1630 = vmul.f32 %v1162, %v1628
        %v1631 = vmul.f32 %v1163, %v1628
        %v1635 = vrot.slane %v1629, 6
        %v1636 = vrot.slane %v1630, 6
        %v1637 = vsel %vm1362, %v1635, %v1636
        %v1638 = vrot.slane %v1631, 6
        %v1639 = vsel %vm1362, %v1636, %v1638
        %1640 = vrot.lane.b32.xlu0 %v1637, 127
        %v1641 = vpop.permute.xlu0 %1640
        %1642 = vrot.lane.b32.xlu0 %v1639, 127
        %v1643 = vpop.permute.xlu0 %1642
        %v1646 = vadd.f32 %v1625, %v1641
        %v1647 = vadd.f32 %v1626, %v1643
        %s1648 = sld [smem:[#allocation6 + $0x57]]
        %v1649 = vstv %s1648
        %v1650 = vmul.f32 %v1164, %v1649
        %v1651 = vmul.f32 %v1165, %v1649
        %v1652 = vmul.f32 %v1166, %v1649
        %v1656 = vrot.slane %v1650, 6
        %v1657 = vrot.slane %v1651, 6
        %v1658 = vsel %vm1362, %v1656, %v1657
        %v1659 = vrot.slane %v1652, 6
        %v1660 = vsel %vm1362, %v1657, %v1659
        %1661 = vrot.lane.b32.xlu0 %v1658, 127
        %v1662 = vpop.permute.xlu0 %1661
        %1663 = vrot.lane.b32.xlu0 %v1660, 127
        %v1664 = vpop.permute.xlu0 %1663
        %v1667 = vadd.f32 %v1646, %v1662
        %v1668 = vadd.f32 %v1647, %v1664
        %s1669 = sld [smem:[#allocation6 + $0x4]]
        %v1670 = vstv %s1669
        %v1671 = vmul.f32 %v1161, %v1670
        %v1672 = vmul.f32 %v1162, %v1670
        %1675 = vrot.lane.b32.xlu0 %v1671, 126
        %v1676 = vpop.permute.xlu0 %1675
        %1677 = vrot.lane.b32.xlu0 %v1672, 126
        %v1678 = vpop.permute.xlu0 %1677
        %v1681 = vadd.f32 %v1667, %v1676
        %v1682 = vadd.f32 %v1668, %v1678
        %s1683 = sld [smem:[#allocation6 + $0x5]]
        %v1684 = vstv %s1683
        %v1685 = vmul.f32 %v1164, %v1684
        %v1686 = vmul.f32 %v1165, %v1684
        %1689 = vrot.lane.b32.xlu0 %v1685, 126
        %v1690 = vpop.permute.xlu0 %1689
        %1691 = vrot.lane.b32.xlu0 %v1686, 126
        %v1692 = vpop.permute.xlu0 %1691
        %v1695 = vadd.f32 %v1681, %v1690
        %v1696 = vadd.f32 %v1682, %v1692
        %s1697 = sld [smem:[#allocation6 + $0x12]]
        %v1698 = vstv %s1697
        %v1699 = vmul.f32 %v1161, %v1698
        %v1700 = vmul.f32 %v1162, %v1698
        %v1701 = vmul.f32 %v1163, %v1698
        %v1705 = vrot.slane %v1699, 1
        %v1706 = vrot.slane %v1700, 1
        %v1707 = vsel %vm1187, %v1705, %v1706
        %v1708 = vrot.slane %v1701, 1
        %v1709 = vsel %vm1187, %v1706, %v1708
        %1710 = vrot.lane.b32.xlu0 %v1707, 126
        %v1711 = vpop.permute.xlu0 %1710
        %1712 = vrot.lane.b32.xlu0 %v1709, 126
        %v1713 = vpop.permute.xlu0 %1712
        %v1716 = vadd.f32 %v1695, %v1711
        %v1717 = vadd.f32 %v1696, %v1713
        %s1718 = sld [smem:[#allocation6 + $0x13]]
        %v1719 = vstv %s1718
        %v1720 = vmul.f32 %v1164, %v1719
        %v1721 = vmul.f32 %v1165, %v1719
        %v1722 = vmul.f32 %v1166, %v1719
        %v1726 = vrot.slane %v1720, 1
        %v1727 = vrot.slane %v1721, 1
        %v1728 = vsel %vm1187, %v1726, %v1727
        %v1729 = vrot.slane %v1722, 1
        %v1730 = vsel %vm1187, %v1727, %v1729
        %1731 = vrot.lane.b32.xlu0 %v1728, 126
        %v1732 = vpop.permute.xlu0 %1731
        %1733 = vrot.lane.b32.xlu0 %v1730, 126
        %v1734 = vpop.permute.xlu0 %1733
        %v1737 = vadd.f32 %v1716, %v1732
        %v1738 = vadd.f32 %v1717, %v1734
        %s1739 = sld [smem:[#allocation6 + $0x20]]
        %v1740 = vstv %s1739
        %v1741 = vmul.f32 %v1161, %v1740
        %v1742 = vmul.f32 %v1162, %v1740
        %v1743 = vmul.f32 %v1163, %v1740
        %v1747 = vrot.slane %v1741, 2
        %v1748 = vrot.slane %v1742, 2
        %v1749 = vsel %vm1222, %v1747, %v1748
        %v1750 = vrot.slane %v1743, 2
        %v1751 = vsel %vm1222, %v1748, %v1750
        %1752 = vrot.lane.b32.xlu0 %v1749, 126
        %v1753 = vpop.permute.xlu0 %1752
        %1754 = vrot.lane.b32.xlu0 %v1751, 126
        %v1755 = vpop.permute.xlu0 %1754
        %v1758 = vadd.f32 %v1737, %v1753
        %v1759 = vadd.f32 %v1738, %v1755
        %s1760 = sld [smem:[#allocation6 + $0x21]]
        %v1761 = vstv %s1760
        %v1762 = vmul.f32 %v1164, %v1761
        %v1763 = vmul.f32 %v1165, %v1761
        %v1764 = vmul.f32 %v1166, %v1761
        %v1768 = vrot.slane %v1762, 2
        %v1769 = vrot.slane %v1763, 2
        %v1770 = vsel %vm1222, %v1768, %v1769
        %v1771 = vrot.slane %v1764, 2
        %v1772 = vsel %vm1222, %v1769, %v1771
        %1773 = vrot.lane.b32.xlu0 %v1770, 126
        %v1774 = vpop.permute.xlu0 %1773
        %1775 = vrot.lane.b32.xlu0 %v1772, 126
        %v1776 = vpop.permute.xlu0 %1775
        %v1779 = vadd.f32 %v1758, %v1774
        %v1780 = vadd.f32 %v1759, %v1776
        %s1781 = sld [smem:[#allocation6 + $0x2e]]
        %v1782 = vstv %s1781
        %v1783 = vmul.f32 %v1161, %v1782
        %v1784 = vmul.f32 %v1162, %v1782
        %v1785 = vmul.f32 %v1163, %v1782
        %v1789 = vrot.slane %v1783, 3
        %v1790 = vrot.slane %v1784, 3
        %v1791 = vsel %vm1257, %v1789, %v1790
        %v1792 = vrot.slane %v1785, 3
        %v1793 = vsel %vm1257, %v1790, %v1792
        %1794 = vrot.lane.b32.xlu0 %v1791, 126
        %v1795 = vpop.permute.xlu0 %1794
        %1796 = vrot.lane.b32.xlu0 %v1793, 126
        %v1797 = vpop.permute.xlu0 %1796
        %v1800 = vadd.f32 %v1779, %v1795
        %v1801 = vadd.f32 %v1780, %v1797
        %s1802 = sld [smem:[#allocation6 + $0x2f]]
        %v1803 = vstv %s1802
        %v1804 = vmul.f32 %v1164, %v1803
        %v1805 = vmul.f32 %v1165, %v1803
        %v1806 = vmul.f32 %v1166, %v1803
        %v1810 = vrot.slane %v1804, 3
        %v1811 = vrot.slane %v1805, 3
        %v1812 = vsel %vm1257, %v1810, %v1811
        %v1813 = vrot.slane %v1806, 3
        %v1814 = vsel %vm1257, %v1811, %v1813
        %1815 = vrot.lane.b32.xlu0 %v1812, 126
        %v1816 = vpop.permute.xlu0 %1815
        %1817 = vrot.lane.b32.xlu0 %v1814, 126
        %v1818 = vpop.permute.xlu0 %1817
        %v1821 = vadd.f32 %v1800, %v1816
        %v1822 = vadd.f32 %v1801, %v1818
        %s1823 = sld [smem:[#allocation6 + $0x3c]]
        %v1824 = vstv %s1823
        %v1825 = vmul.f32 %v1161, %v1824
        %v1826 = vmul.f32 %v1162, %v1824
        %v1827 = vmul.f32 %v1163, %v1824
        %v1831 = vrot.slane %v1825, 4
        %v1832 = vrot.slane %v1826, 4
        %v1833 = vsel %vm1292, %v1831, %v1832
        %v1834 = vrot.slane %v1827, 4
        %v1835 = vsel %vm1292, %v1832, %v1834
        %1836 = vrot.lane.b32.xlu0 %v1833, 126
        %v1837 = vpop.permute.xlu0 %1836
        %1838 = vrot.lane.b32.xlu0 %v1835, 126
        %v1839 = vpop.permute.xlu0 %1838
        %v1842 = vadd.f32 %v1821, %v1837
        %v1843 = vadd.f32 %v1822, %v1839
        %s1844 = sld [smem:[#allocation6 + $0x3d]]
        %v1845 = vstv %s1844
        %v1846 = vmul.f32 %v1164, %v1845
        %v1847 = vmul.f32 %v1165, %v1845
        %v1848 = vmul.f32 %v1166, %v1845
        %v1852 = vrot.slane %v1846, 4
        %v1853 = vrot.slane %v1847, 4
        %v1854 = vsel %vm1292, %v1852, %v1853
        %v1855 = vrot.slane %v1848, 4
        %v1856 = vsel %vm1292, %v1853, %v1855
        %1857 = vrot.lane.b32.xlu0 %v1854, 126
        %v1858 = vpop.permute.xlu0 %1857
        %1859 = vrot.lane.b32.xlu0 %v1856, 126
        %v1860 = vpop.permute.xlu0 %1859
        %v1863 = vadd.f32 %v1842, %v1858
        %v1864 = vadd.f32 %v1843, %v1860
        %s1865 = sld [smem:[#allocation6 + $0x4a]]
        %v1866 = vstv %s1865
        %v1867 = vmul.f32 %v1161, %v1866
        %v1868 = vmul.f32 %v1162, %v1866
        %v1869 = vmul.f32 %v1163, %v1866
        %v1873 = vrot.slane %v1867, 5
        %v1874 = vrot.slane %v1868, 5
        %v1875 = vsel %vm1327, %v1873, %v1874
        %v1876 = vrot.slane %v1869, 5
        %v1877 = vsel %vm1327, %v1874, %v1876
        %1878 = vrot.lane.b32.xlu0 %v1875, 126
        %v1879 = vpop.permute.xlu0 %1878
        %1880 = vrot.lane.b32.xlu0 %v1877, 126
        %v1881 = vpop.permute.xlu0 %1880
        %v1884 = vadd.f32 %v1863, %v1879
        %v1885 = vadd.f32 %v1864, %v1881
        %s1886 = sld [smem:[#allocation6 + $0x4b]]
        %v1887 = vstv %s1886
        %v1888 = vmul.f32 %v1164, %v1887
        %v1889 = vmul.f32 %v1165, %v1887
        %v1890 = vmul.f32 %v1166, %v1887
        %v1894 = vrot.slane %v1888, 5
        %v1895 = vrot.slane %v1889, 5
        %v1896 = vsel %vm1327, %v1894, %v1895
        %v1897 = vrot.slane %v1890, 5
        %v1898 = vsel %vm1327, %v1895, %v1897
        %1899 = vrot.lane.b32.xlu0 %v1896, 126
        %v1900 = vpop.permute.xlu0 %1899
        %1901 = vrot.lane.b32.xlu0 %v1898, 126
        %v1902 = vpop.permute.xlu0 %1901
        %v1905 = vadd.f32 %v1884, %v1900
        %v1906 = vadd.f32 %v1885, %v1902
        %s1907 = sld [smem:[#allocation6 + $0x58]]
        %v1908 = vstv %s1907
        %v1909 = vmul.f32 %v1161, %v1908
        %v1910 = vmul.f32 %v1162, %v1908
        %v1911 = vmul.f32 %v1163, %v1908
        %v1915 = vrot.slane %v1909, 6
        %v1916 = vrot.slane %v1910, 6
        %v1917 = vsel %vm1362, %v1915, %v1916
        %v1918 = vrot.slane %v1911, 6
        %v1919 = vsel %vm1362, %v1916, %v1918
        %1920 = vrot.lane.b32.xlu0 %v1917, 126
        %v1921 = vpop.permute.xlu0 %1920
        %1922 = vrot.lane.b32.xlu0 %v1919, 126
        %v1923 = vpop.permute.xlu0 %1922
        %v1926 = vadd.f32 %v1905, %v1921
        %v1927 = vadd.f32 %v1906, %v1923
        %s1928 = sld [smem:[#allocation6 + $0x59]]
        %v1929 = vstv %s1928
        %v1930 = vmul.f32 %v1164, %v1929
        %v1931 = vmul.f32 %v1165, %v1929
        %v1932 = vmul.f32 %v1166, %v1929
        %v1936 = vrot.slane %v1930, 6
        %v1937 = vrot.slane %v1931, 6
        %v1938 = vsel %vm1362, %v1936, %v1937
        %v1939 = vrot.slane %v1932, 6
        %v1940 = vsel %vm1362, %v1937, %v1939
        %1941 = vrot.lane.b32.xlu0 %v1938, 126
        %v1942 = vpop.permute.xlu0 %1941
        %1943 = vrot.lane.b32.xlu0 %v1940, 126
        %v1944 = vpop.permute.xlu0 %1943
        %v1947 = vadd.f32 %v1926, %v1942
        %v1948 = vadd.f32 %v1927, %v1944
        %s1949 = sld [smem:[#allocation6 + $0x6]]
        %v1950 = vstv %s1949
        %v1951 = vmul.f32 %v1161, %v1950
        %v1952 = vmul.f32 %v1162, %v1950
        %1955 = vrot.lane.b32.xlu0 %v1951, 125
        %v1956 = vpop.permute.xlu0 %1955
        %1957 = vrot.lane.b32.xlu0 %v1952, 125
        %v1958 = vpop.permute.xlu0 %1957
        %v1961 = vadd.f32 %v1947, %v1956
        %v1962 = vadd.f32 %v1948, %v1958
        %s1963 = sld [smem:[#allocation6 + $0x7]]
        %v1964 = vstv %s1963
        %v1965 = vmul.f32 %v1164, %v1964
        %v1966 = vmul.f32 %v1165, %v1964
        %1969 = vrot.lane.b32.xlu0 %v1965, 125
        %v1970 = vpop.permute.xlu0 %1969
        %1971 = vrot.lane.b32.xlu0 %v1966, 125
        %v1972 = vpop.permute.xlu0 %1971
        %v1975 = vadd.f32 %v1961, %v1970
        %v1976 = vadd.f32 %v1962, %v1972
        %s1977 = sld [smem:[#allocation6 + $0x14]]
        %v1978 = vstv %s1977
        %v1979 = vmul.f32 %v1161, %v1978
        %v1980 = vmul.f32 %v1162, %v1978
        %v1981 = vmul.f32 %v1163, %v1978
        %v1985 = vrot.slane %v1979, 1
        %v1986 = vrot.slane %v1980, 1
        %v1987 = vsel %vm1187, %v1985, %v1986
        %v1988 = vrot.slane %v1981, 1
        %v1989 = vsel %vm1187, %v1986, %v1988
        %1990 = vrot.lane.b32.xlu0 %v1987, 125
        %v1991 = vpop.permute.xlu0 %1990
        %1992 = vrot.lane.b32.xlu0 %v1989, 125
        %v1993 = vpop.permute.xlu0 %1992
        %v1996 = vadd.f32 %v1975, %v1991
        %v1997 = vadd.f32 %v1976, %v1993
        %s1998 = sld [smem:[#allocation6 + $0x15]]
        %v1999 = vstv %s1998
        %v2000 = vmul.f32 %v1164, %v1999
        %v2001 = vmul.f32 %v1165, %v1999
        %v2002 = vmul.f32 %v1166, %v1999
        %v2006 = vrot.slane %v2000, 1
        %v2007 = vrot.slane %v2001, 1
        %v2008 = vsel %vm1187, %v2006, %v2007
        %v2009 = vrot.slane %v2002, 1
        %v2010 = vsel %vm1187, %v2007, %v2009
        %2011 = vrot.lane.b32.xlu0 %v2008, 125
        %v2012 = vpop.permute.xlu0 %2011
        %2013 = vrot.lane.b32.xlu0 %v2010, 125
        %v2014 = vpop.permute.xlu0 %2013
        %v2017 = vadd.f32 %v1996, %v2012
        %v2018 = vadd.f32 %v1997, %v2014
        %s2019 = sld [smem:[#allocation6 + $0x22]]
        %v2020 = vstv %s2019
        %v2021 = vmul.f32 %v1161, %v2020
        %v2022 = vmul.f32 %v1162, %v2020
        %v2023 = vmul.f32 %v1163, %v2020
        %v2027 = vrot.slane %v2021, 2
        %v2028 = vrot.slane %v2022, 2
        %v2029 = vsel %vm1222, %v2027, %v2028
        %v2030 = vrot.slane %v2023, 2
        %v2031 = vsel %vm1222, %v2028, %v2030
        %2032 = vrot.lane.b32.xlu0 %v2029, 125
        %v2033 = vpop.permute.xlu0 %2032
        %2034 = vrot.lane.b32.xlu0 %v2031, 125
        %v2035 = vpop.permute.xlu0 %2034
        %v2038 = vadd.f32 %v2017, %v2033
        %v2039 = vadd.f32 %v2018, %v2035
        %s2040 = sld [smem:[#allocation6 + $0x23]]
        %v2041 = vstv %s2040
        %v2042 = vmul.f32 %v1164, %v2041
        %v2043 = vmul.f32 %v1165, %v2041
        %v2044 = vmul.f32 %v1166, %v2041
        %v2048 = vrot.slane %v2042, 2
        %v2049 = vrot.slane %v2043, 2
        %v2050 = vsel %vm1222, %v2048, %v2049
        %v2051 = vrot.slane %v2044, 2
        %v2052 = vsel %vm1222, %v2049, %v2051
        %2053 = vrot.lane.b32.xlu0 %v2050, 125
        %v2054 = vpop.permute.xlu0 %2053
        %2055 = vrot.lane.b32.xlu0 %v2052, 125
        %v2056 = vpop.permute.xlu0 %2055
        %v2059 = vadd.f32 %v2038, %v2054
        %v2060 = vadd.f32 %v2039, %v2056
        %s2061 = sld [smem:[#allocation6 + $0x30]]
        %v2062 = vstv %s2061
        %v2063 = vmul.f32 %v1161, %v2062
        %v2064 = vmul.f32 %v1162, %v2062
        %v2065 = vmul.f32 %v1163, %v2062
        %v2069 = vrot.slane %v2063, 3
        %v2070 = vrot.slane %v2064, 3
        %v2071 = vsel %vm1257, %v2069, %v2070
        %v2072 = vrot.slane %v2065, 3
        %v2073 = vsel %vm1257, %v2070, %v2072
        %2074 = vrot.lane.b32.xlu0 %v2071, 125
        %v2075 = vpop.permute.xlu0 %2074
        %2076 = vrot.lane.b32.xlu0 %v2073, 125
        %v2077 = vpop.permute.xlu0 %2076
        %v2080 = vadd.f32 %v2059, %v2075
        %v2081 = vadd.f32 %v2060, %v2077
        %s2082 = sld [smem:[#allocation6 + $0x31]]
        %v2083 = vstv %s2082
        %v2084 = vmul.f32 %v1164, %v2083
        %v2085 = vmul.f32 %v1165, %v2083
        %v2086 = vmul.f32 %v1166, %v2083
        %v2090 = vrot.slane %v2084, 3
        %v2091 = vrot.slane %v2085, 3
        %v2092 = vsel %vm1257, %v2090, %v2091
        %v2093 = vrot.slane %v2086, 3
        %v2094 = vsel %vm1257, %v2091, %v2093
        %2095 = vrot.lane.b32.xlu0 %v2092, 125
        %v2096 = vpop.permute.xlu0 %2095
        %2097 = vrot.lane.b32.xlu0 %v2094, 125
        %v2098 = vpop.permute.xlu0 %2097
        %v2101 = vadd.f32 %v2080, %v2096
        %v2102 = vadd.f32 %v2081, %v2098
        %s2103 = sld [smem:[#allocation6 + $0x3e]]
        %v2104 = vstv %s2103
        %v2105 = vmul.f32 %v1161, %v2104
        %v2106 = vmul.f32 %v1162, %v2104
        %v2107 = vmul.f32 %v1163, %v2104
        %v2111 = vrot.slane %v2105, 4
        %v2112 = vrot.slane %v2106, 4
        %v2113 = vsel %vm1292, %v2111, %v2112
        %v2114 = vrot.slane %v2107, 4
        %v2115 = vsel %vm1292, %v2112, %v2114
        %2116 = vrot.lane.b32.xlu0 %v2113, 125
        %v2117 = vpop.permute.xlu0 %2116
        %2118 = vrot.lane.b32.xlu0 %v2115, 125
        %v2119 = vpop.permute.xlu0 %2118
        %v2122 = vadd.f32 %v2101, %v2117
        %v2123 = vadd.f32 %v2102, %v2119
        %s2124 = sld [smem:[#allocation6 + $0x3f]]
        %v2125 = vstv %s2124
        %v2126 = vmul.f32 %v1164, %v2125
        %v2127 = vmul.f32 %v1165, %v2125
        %v2128 = vmul.f32 %v1166, %v2125
        %v2132 = vrot.slane %v2126, 4
        %v2133 = vrot.slane %v2127, 4
        %v2134 = vsel %vm1292, %v2132, %v2133
        %v2135 = vrot.slane %v2128, 4
        %v2136 = vsel %vm1292, %v2133, %v2135
        %2137 = vrot.lane.b32.xlu0 %v2134, 125
        %v2138 = vpop.permute.xlu0 %2137
        %2139 = vrot.lane.b32.xlu0 %v2136, 125
        %v2140 = vpop.permute.xlu0 %2139
        %v2143 = vadd.f32 %v2122, %v2138
        %v2144 = vadd.f32 %v2123, %v2140
        %s2145 = sld [smem:[#allocation6 + $0x4c]]
        %v2146 = vstv %s2145
        %v2147 = vmul.f32 %v1161, %v2146
        %v2148 = vmul.f32 %v1162, %v2146
        %v2149 = vmul.f32 %v1163, %v2146
        %v2153 = vrot.slane %v2147, 5
        %v2154 = vrot.slane %v2148, 5
        %v2155 = vsel %vm1327, %v2153, %v2154
        %v2156 = vrot.slane %v2149, 5
        %v2157 = vsel %vm1327, %v2154, %v2156
        %2158 = vrot.lane.b32.xlu0 %v2155, 125
        %v2159 = vpop.permute.xlu0 %2158
        %2160 = vrot.lane.b32.xlu0 %v2157, 125
        %v2161 = vpop.permute.xlu0 %2160
        %v2164 = vadd.f32 %v2143, %v2159
        %v2165 = vadd.f32 %v2144, %v2161
        %s2166 = sld [smem:[#allocation6 + $0x4d]]
        %v2167 = vstv %s2166
        %v2168 = vmul.f32 %v1164, %v2167
        %v2169 = vmul.f32 %v1165, %v2167
        %v2170 = vmul.f32 %v1166, %v2167
        %v2174 = vrot.slane %v2168, 5
        %v2175 = vrot.slane %v2169, 5
        %v2176 = vsel %vm1327, %v2174, %v2175
        %v2177 = vrot.slane %v2170, 5
        %v2178 = vsel %vm1327, %v2175, %v2177
        %2179 = vrot.lane.b32.xlu0 %v2176, 125
        %v2180 = vpop.permute.xlu0 %2179
        %2181 = vrot.lane.b32.xlu0 %v2178, 125
        %v2182 = vpop.permute.xlu0 %2181
        %v2185 = vadd.f32 %v2164, %v2180
        %v2186 = vadd.f32 %v2165, %v2182
        %s2187 = sld [smem:[#allocation6 + $0x5a]]
        %v2188 = vstv %s2187
        %v2189 = vmul.f32 %v1161, %v2188
        %v2190 = vmul.f32 %v1162, %v2188
        %v2191 = vmul.f32 %v1163, %v2188
        %v2195 = vrot.slane %v2189, 6
        %v2196 = vrot.slane %v2190, 6
        %v2197 = vsel %vm1362, %v2195, %v2196
        %v2198 = vrot.slane %v2191, 6
        %v2199 = vsel %vm1362, %v2196, %v2198
        %2200 = vrot.lane.b32.xlu0 %v2197, 125
        %v2201 = vpop.permute.xlu0 %2200
        %2202 = vrot.lane.b32.xlu0 %v2199, 125
        %v2203 = vpop.permute.xlu0 %2202
        %v2206 = vadd.f32 %v2185, %v2201
        %v2207 = vadd.f32 %v2186, %v2203
        %s2208 = sld [smem:[#allocation6 + $0x5b]]
        %v2209 = vstv %s2208
        %v2210 = vmul.f32 %v1164, %v2209
        %v2211 = vmul.f32 %v1165, %v2209
        %v2212 = vmul.f32 %v1166, %v2209
        %v2216 = vrot.slane %v2210, 6
        %v2217 = vrot.slane %v2211, 6
        %v2218 = vsel %vm1362, %v2216, %v2217
        %v2219 = vrot.slane %v2212, 6
        %v2220 = vsel %vm1362, %v2217, %v2219
        %2221 = vrot.lane.b32.xlu0 %v2218, 125
        %v2222 = vpop.permute.xlu0 %2221
        %2223 = vrot.lane.b32.xlu0 %v2220, 125
        %v2224 = vpop.permute.xlu0 %2223
        %v2227 = vadd.f32 %v2206, %v2222
        %v2228 = vadd.f32 %v2207, %v2224
        %s2229 = sld [smem:[#allocation6 + $0x8]]
        %v2230 = vstv %s2229
        %v2231 = vmul.f32 %v1161, %v2230
        %v2232 = vmul.f32 %v1162, %v2230
        %2235 = vrot.lane.b32.xlu0 %v2231, 124
        %v2236 = vpop.permute.xlu0 %2235
        %2237 = vrot.lane.b32.xlu0 %v2232, 124
        %v2238 = vpop.permute.xlu0 %2237
        %v2241 = vadd.f32 %v2227, %v2236
        %v2242 = vadd.f32 %v2228, %v2238
        %s2243 = sld [smem:[#allocation6 + $0x9]]
        %v2244 = vstv %s2243
        %v2245 = vmul.f32 %v1164, %v2244
        %v2246 = vmul.f32 %v1165, %v2244
        %2249 = vrot.lane.b32.xlu0 %v2245, 124
        %v2250 = vpop.permute.xlu0 %2249
        %2251 = vrot.lane.b32.xlu0 %v2246, 124
        %v2252 = vpop.permute.xlu0 %2251
        %v2255 = vadd.f32 %v2241, %v2250
        %v2256 = vadd.f32 %v2242, %v2252
        %s2257 = sld [smem:[#allocation6 + $0x16]]
        %v2258 = vstv %s2257
        %v2259 = vmul.f32 %v1161, %v2258
        %v2260 = vmul.f32 %v1162, %v2258
        %v2261 = vmul.f32 %v1163, %v2258
        %v2265 = vrot.slane %v2259, 1
        %v2266 = vrot.slane %v2260, 1
        %v2267 = vsel %vm1187, %v2265, %v2266
        %v2268 = vrot.slane %v2261, 1
        %v2269 = vsel %vm1187, %v2266, %v2268
        %2270 = vrot.lane.b32.xlu0 %v2267, 124
        %v2271 = vpop.permute.xlu0 %2270
        %2272 = vrot.lane.b32.xlu0 %v2269, 124
        %v2273 = vpop.permute.xlu0 %2272
        %v2276 = vadd.f32 %v2255, %v2271
        %v2277 = vadd.f32 %v2256, %v2273
        %s2278 = sld [smem:[#allocation6 + $0x17]]
        %v2279 = vstv %s2278
        %v2280 = vmul.f32 %v1164, %v2279
        %v2281 = vmul.f32 %v1165, %v2279
        %v2282 = vmul.f32 %v1166, %v2279
        %v2286 = vrot.slane %v2280, 1
        %v2287 = vrot.slane %v2281, 1
        %v2288 = vsel %vm1187, %v2286, %v2287
        %v2289 = vrot.slane %v2282, 1
        %v2290 = vsel %vm1187, %v2287, %v2289
        %2291 = vrot.lane.b32.xlu0 %v2288, 124
        %v2292 = vpop.permute.xlu0 %2291
        %2293 = vrot.lane.b32.xlu0 %v2290, 124
        %v2294 = vpop.permute.xlu0 %2293
        %v2297 = vadd.f32 %v2276, %v2292
        %v2298 = vadd.f32 %v2277, %v2294
        %s2299 = sld [smem:[#allocation6 + $0x24]]
        %v2300 = vstv %s2299
        %v2301 = vmul.f32 %v1161, %v2300
        %v2302 = vmul.f32 %v1162, %v2300
        %v2303 = vmul.f32 %v1163, %v2300
        %v2307 = vrot.slane %v2301, 2
        %v2308 = vrot.slane %v2302, 2
        %v2309 = vsel %vm1222, %v2307, %v2308
        %v2310 = vrot.slane %v2303, 2
        %v2311 = vsel %vm1222, %v2308, %v2310
        %2312 = vrot.lane.b32.xlu0 %v2309, 124
        %v2313 = vpop.permute.xlu0 %2312
        %2314 = vrot.lane.b32.xlu0 %v2311, 124
        %v2315 = vpop.permute.xlu0 %2314
        %v2318 = vadd.f32 %v2297, %v2313
        %v2319 = vadd.f32 %v2298, %v2315
        %s2320 = sld [smem:[#allocation6 + $0x25]]
        %v2321 = vstv %s2320
        %v2322 = vmul.f32 %v1164, %v2321
        %v2323 = vmul.f32 %v1165, %v2321
        %v2324 = vmul.f32 %v1166, %v2321
        %v2328 = vrot.slane %v2322, 2
        %v2329 = vrot.slane %v2323, 2
        %v2330 = vsel %vm1222, %v2328, %v2329
        %v2331 = vrot.slane %v2324, 2
        %v2332 = vsel %vm1222, %v2329, %v2331
        %2333 = vrot.lane.b32.xlu0 %v2330, 124
        %v2334 = vpop.permute.xlu0 %2333
        %2335 = vrot.lane.b32.xlu0 %v2332, 124
        %v2336 = vpop.permute.xlu0 %2335
        %v2339 = vadd.f32 %v2318, %v2334
        %v2340 = vadd.f32 %v2319, %v2336
        %s2341 = sld [smem:[#allocation6 + $0x32]]
        %v2342 = vstv %s2341
        %v2343 = vmul.f32 %v1161, %v2342
        %v2344 = vmul.f32 %v1162, %v2342
        %v2345 = vmul.f32 %v1163, %v2342
        %v2349 = vrot.slane %v2343, 3
        %v2350 = vrot.slane %v2344, 3
        %v2351 = vsel %vm1257, %v2349, %v2350
        %v2352 = vrot.slane %v2345, 3
        %v2353 = vsel %vm1257, %v2350, %v2352
        %2354 = vrot.lane.b32.xlu0 %v2351, 124
        %v2355 = vpop.permute.xlu0 %2354
        %2356 = vrot.lane.b32.xlu0 %v2353, 124
        %v2357 = vpop.permute.xlu0 %2356
        %v2360 = vadd.f32 %v2339, %v2355
        %v2361 = vadd.f32 %v2340, %v2357
        %s2362 = sld [smem:[#allocation6 + $0x33]]
        %v2363 = vstv %s2362
        %v2364 = vmul.f32 %v1164, %v2363
        %v2365 = vmul.f32 %v1165, %v2363
        %v2366 = vmul.f32 %v1166, %v2363
        %v2370 = vrot.slane %v2364, 3
        %v2371 = vrot.slane %v2365, 3
        %v2372 = vsel %vm1257, %v2370, %v2371
        %v2373 = vrot.slane %v2366, 3
        %v2374 = vsel %vm1257, %v2371, %v2373
        %2375 = vrot.lane.b32.xlu0 %v2372, 124
        %v2376 = vpop.permute.xlu0 %2375
        %2377 = vrot.lane.b32.xlu0 %v2374, 124
        %v2378 = vpop.permute.xlu0 %2377
        %v2381 = vadd.f32 %v2360, %v2376
        %v2382 = vadd.f32 %v2361, %v2378
        %s2383 = sld [smem:[#allocation6 + $0x40]]
        %v2384 = vstv %s2383
        %v2385 = vmul.f32 %v1161, %v2384
        %v2386 = vmul.f32 %v1162, %v2384
        %v2387 = vmul.f32 %v1163, %v2384
        %v2391 = vrot.slane %v2385, 4
        %v2392 = vrot.slane %v2386, 4
        %v2393 = vsel %vm1292, %v2391, %v2392
        %v2394 = vrot.slane %v2387, 4
        %v2395 = vsel %vm1292, %v2392, %v2394
        %2396 = vrot.lane.b32.xlu0 %v2393, 124
        %v2397 = vpop.permute.xlu0 %2396
        %2398 = vrot.lane.b32.xlu0 %v2395, 124
        %v2399 = vpop.permute.xlu0 %2398
        %v2402 = vadd.f32 %v2381, %v2397
        %v2403 = vadd.f32 %v2382, %v2399
        %s2404 = sld [smem:[#allocation6 + $0x41]]
        %v2405 = vstv %s2404
        %v2406 = vmul.f32 %v1164, %v2405
        %v2407 = vmul.f32 %v1165, %v2405
        %v2408 = vmul.f32 %v1166, %v2405
        %v2412 = vrot.slane %v2406, 4
        %v2413 = vrot.slane %v2407, 4
        %v2414 = vsel %vm1292, %v2412, %v2413
        %v2415 = vrot.slane %v2408, 4
        %v2416 = vsel %vm1292, %v2413, %v2415
        %2417 = vrot.lane.b32.xlu0 %v2414, 124
        %v2418 = vpop.permute.xlu0 %2417
        %2419 = vrot.lane.b32.xlu0 %v2416, 124
        %v2420 = vpop.permute.xlu0 %2419
        %v2423 = vadd.f32 %v2402, %v2418
        %v2424 = vadd.f32 %v2403, %v2420
        %s2425 = sld [smem:[#allocation6 + $0x4e]]
        %v2426 = vstv %s2425
        %v2427 = vmul.f32 %v1161, %v2426
        %v2428 = vmul.f32 %v1162, %v2426
        %v2429 = vmul.f32 %v1163, %v2426
        %v2433 = vrot.slane %v2427, 5
        %v2434 = vrot.slane %v2428, 5
        %v2435 = vsel %vm1327, %v2433, %v2434
        %v2436 = vrot.slane %v2429, 5
        %v2437 = vsel %vm1327, %v2434, %v2436
        %2438 = vrot.lane.b32.xlu0 %v2435, 124
        %v2439 = vpop.permute.xlu0 %2438
        %2440 = vrot.lane.b32.xlu0 %v2437, 124
        %v2441 = vpop.permute.xlu0 %2440
        %v2444 = vadd.f32 %v2423, %v2439
        %v2445 = vadd.f32 %v2424, %v2441
        %s2446 = sld [smem:[#allocation6 + $0x4f]]
        %v2447 = vstv %s2446
        %v2448 = vmul.f32 %v1164, %v2447
        %v2449 = vmul.f32 %v1165, %v2447
        %v2450 = vmul.f32 %v1166, %v2447
        %v2454 = vrot.slane %v2448, 5
        %v2455 = vrot.slane %v2449, 5
        %v2456 = vsel %vm1327, %v2454, %v2455
        %v2457 = vrot.slane %v2450, 5
        %v2458 = vsel %vm1327, %v2455, %v2457
        %2459 = vrot.lane.b32.xlu0 %v2456, 124
        %v2460 = vpop.permute.xlu0 %2459
        %2461 = vrot.lane.b32.xlu0 %v2458, 124
        %v2462 = vpop.permute.xlu0 %2461
        %v2465 = vadd.f32 %v2444, %v2460
        %v2466 = vadd.f32 %v2445, %v2462
        %s2467 = sld [smem:[#allocation6 + $0x5c]]
        %v2468 = vstv %s2467
        %v2469 = vmul.f32 %v1161, %v2468
        %v2470 = vmul.f32 %v1162, %v2468
        %v2471 = vmul.f32 %v1163, %v2468
        %v2475 = vrot.slane %v2469, 6
        %v2476 = vrot.slane %v2470, 6
        %v2477 = vsel %vm1362, %v2475, %v2476
        %v2478 = vrot.slane %v2471, 6
        %v2479 = vsel %vm1362, %v2476, %v2478
        %2480 = vrot.lane.b32.xlu0 %v2477, 124
        %v2481 = vpop.permute.xlu0 %2480
        %2482 = vrot.lane.b32.xlu0 %v2479, 124
        %v2483 = vpop.permute.xlu0 %2482
        %v2486 = vadd.f32 %v2465, %v2481
        %v2487 = vadd.f32 %v2466, %v2483
        %s2488 = sld [smem:[#allocation6 + $0x5d]]
        %v2489 = vstv %s2488
        %v2490 = vmul.f32 %v1164, %v2489
        %v2491 = vmul.f32 %v1165, %v2489
        %v2492 = vmul.f32 %v1166, %v2489
        %v2496 = vrot.slane %v2490, 6
        %v2497 = vrot.slane %v2491, 6
        %v2498 = vsel %vm1362, %v2496, %v2497
        %v2499 = vrot.slane %v2492, 6
        %v2500 = vsel %vm1362, %v2497, %v2499
        %2501 = vrot.lane.b32.xlu0 %v2498, 124
        %v2502 = vpop.permute.xlu0 %2501
        %2503 = vrot.lane.b32.xlu0 %v2500, 124
        %v2504 = vpop.permute.xlu0 %2503
        %v2507 = vadd.f32 %v2486, %v2502
        %v2508 = vadd.f32 %v2487, %v2504
        %s2509 = sld [smem:[#allocation6 + $0xa]]
        %v2510 = vstv %s2509
        %v2511 = vmul.f32 %v1161, %v2510
        %v2512 = vmul.f32 %v1162, %v2510
        %2515 = vrot.lane.b32.xlu0 %v2511, 123
        %v2516 = vpop.permute.xlu0 %2515
        %2517 = vrot.lane.b32.xlu0 %v2512, 123
        %v2518 = vpop.permute.xlu0 %2517
        %v2521 = vadd.f32 %v2507, %v2516
        %v2522 = vadd.f32 %v2508, %v2518
        %s2523 = sld [smem:[#allocation6 + $0xb]]
        %v2524 = vstv %s2523
        %v2525 = vmul.f32 %v1164, %v2524
        %v2526 = vmul.f32 %v1165, %v2524
        %2529 = vrot.lane.b32.xlu0 %v2525, 123
        %v2530 = vpop.permute.xlu0 %2529
        %2531 = vrot.lane.b32.xlu0 %v2526, 123
        %v2532 = vpop.permute.xlu0 %2531
        %v2535 = vadd.f32 %v2521, %v2530
        %v2536 = vadd.f32 %v2522, %v2532
        %s2537 = sld [smem:[#allocation6 + $0x18]]
        %v2538 = vstv %s2537
        %v2539 = vmul.f32 %v1161, %v2538
        %v2540 = vmul.f32 %v1162, %v2538
        %v2541 = vmul.f32 %v1163, %v2538
        %v2545 = vrot.slane %v2539, 1
        %v2546 = vrot.slane %v2540, 1
        %v2547 = vsel %vm1187, %v2545, %v2546
        %v2548 = vrot.slane %v2541, 1
        %v2549 = vsel %vm1187, %v2546, %v2548
        %2550 = vrot.lane.b32.xlu0 %v2547, 123
        %v2551 = vpop.permute.xlu0 %2550
        %2552 = vrot.lane.b32.xlu0 %v2549, 123
        %v2553 = vpop.permute.xlu0 %2552
        %v2556 = vadd.f32 %v2535, %v2551
        %v2557 = vadd.f32 %v2536, %v2553
        %s2558 = sld [smem:[#allocation6 + $0x19]]
        %v2559 = vstv %s2558
        %v2560 = vmul.f32 %v1164, %v2559
        %v2561 = vmul.f32 %v1165, %v2559
        %v2562 = vmul.f32 %v1166, %v2559
        %v2566 = vrot.slane %v2560, 1
        %v2567 = vrot.slane %v2561, 1
        %v2568 = vsel %vm1187, %v2566, %v2567
        %v2569 = vrot.slane %v2562, 1
        %v2570 = vsel %vm1187, %v2567, %v2569
        %2571 = vrot.lane.b32.xlu0 %v2568, 123
        %v2572 = vpop.permute.xlu0 %2571
        %2573 = vrot.lane.b32.xlu0 %v2570, 123
        %v2574 = vpop.permute.xlu0 %2573
        %v2577 = vadd.f32 %v2556, %v2572
        %v2578 = vadd.f32 %v2557, %v2574
        %s2579 = sld [smem:[#allocation6 + $0x26]]
        %v2580 = vstv %s2579
        %v2581 = vmul.f32 %v1161, %v2580
        %v2582 = vmul.f32 %v1162, %v2580
        %v2583 = vmul.f32 %v1163, %v2580
        %v2587 = vrot.slane %v2581, 2
        %v2588 = vrot.slane %v2582, 2
        %v2589 = vsel %vm1222, %v2587, %v2588
        %v2590 = vrot.slane %v2583, 2
        %v2591 = vsel %vm1222, %v2588, %v2590
        %2592 = vrot.lane.b32.xlu0 %v2589, 123
        %v2593 = vpop.permute.xlu0 %2592
        %2594 = vrot.lane.b32.xlu0 %v2591, 123
        %v2595 = vpop.permute.xlu0 %2594
        %v2598 = vadd.f32 %v2577, %v2593
        %v2599 = vadd.f32 %v2578, %v2595
        %s2600 = sld [smem:[#allocation6 + $0x27]]
        %v2601 = vstv %s2600
        %v2602 = vmul.f32 %v1164, %v2601
        %v2603 = vmul.f32 %v1165, %v2601
        %v2604 = vmul.f32 %v1166, %v2601
        %v2608 = vrot.slane %v2602, 2
        %v2609 = vrot.slane %v2603, 2
        %v2610 = vsel %vm1222, %v2608, %v2609
        %v2611 = vrot.slane %v2604, 2
        %v2612 = vsel %vm1222, %v2609, %v2611
        %2613 = vrot.lane.b32.xlu0 %v2610, 123
        %v2614 = vpop.permute.xlu0 %2613
        %2615 = vrot.lane.b32.xlu0 %v2612, 123
        %v2616 = vpop.permute.xlu0 %2615
        %v2619 = vadd.f32 %v2598, %v2614
        %v2620 = vadd.f32 %v2599, %v2616
        %s2621 = sld [smem:[#allocation6 + $0x34]]
        %v2622 = vstv %s2621
        %v2623 = vmul.f32 %v1161, %v2622
        %v2624 = vmul.f32 %v1162, %v2622
        %v2625 = vmul.f32 %v1163, %v2622
        %v2629 = vrot.slane %v2623, 3
        %v2630 = vrot.slane %v2624, 3
        %v2631 = vsel %vm1257, %v2629, %v2630
        %v2632 = vrot.slane %v2625, 3
        %v2633 = vsel %vm1257, %v2630, %v2632
        %2634 = vrot.lane.b32.xlu0 %v2631, 123
        %v2635 = vpop.permute.xlu0 %2634
        %2636 = vrot.lane.b32.xlu0 %v2633, 123
        %v2637 = vpop.permute.xlu0 %2636
        %v2640 = vadd.f32 %v2619, %v2635
        %v2641 = vadd.f32 %v2620, %v2637
        %s2642 = sld [smem:[#allocation6 + $0x35]]
        %v2643 = vstv %s2642
        %v2644 = vmul.f32 %v1164, %v2643
        %v2645 = vmul.f32 %v1165, %v2643
        %v2646 = vmul.f32 %v1166, %v2643
        %v2650 = vrot.slane %v2644, 3
        %v2651 = vrot.slane %v2645, 3
        %v2652 = vsel %vm1257, %v2650, %v2651
        %v2653 = vrot.slane %v2646, 3
        %v2654 = vsel %vm1257, %v2651, %v2653
        %2655 = vrot.lane.b32.xlu0 %v2652, 123
        %v2656 = vpop.permute.xlu0 %2655
        %2657 = vrot.lane.b32.xlu0 %v2654, 123
        %v2658 = vpop.permute.xlu0 %2657
        %v2661 = vadd.f32 %v2640, %v2656
        %v2662 = vadd.f32 %v2641, %v2658
        %s2663 = sld [smem:[#allocation6 + $0x42]]
        %v2664 = vstv %s2663
        %v2665 = vmul.f32 %v1161, %v2664
        %v2666 = vmul.f32 %v1162, %v2664
        %v2667 = vmul.f32 %v1163, %v2664
        %v2671 = vrot.slane %v2665, 4
        %v2672 = vrot.slane %v2666, 4
        %v2673 = vsel %vm1292, %v2671, %v2672
        %v2674 = vrot.slane %v2667, 4
        %v2675 = vsel %vm1292, %v2672, %v2674
        %2676 = vrot.lane.b32.xlu0 %v2673, 123
        %v2677 = vpop.permute.xlu0 %2676
        %2678 = vrot.lane.b32.xlu0 %v2675, 123
        %v2679 = vpop.permute.xlu0 %2678
        %v2682 = vadd.f32 %v2661, %v2677
        %v2683 = vadd.f32 %v2662, %v2679
        %s2684 = sld [smem:[#allocation6 + $0x43]]
        %v2685 = vstv %s2684
        %v2686 = vmul.f32 %v1164, %v2685
        %v2687 = vmul.f32 %v1165, %v2685
        %v2688 = vmul.f32 %v1166, %v2685
        %v2692 = vrot.slane %v2686, 4
        %v2693 = vrot.slane %v2687, 4
        %v2694 = vsel %vm1292, %v2692, %v2693
        %v2695 = vrot.slane %v2688, 4
        %v2696 = vsel %vm1292, %v2693, %v2695
        %2697 = vrot.lane.b32.xlu0 %v2694, 123
        %v2698 = vpop.permute.xlu0 %2697
        %2699 = vrot.lane.b32.xlu0 %v2696, 123
        %v2700 = vpop.permute.xlu0 %2699
        %v2703 = vadd.f32 %v2682, %v2698
        %v2704 = vadd.f32 %v2683, %v2700
        %s2705 = sld [smem:[#allocation6 + $0x50]]
        %v2706 = vstv %s2705
        %v2707 = vmul.f32 %v1161, %v2706
        %v2708 = vmul.f32 %v1162, %v2706
        %v2709 = vmul.f32 %v1163, %v2706
        %v2713 = vrot.slane %v2707, 5
        %v2714 = vrot.slane %v2708, 5
        %v2715 = vsel %vm1327, %v2713, %v2714
        %v2716 = vrot.slane %v2709, 5
        %v2717 = vsel %vm1327, %v2714, %v2716
        %2718 = vrot.lane.b32.xlu0 %v2715, 123
        %v2719 = vpop.permute.xlu0 %2718
        %2720 = vrot.lane.b32.xlu0 %v2717, 123
        %v2721 = vpop.permute.xlu0 %2720
        %v2724 = vadd.f32 %v2703, %v2719
        %v2725 = vadd.f32 %v2704, %v2721
        %s2726 = sld [smem:[#allocation6 + $0x51]]
        %v2727 = vstv %s2726
        %v2728 = vmul.f32 %v1164, %v2727
        %v2729 = vmul.f32 %v1165, %v2727
        %v2730 = vmul.f32 %v1166, %v2727
        %v2734 = vrot.slane %v2728, 5
        %v2735 = vrot.slane %v2729, 5
        %v2736 = vsel %vm1327, %v2734, %v2735
        %v2737 = vrot.slane %v2730, 5
        %v2738 = vsel %vm1327, %v2735, %v2737
        %2739 = vrot.lane.b32.xlu0 %v2736, 123
        %v2740 = vpop.permute.xlu0 %2739
        %2741 = vrot.lane.b32.xlu0 %v2738, 123
        %v2742 = vpop.permute.xlu0 %2741
        %v2745 = vadd.f32 %v2724, %v2740
        %v2746 = vadd.f32 %v2725, %v2742
        %s2747 = sld [smem:[#allocation6 + $0x5e]]
        %v2748 = vstv %s2747
        %v2749 = vmul.f32 %v1161, %v2748
        %v2750 = vmul.f32 %v1162, %v2748
        %v2751 = vmul.f32 %v1163, %v2748
        %v2755 = vrot.slane %v2749, 6
        %v2756 = vrot.slane %v2750, 6
        %v2757 = vsel %vm1362, %v2755, %v2756
        %v2758 = vrot.slane %v2751, 6
        %v2759 = vsel %vm1362, %v2756, %v2758
        %2760 = vrot.lane.b32.xlu0 %v2757, 123
        %v2761 = vpop.permute.xlu0 %2760
        %2762 = vrot.lane.b32.xlu0 %v2759, 123
        %v2763 = vpop.permute.xlu0 %2762
        %v2766 = vadd.f32 %v2745, %v2761
        %v2767 = vadd.f32 %v2746, %v2763
        %s2768 = sld [smem:[#allocation6 + $0x5f]]
        %v2769 = vstv %s2768
        %v2770 = vmul.f32 %v1164, %v2769
        %v2771 = vmul.f32 %v1165, %v2769
        %v2772 = vmul.f32 %v1166, %v2769
        %v2776 = vrot.slane %v2770, 6
        %v2777 = vrot.slane %v2771, 6
        %v2778 = vsel %vm1362, %v2776, %v2777
        %v2779 = vrot.slane %v2772, 6
        %v2780 = vsel %vm1362, %v2777, %v2779
        %2781 = vrot.lane.b32.xlu0 %v2778, 123
        %v2782 = vpop.permute.xlu0 %2781
        %2783 = vrot.lane.b32.xlu0 %v2780, 123
        %v2784 = vpop.permute.xlu0 %2783
        %v2787 = vadd.f32 %v2766, %v2782
        %v2788 = vadd.f32 %v2767, %v2784
        %s2789 = sld [smem:[#allocation6 + $0xc]]
        %v2790 = vstv %s2789
        %v2791 = vmul.f32 %v1161, %v2790
        %v2792 = vmul.f32 %v1162, %v2790
        %2795 = vrot.lane.b32.xlu0 %v2791, 122
        %v2796 = vpop.permute.xlu0 %2795
        %2797 = vrot.lane.b32.xlu0 %v2792, 122
        %v2798 = vpop.permute.xlu0 %2797
        %v2801 = vadd.f32 %v2787, %v2796
        %v2802 = vadd.f32 %v2788, %v2798
        %s2803 = sld [smem:[#allocation6 + $0xd]]
        %v2804 = vstv %s2803
        %v2805 = vmul.f32 %v1164, %v2804
        %v2806 = vmul.f32 %v1165, %v2804
        %2809 = vrot.lane.b32.xlu0 %v2805, 122
        %v2810 = vpop.permute.xlu0 %2809
        %2811 = vrot.lane.b32.xlu0 %v2806, 122
        %v2812 = vpop.permute.xlu0 %2811
        %v2815 = vadd.f32 %v2801, %v2810
        %v2816 = vadd.f32 %v2802, %v2812
        %s2817 = sld [smem:[#allocation6 + $0x1a]]
        %v2818 = vstv %s2817
        %v2819 = vmul.f32 %v1161, %v2818
        %v2820 = vmul.f32 %v1162, %v2818
        %v2821 = vmul.f32 %v1163, %v2818
        %v2825 = vrot.slane %v2819, 1
        %v2826 = vrot.slane %v2820, 1
        %v2827 = vsel %vm1187, %v2825, %v2826
        %v2828 = vrot.slane %v2821, 1
        %v2829 = vsel %vm1187, %v2826, %v2828
        %2830 = vrot.lane.b32.xlu0 %v2827, 122
        %v2831 = vpop.permute.xlu0 %2830
        %2832 = vrot.lane.b32.xlu0 %v2829, 122
        %v2833 = vpop.permute.xlu0 %2832
        %v2836 = vadd.f32 %v2815, %v2831
        %v2837 = vadd.f32 %v2816, %v2833
        %s2838 = sld [smem:[#allocation6 + $0x1b]]
        %v2839 = vstv %s2838
        %v2840 = vmul.f32 %v1164, %v2839
        %v2841 = vmul.f32 %v1165, %v2839
        %v2842 = vmul.f32 %v1166, %v2839
        %v2846 = vrot.slane %v2840, 1
        %v2847 = vrot.slane %v2841, 1
        %v2848 = vsel %vm1187, %v2846, %v2847
        %v2849 = vrot.slane %v2842, 1
        %v2850 = vsel %vm1187, %v2847, %v2849
        %2851 = vrot.lane.b32.xlu0 %v2848, 122
        %v2852 = vpop.permute.xlu0 %2851
        %2853 = vrot.lane.b32.xlu0 %v2850, 122
        %v2854 = vpop.permute.xlu0 %2853
        %v2857 = vadd.f32 %v2836, %v2852
        %v2858 = vadd.f32 %v2837, %v2854
        %s2859 = sld [smem:[#allocation6 + $0x28]]
        %v2860 = vstv %s2859
        %v2861 = vmul.f32 %v1161, %v2860
        %v2862 = vmul.f32 %v1162, %v2860
        %v2863 = vmul.f32 %v1163, %v2860
        %v2867 = vrot.slane %v2861, 2
        %v2868 = vrot.slane %v2862, 2
        %v2869 = vsel %vm1222, %v2867, %v2868
        %v2870 = vrot.slane %v2863, 2
        %v2871 = vsel %vm1222, %v2868, %v2870
        %2872 = vrot.lane.b32.xlu0 %v2869, 122
        %v2873 = vpop.permute.xlu0 %2872
        %2874 = vrot.lane.b32.xlu0 %v2871, 122
        %v2875 = vpop.permute.xlu0 %2874
        %v2878 = vadd.f32 %v2857, %v2873
        %v2879 = vadd.f32 %v2858, %v2875
        %s2880 = sld [smem:[#allocation6 + $0x29]]
        %v2881 = vstv %s2880
        %v2882 = vmul.f32 %v1164, %v2881
        %v2883 = vmul.f32 %v1165, %v2881
        %v2884 = vmul.f32 %v1166, %v2881
        %v2888 = vrot.slane %v2882, 2
        %v2889 = vrot.slane %v2883, 2
        %v2890 = vsel %vm1222, %v2888, %v2889
        %v2891 = vrot.slane %v2884, 2
        %v2892 = vsel %vm1222, %v2889, %v2891
        %2893 = vrot.lane.b32.xlu0 %v2890, 122
        %v2894 = vpop.permute.xlu0 %2893
        %2895 = vrot.lane.b32.xlu0 %v2892, 122
        %v2896 = vpop.permute.xlu0 %2895
        %v2899 = vadd.f32 %v2878, %v2894
        %v2900 = vadd.f32 %v2879, %v2896
        %s2901 = sld [smem:[#allocation6 + $0x36]]
        %v2902 = vstv %s2901
        %v2903 = vmul.f32 %v1161, %v2902
        %v2904 = vmul.f32 %v1162, %v2902
        %v2905 = vmul.f32 %v1163, %v2902
        %v2909 = vrot.slane %v2903, 3
        %v2910 = vrot.slane %v2904, 3
        %v2911 = vsel %vm1257, %v2909, %v2910
        %v2912 = vrot.slane %v2905, 3
        %v2913 = vsel %vm1257, %v2910, %v2912
        %2914 = vrot.lane.b32.xlu0 %v2911, 122
        %v2915 = vpop.permute.xlu0 %2914
        %2916 = vrot.lane.b32.xlu0 %v2913, 122
        %v2917 = vpop.permute.xlu0 %2916
        %v2920 = vadd.f32 %v2899, %v2915
        %v2921 = vadd.f32 %v2900, %v2917
        %s2922 = sld [smem:[#allocation6 + $0x37]]
        %v2923 = vstv %s2922
        %v2924 = vmul.f32 %v1164, %v2923
        %v2925 = vmul.f32 %v1165, %v2923
        %v2926 = vmul.f32 %v1166, %v2923
        %v2930 = vrot.slane %v2924, 3
        %v2931 = vrot.slane %v2925, 3
        %v2932 = vsel %vm1257, %v2930, %v2931
        %v2933 = vrot.slane %v2926, 3
        %v2934 = vsel %vm1257, %v2931, %v2933
        %2935 = vrot.lane.b32.xlu0 %v2932, 122
        %v2936 = vpop.permute.xlu0 %2935
        %2937 = vrot.lane.b32.xlu0 %v2934, 122
        %v2938 = vpop.permute.xlu0 %2937
        %v2941 = vadd.f32 %v2920, %v2936
        %v2942 = vadd.f32 %v2921, %v2938
        %s2943 = sld [smem:[#allocation6 + $0x44]]
        %v2944 = vstv %s2943
        %v2945 = vmul.f32 %v1161, %v2944
        %v2946 = vmul.f32 %v1162, %v2944
        %v2947 = vmul.f32 %v1163, %v2944
        %v2951 = vrot.slane %v2945, 4
        %v2952 = vrot.slane %v2946, 4
        %v2953 = vsel %vm1292, %v2951, %v2952
        %v2954 = vrot.slane %v2947, 4
        %v2955 = vsel %vm1292, %v2952, %v2954
        %2956 = vrot.lane.b32.xlu0 %v2953, 122
        %v2957 = vpop.permute.xlu0 %2956
        %2958 = vrot.lane.b32.xlu0 %v2955, 122
        %v2959 = vpop.permute.xlu0 %2958
        %v2962 = vadd.f32 %v2941, %v2957
        %v2963 = vadd.f32 %v2942, %v2959
        %s2964 = sld [smem:[#allocation6 + $0x45]]
        %v2965 = vstv %s2964
        %v2966 = vmul.f32 %v1164, %v2965
        %v2967 = vmul.f32 %v1165, %v2965
        %v2968 = vmul.f32 %v1166, %v2965
        %v2972 = vrot.slane %v2966, 4
        %v2973 = vrot.slane %v2967, 4
        %v2974 = vsel %vm1292, %v2972, %v2973
        %v2975 = vrot.slane %v2968, 4
        %v2976 = vsel %vm1292, %v2973, %v2975
        %2977 = vrot.lane.b32.xlu0 %v2974, 122
        %v2978 = vpop.permute.xlu0 %2977
        %2979 = vrot.lane.b32.xlu0 %v2976, 122
        %v2980 = vpop.permute.xlu0 %2979
        %v2983 = vadd.f32 %v2962, %v2978
        %v2984 = vadd.f32 %v2963, %v2980
        %s2985 = sld [smem:[#allocation6 + $0x52]]
        %v2986 = vstv %s2985
        %v2987 = vmul.f32 %v1161, %v2986
        %v2988 = vmul.f32 %v1162, %v2986
        %v2989 = vmul.f32 %v1163, %v2986
        %v2993 = vrot.slane %v2987, 5
        %v2994 = vrot.slane %v2988, 5
        %v2995 = vsel %vm1327, %v2993, %v2994
        %v2996 = vrot.slane %v2989, 5
        %v2997 = vsel %vm1327, %v2994, %v2996
        %2998 = vrot.lane.b32.xlu0 %v2995, 122
        %v2999 = vpop.permute.xlu0 %2998
        %3000 = vrot.lane.b32.xlu0 %v2997, 122
        %v3001 = vpop.permute.xlu0 %3000
        %v3004 = vadd.f32 %v2983, %v2999
        %v3005 = vadd.f32 %v2984, %v3001
        %s3006 = sld [smem:[#allocation6 + $0x53]]
        %v3007 = vstv %s3006
        %v3008 = vmul.f32 %v1164, %v3007
        %v3009 = vmul.f32 %v1165, %v3007
        %v3010 = vmul.f32 %v1166, %v3007
        %v3014 = vrot.slane %v3008, 5
        %v3015 = vrot.slane %v3009, 5
        %v3016 = vsel %vm1327, %v3014, %v3015
        %v3017 = vrot.slane %v3010, 5
        %v3018 = vsel %vm1327, %v3015, %v3017
        %3019 = vrot.lane.b32.xlu0 %v3016, 122
        %v3020 = vpop.permute.xlu0 %3019
        %3021 = vrot.lane.b32.xlu0 %v3018, 122
        %v3022 = vpop.permute.xlu0 %3021
        %v3025 = vadd.f32 %v3004, %v3020
        %v3026 = vadd.f32 %v3005, %v3022
        %s3027 = sld [smem:[#allocation6 + $0x60]]
        %v3028 = vstv %s3027
        %v3029 = vmul.f32 %v1161, %v3028
        %v3030 = vmul.f32 %v1162, %v3028
        %v3031 = vmul.f32 %v1163, %v3028
        %v3035 = vrot.slane %v3029, 6
        %v3036 = vrot.slane %v3030, 6
        %v3037 = vsel %vm1362, %v3035, %v3036
        %v3038 = vrot.slane %v3031, 6
        %v3039 = vsel %vm1362, %v3036, %v3038
        %3040 = vrot.lane.b32.xlu0 %v3037, 122
        %v3041 = vpop.permute.xlu0 %3040
        %3042 = vrot.lane.b32.xlu0 %v3039, 122
        %v3043 = vpop.permute.xlu0 %3042
        %v3046 = vadd.f32 %v3025, %v3041
        %v3047 = vadd.f32 %v3026, %v3043
        %s3048 = sld [smem:[#allocation6 + $0x61]]
        %v3049 = vstv %s3048
        %v3050 = vmul.f32 %v1164, %v3049
        %v3051 = vmul.f32 %v1165, %v3049
        %v3052 = vmul.f32 %v1166, %v3049
        %v3056 = vrot.slane %v3050, 6
        %v3057 = vrot.slane %v3051, 6
        %v3058 = vsel %vm1362, %v3056, %v3057
        %v3059 = vrot.slane %v3052, 6
        %v3060 = vsel %vm1362, %v3057, %v3059
        %3061 = vrot.lane.b32.xlu0 %v3058, 122
        %v3062 = vpop.permute.xlu0 %3061
        %3063 = vrot.lane.b32.xlu0 %v3060, 122
        %v3064 = vpop.permute.xlu0 %3063
        %v3067 = vadd.f32 %v3046, %v3062
        %v3068 = vadd.f32 %v3047, %v3064
        %v3069 = vxor.u32 %v3067, 2147483648
        %v3070 = vxor.u32 %v3068, 2147483648
        %v3071 = vmul.f32 %v3069, 1.442695
        %v3072 = vpow.pop %v3071
        %v3073 = vmul.f32 %v3070, 1.442695
        %v3074 = vpow.pop %v3073
        %v3075 = vadd.f32 %v3072, 1.0
        %v3076 = vadd.f32 %v3074, 1.0
        %v3077 = vrcp.pop %v3075
        %v3078 = vmul.f32 1.0, %v3077
        %v3079 = vrcp.pop %v3076
        %v3080 = vmul.f32 1.0, %v3079
        %3081 = vst.msk [vmem:[%s267] sm:$0xff] %vm493, %v3078
        %3082 = vst.msk [vmem:[%s267 + $0x8] sm:$0xff] %vm493, %v3080
        %p3083 = scmp.lt.s32.totalorder %s21, 1
        %s3084 = scalar_select %p3083, %s21, 1
        %s3085 = scalar_lea.vmem %s4, %s3084
        %p3086 = scmp.lt.s32.totalorder %s21, 1
        %s3087 = scalar_select %p3086, %s21, 1
        %s3088 = smul.addr %s3087, 2
        %s3089 = smul.addr %s3088, 8
        %s3090 = scalar_lea.vmem %s5, %s3089
        // Predicated region
        $region45: #{_lambda_.2} parent=35 // pred_check
          %p3091 = pneg %p128
        $region46: #{_lambda_.2} parent=35 // pred_check_branch
          %3093 = sbr.rel (%p3091) target = $region48
        $region47: #{_lambda_.2} parent=35 // pred_region
          _
        $region48: #{_lambda_.2} parent=35 // pred_fallthru
          _
        // Predicated region
        $region49: #{_lambda_.2} parent=35 // pred_check
          %p3094 = pneg %p154
        $region50: #{_lambda_.2} parent=35 // pred_check_branch
          %3096 = sbr.rel (%p3094) target = $region52
        $region51: #{_lambda_.2} parent=35 // pred_region
          _
        $region52: #{_lambda_.2} parent=35 // pred_fallthru
          _
      $region36: #{_lambda_.2} parent=5 // pred_fallthru
        _
      %p3097 = scmp.le.s32.totalorder 2, %s16
      // Predicated region
      $region53: #{_lambda_.2} parent=5 // pred_check
        %p3098 = pneg %p3097
      $region54: #{_lambda_.2} parent=5 // pred_check_branch
        %3100 = sbr.rel (%p3098) target = $region56
      $region55: #{_lambda_.2} parent=5 // pred_region
        %s3101 = ssub.s32 %s16, 2
        // Predicated region
        $region57: #{_lambda_.2} parent=55 // pred_check
          %p3102 = pneg %p134
        $region58: #{_lambda_.2} parent=55 // pred_check_branch
          %3104 = sbr.rel (%p3102) target = $region60
        $region59: #{_lambda_.2} parent=55 // pred_region
          %p3105 = scmp.lt.s32.totalorder %s22, 1
          %s3106 = scalar_select %p3105, %s22, 1
          %s3107 = scalar_lea.vmem %s4, %s3106
        $region60: #{_lambda_.2} parent=55 // pred_fallthru
          _
        // Predicated region
        $region61: #{_lambda_.2} parent=55 // pred_check
          %p3108 = pneg %p160
        $region62: #{_lambda_.2} parent=55 // pred_check_branch
          %3110 = sbr.rel (%p3108) target = $region64
        $region63: #{_lambda_.2} parent=55 // pred_region
          %p3111 = scmp.lt.s32.totalorder %s22, 1
          %s3112 = scalar_select %p3111, %s22, 1
          %s3113 = smul.addr %s3112, 2
          %s3114 = smul.addr %s3113, 8
          %s3115 = scalar_lea.vmem %s5, %s3114
        $region64: #{_lambda_.2} parent=55 // pred_fallthru
          _
      $region56: #{_lambda_.2} parent=5 // pred_fallthru
        _
    $region6: #{_lambda_.2} parent=1 // loop_footer
      %s20 = sadd.s32 1, %s16
    $region7: #{_lambda_.2} parent=1 // loop_footer_branch
      %15 = sbr.rel target = $region3
    $region8: #{_lambda_.2} parent=1 // loop_exit
      _
    %3116 = vsyncpa [#allocation4], 1
    %s3117 = scalar_lea.sflag [#allocation4], 1
    %3118 = vsyncpa %s3117, 1
    %3119 = vsyncpa [#allocation5], 1
    %s3120 = scalar_lea.sflag [#allocation5], 1
    %3121 = vsyncpa %s3120, 1

</llo_original>
